<compile_context>
chip_gen: v6e
topology: v6e:2x2x1
jax: 0.10.0
libtpu: 0.0.40
codegen_flags: <defaults>
</compile_context>

<pallas_src>
import functools

import jax
import jax.numpy as jnp
from jax.experimental import pallas as pl
from jax.experimental.pallas import tpu as pltpu

BN_EPS = 1e-5       # PyTorch BatchNorm1d default
LANE = 128          # TPU lane width
SUBLANE_BF16 = 16   # bf16 sublane tile


# ----------------------------------------------------------------------------
# Model dims
# ----------------------------------------------------------------------------
def vae_dims(input_dim, latent_dim):
    return [
        input_dim,
        int(input_dim * 1.3),
        int(input_dim * 1.2),
        int(input_dim * 1),
        int(input_dim * 0.5),
        int(input_dim * 0.3),
        latent_dim,
        latent_dim,
    ]


def _round_up(n, m):
    return ((n + m - 1) // m) * m


# ----------------------------------------------------------------------------
# Fused kernel: encoder -> mu/logvar -> reparameterize -> decoder
# Weights are streamed per layer from HBM with a 2-slot double buffer.
# ----------------------------------------------------------------------------
def _vae_fused_kernel(x_ref, eps_ref, w_hbm, g_ref, b_ref,
                      recon_ref, mu_ref, logvar_ref,
                      io_scr, wbuf, dma_sem,
                      *, batch, input_dim, latent_dim, n_enc, n_dec,
                      matmul_dtype):
    n_layers = n_enc + 2 + n_dec
    bp, pad = io_scr.shape            # padded batch, padded feature width
    inv_batch = 1.0 / batch           # BN stats over the REAL batch only
    needs_row_mask = bp != batch

    def fetch(layer, slot):
        return pltpu.make_async_copy(w_hbm.at[layer], wbuf.at[slot],
                                     dma_sem.at[slot])

    # Kick off the first weight DMA before anything else.
    fetch(0, 0).start()

    # Padded batch rows are kept exactly zero so BN sums (scaled by
    # 1/real_batch) are exact.
    if needs_row_mask:
        row_ids = jax.lax.broadcasted_iota(jnp.int32, (bp, pad), 0)
        row_mask = (row_ids < batch).astype(jnp.float32)

    def mask_rows(h):
        return h * row_mask if needs_row_mask else h

    # Zero-pad x into (bp, pad) inside the kernel (no wrapper-side pad op).
    io_scr[...] = jnp.zeros_like(io_scr)
    io_scr[0:batch, 0:input_dim] = x_ref[...]
    h = io_scr[...]

    def matmul(a, w):
        # bf16 (or f32) MXU matmul, f32 accumulation.
        return jnp.dot(a.astype(matmul_dtype), w,
                       preferred_element_type=jnp.float32)

    def lin_bn_relu(hh, w, gamma, beta, *, apply_sigmoid=False):
        # Linear (bias omitted: exactly cancelled by BN mean subtraction),
        # BatchNorm1d training mode (biased batch variance), affine, ReLU.
        y = matmul(hh, w)
        mean = jnp.sum(y, axis=0, keepdims=True) * inv_batch
        mean_sq = jnp.sum(y * y, axis=0, keepdims=True) * inv_batch
        var = jnp.maximum(mean_sq - mean * mean, 0.0)
        inv_std = jax.lax.rsqrt(var + BN_EPS)
        scale = gamma * inv_std                   # (1, pad)
        shift = beta - mean * scale               # (1, pad)
        y = jnp.maximum(y * scale + shift, 0.0)   # BN affine + ReLU
        if apply_sigmoid:                         # decoder's trailing Sigmoid
            y = jax.nn.sigmoid(y)
        return y

    mu = None
    for l in range(n_layers):
        slot = l & 1
        # Prefetch next layer's weights while this layer's DMA completes and
        # its compute runs (double-buffered).
        if l + 1 < n_layers:
            fetch(l + 1, 1 - slot).start()
        fetch(l, slot).wait()

        w = wbuf[slot]                 # (pad, pad) weight slab
        gamma = g_ref[l]               # (1, pad)
        beta = b_ref[l]                # (1, pad); holds the Linear bias for
                                       # the fc_mu / fc_logvar layers

        if l < n_enc:
            # Encoder Linear + BN + ReLU.
            h = mask_rows(lin_bn_relu(h, w, gamma, beta))
        elif l == n_enc:
            # fc_mu (keeps its bias; no BN afterwards).
            mu = matmul(h, w) + beta
            mu_ref[...] = mu
        elif l == n_enc + 1:
            # fc_logvar + reparameterization: z = mu + eps * exp(0.5*logvar).
            logvar = matmul(h, w) + beta
            logvar_ref[...] = logvar
            io_scr[...] = jnp.zeros_like(io_scr)
            io_scr[0:batch, 0:latent_dim] = eps_ref[...]
            eps = io_scr[...]
            h = mask_rows(mu + eps * jnp.exp(0.5 * logvar))
        else:
            # Decoder Linear + BN + ReLU (+ Sigmoid on the last layer).
            is_last = l == n_layers - 1
            h = lin_bn_relu(h, w, gamma, beta, apply_sigmoid=is_last)
            if not is_last:
                h = mask_rows(h)

    recon_ref[...] = h


# ----------------------------------------------------------------------------
# Parameter construction: one lane-padded weight stack (streamed from HBM)
# plus small gamma/beta stacks (fc_mu / fc_logvar biases live in the beta slot)
# ----------------------------------------------------------------------------
def init_params(key, input_dim, latent_dim, matmul_dtype=jnp.bfloat16):
    dims = vae_dims(input_dim, latent_dim)
    pad = _round_up(max(dims), LANE)
    n_enc = len(dims) - 1
    n_dec = len(dims) - 1
    n_layers = n_enc + 2 + n_dec

    def uniform(k, shape, fan_in):
        bound = 1.0 / float(fan_in) ** 0.5
        return jax.random.uniform(k, shape, jnp.float32, -bound, bound)

    keys = jax.random.split(key, n_enc + n_dec + 4)
    ki = 0

    w_all = jnp.zeros((n_layers, pad, pad), jnp.float32)
    g_all = jnp.zeros((n_layers, 1, pad), jnp.float32)
    b_all = jnp.zeros((n_layers, 1, pad), jnp.float32)

    # Encoder: gamma=1/beta=0 on real lanes, gamma=beta=0 on padded lanes so
    # padded lanes stay exactly zero through BN/ReLU.
    for l in range(n_enc):
        fi, fo = dims[l], dims[l + 1]
        w_all = w_all.at[l, :fi, :fo].set(uniform(keys[ki], (fi, fo), fi)); ki += 1
        g_all = g_all.at[l, 0, :fo].set(1.0)

    # fc_mu / fc_logvar: Linear biases stored in the beta slot.
    fi = dims[-1]
    l_mu, l_lv = n_enc, n_enc + 1
    w_all = w_all.at[l_mu, :fi, :latent_dim].set(
        uniform(keys[ki], (fi, latent_dim), fi)); ki += 1
    b_all = b_all.at[l_mu, 0, :latent_dim].set(
        uniform(keys[ki], (latent_dim,), fi)); ki += 1
    w_all = w_all.at[l_lv, :fi, :latent_dim].set(
        uniform(keys[ki], (fi, latent_dim), fi)); ki += 1
    b_all = b_all.at[l_lv, 0, :latent_dim].set(
        uniform(keys[ki], (latent_dim,), fi)); ki += 1

    # Decoder (reverse order of dims, matching the PyTorch module).
    for d, i in enumerate(range(len(dims) - 2, -1, -1)):
        l = n_enc + 2 + d
        fi, fo = dims[i + 1], dims[i]
        w_all = w_all.at[l, :fi, :fo].set(uniform(keys[ki], (fi, fo), fi)); ki += 1
        g_all = g_all.at[l, 0, :fo].set(1.0)

    return {"w_all": w_all.astype(matmul_dtype), "g_all": g_all, "b_all": b_all}


# ----------------------------------------------------------------------------
# Forward wrapper: one pallas_call for the whole network
# ----------------------------------------------------------------------------
def make_vae_forward(input_dim, latent_dim, batch, matmul_dtype=jnp.bfloat16):
    dims = vae_dims(input_dim, latent_dim)
    pad = _round_up(max(dims), LANE)
    n_enc = len(dims) - 1
    n_dec = len(dims) - 1
    n_layers = n_enc + 2 + n_dec
    bp = _round_up(batch, SUBLANE_BF16)          # padded batch (sublane tile)

    kernel = functools.partial(
        _vae_fused_kernel,
        batch=batch, input_dim=input_dim, latent_dim=latent_dim,
        n_enc=n_enc, n_dec=n_dec, matmul_dtype=matmul_dtype)

    vmem = pl.BlockSpec(memory_space=pltpu.MemorySpace.VMEM)
    hbm = pl.BlockSpec(memory_space=pl.ANY)      # weights stay in HBM, streamed

    w_itemsize = jnp.dtype(matmul_dtype).itemsize
    flops = 2 * bp * pad * pad * n_layers
    transcendentals = (n_enc + n_dec) * pad + 3 * bp * pad
    bytes_accessed = (n_layers * pad * pad * w_itemsize
                      + 2 * n_layers * pad * 4
                      + (batch * input_dim + batch * latent_dim) * 4
                      + 3 * bp * pad * 4)

    # With streaming, VMEM only holds the 2-slab weight buffer plus small
    # activations/outputs; leave headroom but stay under scoped/physical caps.
    vmem_need = (2 * pad * pad * w_itemsize       # weight double buffer
                 + 2 * n_layers * pad * 4         # gamma / beta stacks
                 + 12 * bp * pad * 4)             # activations/scratch/outputs
    vmem_limit = int(min(max(2 * vmem_need, 16 * 1024 * 1024),
                         100 * 1024 * 1024))

    call = pl.pallas_call(
        kernel,
        out_shape=(jax.ShapeDtypeStruct((bp, pad), jnp.float32),   # recon
                   jax.ShapeDtypeStruct((bp, pad), jnp.float32),   # mu
                   jax.ShapeDtypeStruct((bp, pad), jnp.float32)),  # logvar
        in_specs=[vmem,    # x  (unpadded, padded in-kernel)
                  vmem,    # eps (unpadded, padded in-kernel)
                  hbm,     # stacked weights, streamed per layer
                  vmem,    # gamma stack
                  vmem],   # beta stack (+ fc_mu/fc_logvar biases)
        out_specs=(vmem, vmem, vmem),
        scratch_shapes=[
            pltpu.VMEM((bp, pad), jnp.float32),         # pad/IO scratch
            pltpu.VMEM((2, pad, pad), matmul_dtype),    # weight double buffer
            pltpu.SemaphoreType.DMA((2,)),              # per-slot DMA sems
        ],
        compiler_params=pltpu.CompilerParams(vmem_limit_bytes=vmem_limit),
        cost_estimate=pl.CostEstimate(flops=int(flops),
                                      transcendentals=int(transcendentals),
                                      bytes_accessed=int(bytes_accessed)),
    )

    @jax.jit
    def forward(params, x, eps):
        recon_p, mu_p, logvar_p = call(
            x, eps, params["w_all"], params["g_all"], params["b_all"])
        return (recon_p[:batch, :input_dim],
                mu_p[:batch, :latent_dim],
                logvar_p[:batch, :latent_dim])

    return forward


# ----------------------------------------------------------------------------
if __name__ == "__main__":
    # Small shapes consistent with the module (hidden dims derived from input).
    input_dim = 64
    latent_dim = 32
    batch = 8

    key = jax.random.PRNGKey(0)
    k_params, k_x, k_eps = jax.random.split(key, 3)

    params = init_params(k_params, input_dim, latent_dim)
    x = jax.random.uniform(k_x, (batch, input_dim), jnp.float32)
    eps = jax.random.normal(k_eps, (batch, latent_dim), jnp.float32)

    forward = make_vae_forward(input_dim, latent_dim, batch)
    recon, mu, logvar = forward(params, x, eps)
    jax.block_until_ready((recon, mu, logvar))

    assert recon.shape == (batch, input_dim)
    assert mu.shape == (batch, latent_dim)
    assert logvar.shape == (batch, latent_dim)
    assert bool(jnp.all(jnp.isfinite(recon)))
    assert bool(jnp.all(jnp.isfinite(mu)))
    assert bool(jnp.all(jnp.isfinite(logvar)))
    # Final Sigmoid (after ReLU, as in the module) => recon in [0.5, 1).
    assert bool(jnp.all((recon >= 0.0) & (recon <= 1.0)))
    print("KERNEL_OK")
</pallas_src>

<mosaic_0001>
module attributes {stable_mosaic.version = 11 : i64} {
  func.func @_vae_fused_kernel(%arg0: memref<8x64xf32, #tpu.memory_space<vmem>>, %arg1: memref<8x32xf32, #tpu.memory_space<vmem>>, %arg2: memref<16x128x128xbf16, #tpu.memory_space<any>>, %arg3: memref<16x1x128xf32, #tpu.memory_space<vmem>>, %arg4: memref<16x1x128xf32, #tpu.memory_space<vmem>>, %arg5: memref<16x128xf32, #tpu.memory_space<vmem>>, %arg6: memref<16x128xf32, #tpu.memory_space<vmem>>, %arg7: memref<16x128xf32, #tpu.memory_space<vmem>>, %arg8: memref<16x128xf32, #tpu.memory_space<vmem>>, %arg9: memref<2x128x128xbf16, #tpu.memory_space<vmem>>, %arg10: memref<2x!tpu.dma_semaphore, #tpu.memory_space<semaphore_mem>>) attributes {dimension_semantics = [], scalar_prefetch = 0 : i64, scratch_operands = 3 : i64, tpu.core_type = #tpu.core_type<tc>} {
    %c0_i32 = arith.constant 0 : i32
    %c0_i32_0 = arith.constant 0 : i32
    %c0_i32_1 = arith.constant 0 : i32
    %c0_i32_2 = arith.constant 0 : i32
    %c0_i32_3 = arith.constant 0 : i32
    %0 = tpu.memref_slice %arg2[%c0_i32, %c0_i32_2, %c0_i32_3] : memref<16x128x128xbf16, #tpu.memory_space<any>> -> memref<1x128x128xbf16, #tpu.memory_space<any>>
    %1 = tpu.memref_squeeze %0 : memref<1x128x128xbf16, #tpu.memory_space<any>> -> memref<128x128xbf16, #tpu.memory_space<any>>
    %c0_i32_4 = arith.constant 0 : i32
    %c0_i32_5 = arith.constant 0 : i32
    %2 = tpu.memref_slice %arg9[%c0_i32_0, %c0_i32_4, %c0_i32_5] : memref<2x128x128xbf16, #tpu.memory_space<vmem>> -> memref<1x128x128xbf16, #tpu.memory_space<vmem>>
    %3 = tpu.memref_squeeze %2 : memref<1x128x128xbf16, #tpu.memory_space<vmem>> -> memref<128x128xbf16, #tpu.memory_space<vmem>>
    %4 = tpu.memref_slice %arg10[%c0_i32_1] : memref<2x!tpu.dma_semaphore, #tpu.memory_space<semaphore_mem>> -> memref<1x!tpu.dma_semaphore, #tpu.memory_space<semaphore_mem>>
    %5 = tpu.memref_squeeze %4 : memref<1x!tpu.dma_semaphore, #tpu.memory_space<semaphore_mem>> -> memref<!tpu.dma_semaphore, #tpu.memory_space<semaphore_mem>>
    tpu.enqueue_dma source(%1 : memref<128x128xbf16, #tpu.memory_space<any>>) target(%3 : memref<128x128xbf16, #tpu.memory_space<vmem>>) target_semaphore(%5 : memref<!tpu.dma_semaphore, #tpu.memory_space<semaphore_mem>>)
    %6 = tpu.iota {dimensions = array<i32: 0>} : vector<16x128xi32>
    %c8_i32 = arith.constant 8 : i32
    %7 = vector.broadcast %c8_i32 : i32 to vector<16x128xi32>
    %8 = arith.cmpi slt, %6, %7 : vector<16x128xi32>
    %9 = arith.extui %8 : vector<16x128xi1> to vector<16x128xi32>
    %10 = arith.sitofp %9 : vector<16x128xi32> to vector<16x128xf32>
    %cst = arith.constant 0.000000e+00 : f32
    %11 = vector.broadcast %cst : f32 to vector<16x128xf32>
    %c0 = arith.constant 0 : index
    %c0_6 = arith.constant 0 : index
    %12 = vector.load %arg8[%c0, %c0_6] : memref<16x128xf32, #tpu.memory_space<vmem>>, vector<16x128xf32>
    tpu.vector_store %arg8[%c0, %c0_6], %11 {strides = array<i32>} : memref<16x128xf32, #tpu.memory_space<vmem>>, vector<16x128xf32>,
    %c0_7 = arith.constant 0 : index
    %c0_8 = arith.constant 0 : index
    %13 = vector.load %arg0[%c0_7, %c0_8] : memref<8x64xf32, #tpu.memory_space<vmem>>, vector<8x64xf32>
    %c0_9 = arith.constant 0 : index
    %c0_10 = arith.constant 0 : index
    %14 = vector.load %arg8[%c0_9, %c0_10] : memref<16x128xf32, #tpu.memory_space<vmem>>, vector<8x64xf32>
    tpu.vector_store %arg8[%c0_9, %c0_10], %13 {strides = array<i32>} : memref<16x128xf32, #tpu.memory_space<vmem>>, vector<8x64xf32>,
    %c0_11 = arith.constant 0 : index
    %c0_12 = arith.constant 0 : index
    %15 = vector.load %arg8[%c0_11, %c0_12] : memref<16x128xf32, #tpu.memory_space<vmem>>, vector<16x128xf32>
    %c1_i32 = arith.constant 1 : i32
    %c1_i32_13 = arith.constant 1 : i32
    %c1_i32_14 = arith.constant 1 : i32
    %c0_i32_15 = arith.constant 0 : i32
    %c0_i32_16 = arith.constant 0 : i32
    %16 = tpu.memref_slice %arg2[%c1_i32, %c0_i32_15, %c0_i32_16] : memref<16x128x128xbf16, #tpu.memory_space<any>> -> memref<1x128x128xbf16, #tpu.memory_space<any>>
    %17 = tpu.memref_squeeze %16 : memref<1x128x128xbf16, #tpu.memory_space<any>> -> memref<128x128xbf16, #tpu.memory_space<any>>
    %c0_i32_17 = arith.constant 0 : i32
    %c0_i32_18 = arith.constant 0 : i32
    %18 = tpu.memref_slice %arg9[%c1_i32_13, %c0_i32_17, %c0_i32_18] : memref<2x128x128xbf16, #tpu.memory_space<vmem>> -> memref<1x128x128xbf16, #tpu.memory_space<vmem>>
    %19 = tpu.memref_squeeze %18 : memref<1x128x128xbf16, #tpu.memory_space<vmem>> -> memref<128x128xbf16, #tpu.memory_space<vmem>>
    %20 = tpu.memref_slice %arg10[%c1_i32_14] : memref<2x!tpu.dma_semaphore, #tpu.memory_space<semaphore_mem>> -> memref<1x!tpu.dma_semaphore, #tpu.memory_space<semaphore_mem>>
    %21 = tpu.memref_squeeze %20 : memref<1x!tpu.dma_semaphore, #tpu.memory_space<semaphore_mem>> -> memref<!tpu.dma_semaphore, #tpu.memory_space<semaphore_mem>>
    tpu.enqueue_dma source(%17 : memref<128x128xbf16, #tpu.memory_space<any>>) target(%19 : memref<128x128xbf16, #tpu.memory_space<vmem>>) target_semaphore(%21 : memref<!tpu.dma_semaphore, #tpu.memory_space<semaphore_mem>>)
    %c0_i32_19 = arith.constant 0 : i32
    %c0_i32_20 = arith.constant 0 : i32
    %c0_i32_21 = arith.constant 0 : i32
    %c0_i32_22 = arith.constant 0 : i32
    %c0_i32_23 = arith.constant 0 : i32
    %22 = tpu.memref_slice %arg2[%c0_i32_19, %c0_i32_22, %c0_i32_23] : memref<16x128x128xbf16, #tpu.memory_space<any>> -> memref<1x128x128xbf16, #tpu.memory_space<any>>
    %23 = tpu.memref_squeeze %22 : memref<1x128x128xbf16, #tpu.memory_space<any>> -> memref<128x128xbf16, #tpu.memory_space<any>>
    %c0_i32_24 = arith.constant 0 : i32
    %c0_i32_25 = arith.constant 0 : i32
    %24 = tpu.memref_slice %arg9[%c0_i32_20, %c0_i32_24, %c0_i32_25] : memref<2x128x128xbf16, #tpu.memory_space<vmem>> -> memref<1x128x128xbf16, #tpu.memory_space<vmem>>
    %25 = tpu.memref_squeeze %24 : memref<1x128x128xbf16, #tpu.memory_space<vmem>> -> memref<128x128xbf16, #tpu.memory_space<vmem>>
    %26 = tpu.memref_slice %arg10[%c0_i32_21] : memref<2x!tpu.dma_semaphore, #tpu.memory_space<semaphore_mem>> -> memref<1x!tpu.dma_semaphore, #tpu.memory_space<semaphore_mem>>
    %27 = tpu.memref_squeeze %26 : memref<1x!tpu.dma_semaphore, #tpu.memory_space<semaphore_mem>> -> memref<!tpu.dma_semaphore, #tpu.memory_space<semaphore_mem>>
    tpu.wait_dma2 semaphore(%27 : memref<!tpu.dma_semaphore, #tpu.memory_space<semaphore_mem>>) src(%23 : memref<128x128xbf16, #tpu.memory_space<any>>) dst(%25 : memref<128x128xbf16, #tpu.memory_space<vmem>>)
    %c0_26 = arith.constant 0 : index
    %c0_27 = arith.constant 0 : index
    %c0_28 = arith.constant 0 : index
    %28 = vector.load %arg9[%c0_26, %c0_27, %c0_28] : memref<2x128x128xbf16, #tpu.memory_space<vmem>>, vector<1x128x128xbf16>
    %29 = vector.shape_cast %28 : vector<1x128x128xbf16> to vector<128x128xbf16>
    %c0_29 = arith.constant 0 : index
    %c0_30 = arith.constant 0 : index
    %c0_31 = arith.constant 0 : index
    %30 = vector.load %arg3[%c0_29, %c0_30, %c0_31] : memref<16x1x128xf32, #tpu.memory_space<vmem>>, vector<1x1x128xf32>
    %31 = vector.shape_cast %30 : vector<1x1x128xf32> to vector<1x128xf32>
    %c0_32 = arith.constant 0 : index
    %c0_33 = arith.constant 0 : index
    %c0_34 = arith.constant 0 : index
    %32 = vector.load %arg4[%c0_32, %c0_33, %c0_34] : memref<16x1x128xf32, #tpu.memory_space<vmem>>, vector<1x1x128xf32>
    %33 = vector.shape_cast %32 : vector<1x1x128xf32> to vector<1x128xf32>
    %34 = arith.truncf %15 : vector<16x128xf32> to vector<16x128xbf16>
    %cst_35 = arith.constant dense<0.000000e+00> : vector<16x128xf32>
    %35 = tpu.matmul %34, %29, %cst_35 {dimension_numbers = #tpu.dot_dimension_numbers<[1], [0], [0], [1], [0, 0, 1, 1], [], []>} : vector<16x128xbf16>, vector<128x128xbf16>, vector<16x128xf32> -> vector<16x128xf32>
    %cst_36 = arith.constant dense<0.000000e+00> : vector<128xf32>
    %36 = vector.multi_reduction <add>, %35, %cst_36 [0] : vector<16x128xf32> to vector<128xf32>
    %37 = vector.shape_cast %36 : vector<128xf32> to vector<1x128xf32>
    %cst_37 = arith.constant 1.250000e-01 : f32
    %38 = vector.broadcast %cst_37 : f32 to vector<1x128xf32>
    %39 = arith.mulf %37, %38 : vector<1x128xf32>
    %40 = arith.mulf %35, %35 : vector<16x128xf32>
    %cst_38 = arith.constant dense<0.000000e+00> : vector<128xf32>
    %41 = vector.multi_reduction <add>, %40, %cst_38 [0] : vector<16x128xf32> to vector<128xf32>
    %42 = vector.shape_cast %41 : vector<128xf32> to vector<1x128xf32>
    %cst_39 = arith.constant 1.250000e-01 : f32
    %43 = vector.broadcast %cst_39 : f32 to vector<1x128xf32>
    %44 = arith.mulf %42, %43 : vector<1x128xf32>
    %45 = arith.mulf %39, %39 : vector<1x128xf32>
    %46 = arith.subf %44, %45 : vector<1x128xf32>
    %cst_40 = arith.constant 0.000000e+00 : f32
    %47 = vector.broadcast %cst_40 : f32 to vector<1x128xf32>
    %48 = arith.maximumf %46, %47 : vector<1x128xf32>
    %cst_41 = arith.constant 9.99999974E-6 : f32
    %49 = vector.broadcast %cst_41 : f32 to vector<1x128xf32>
    %50 = arith.addf %48, %49 : vector<1x128xf32>
    %51 = math.rsqrt %50 : vector<1x128xf32>
    %52 = arith.mulf %31, %51 : vector<1x128xf32>
    %53 = arith.mulf %39, %52 : vector<1x128xf32>
    %54 = arith.subf %33, %53 : vector<1x128xf32>
    %55 = vector.broadcast %52 : vector<1x128xf32> to vector<16x128xf32>
    %56 = arith.mulf %35, %55 : vector<16x128xf32>
    %57 = vector.broadcast %54 : vector<1x128xf32> to vector<16x128xf32>
    %58 = arith.addf %56, %57 : vector<16x128xf32>
    %cst_42 = arith.constant 0.000000e+00 : f32
    %59 = vector.broadcast %cst_42 : f32 to vector<16x128xf32>
    %60 = arith.maximumf %58, %59 : vector<16x128xf32>
    %61 = arith.mulf %60, %10 : vector<16x128xf32>
    %c2_i32 = arith.constant 2 : i32
    %c0_i32_43 = arith.constant 0 : i32
    %c0_i32_44 = arith.constant 0 : i32
    %c0_i32_45 = arith.constant 0 : i32
    %c0_i32_46 = arith.constant 0 : i32
    %62 = tpu.memref_slice %arg2[%c2_i32, %c0_i32_45, %c0_i32_46] : memref<16x128x128xbf16, #tpu.memory_space<any>> -> memref<1x128x128xbf16, #tpu.memory_space<any>>
    %63 = tpu.memref_squeeze %62 : memref<1x128x128xbf16, #tpu.memory_space<any>> -> memref<128x128xbf16, #tpu.memory_space<any>>
    %c0_i32_47 = arith.constant 0 : i32
    %c0_i32_48 = arith.constant 0 : i32
    %64 = tpu.memref_slice %arg9[%c0_i32_43, %c0_i32_47, %c0_i32_48] : memref<2x128x128xbf16, #tpu.memory_space<vmem>> -> memref<1x128x128xbf16, #tpu.memory_space<vmem>>
    %65 = tpu.memref_squeeze %64 : memref<1x128x128xbf16, #tpu.memory_space<vmem>> -> memref<128x128xbf16, #tpu.memory_space<vmem>>
    %66 = tpu.memref_slice %arg10[%c0_i32_44] : memref<2x!tpu.dma_semaphore, #tpu.memory_space<semaphore_mem>> -> memref<1x!tpu.dma_semaphore, #tpu.memory_space<semaphore_mem>>
    %67 = tpu.memref_squeeze %66 : memref<1x!tpu.dma_semaphore, #tpu.memory_space<semaphore_mem>> -> memref<!tpu.dma_semaphore, #tpu.memory_space<semaphore_mem>>
    tpu.enqueue_dma source(%63 : memref<128x128xbf16, #tpu.memory_space<any>>) target(%65 : memref<128x128xbf16, #tpu.memory_space<vmem>>) target_semaphore(%67 : memref<!tpu.dma_semaphore, #tpu.memory_space<semaphore_mem>>)
    %c1_i32_49 = arith.constant 1 : i32
    %c1_i32_50 = arith.constant 1 : i32
    %c1_i32_51 = arith.constant 1 : i32
    %c0_i32_52 = arith.constant 0 : i32
    %c0_i32_53 = arith.constant 0 : i32
    %68 = tpu.memref_slice %arg2[%c1_i32_49, %c0_i32_52, %c0_i32_53] : memref<16x128x128xbf16, #tpu.memory_space<any>> -> memref<1x128x128xbf16, #tpu.memory_space<any>>
    %69 = tpu.memref_squeeze %68 : memref<1x128x128xbf16, #tpu.memory_space<any>> -> memref<128x128xbf16, #tpu.memory_space<any>>
    %c0_i32_54 = arith.constant 0 : i32
    %c0_i32_55 = arith.constant 0 : i32
    %70 = tpu.memref_slice %arg9[%c1_i32_50, %c0_i32_54, %c0_i32_55] : memref<2x128x128xbf16, #tpu.memory_space<vmem>> -> memref<1x128x128xbf16, #tpu.memory_space<vmem>>
    %71 = tpu.memref_squeeze %70 : memref<1x128x128xbf16, #tpu.memory_space<vmem>> -> memref<128x128xbf16, #tpu.memory_space<vmem>>
    %72 = tpu.memref_slice %arg10[%c1_i32_51] : memref<2x!tpu.dma_semaphore, #tpu.memory_space<semaphore_mem>> -> memref<1x!tpu.dma_semaphore, #tpu.memory_space<semaphore_mem>>
    %73 = tpu.memref_squeeze %72 : memref<1x!tpu.dma_semaphore, #tpu.memory_space<semaphore_mem>> -> memref<!tpu.dma_semaphore, #tpu.memory_space<semaphore_mem>>
    tpu.wait_dma2 semaphore(%73 : memref<!tpu.dma_semaphore, #tpu.memory_space<semaphore_mem>>) src(%69 : memref<128x128xbf16, #tpu.memory_space<any>>) dst(%71 : memref<128x128xbf16, #tpu.memory_space<vmem>>)
    %c1 = arith.constant 1 : index
    %c0_56 = arith.constant 0 : index
    %c0_57 = arith.constant 0 : index
    %74 = vector.load %arg9[%c1, %c0_56, %c0_57] : memref<2x128x128xbf16, #tpu.memory_space<vmem>>, vector<1x128x128xbf16>
    %75 = vector.shape_cast %74 : vector<1x128x128xbf16> to vector<128x128xbf16>
    %c1_58 = arith.constant 1 : index
    %c0_59 = arith.constant 0 : index
    %c0_60 = arith.constant 0 : index
    %76 = vector.load %arg3[%c1_58, %c0_59, %c0_60] : memref<16x1x128xf32, #tpu.memory_space<vmem>>, vector<1x1x128xf32>
    %77 = vector.shape_cast %76 : vector<1x1x128xf32> to vector<1x128xf32>
    %c1_61 = arith.constant 1 : index
    %c0_62 = arith.constant 0 : index
    %c0_63 = arith.constant 0 : index
    %78 = vector.load %arg4[%c1_61, %c0_62, %c0_63] : memref<16x1x128xf32, #tpu.memory_space<vmem>>, vector<1x1x128xf32>
    %79 = vector.shape_cast %78 : vector<1x1x128xf32> to vector<1x128xf32>
    %80 = arith.truncf %61 : vector<16x128xf32> to vector<16x128xbf16>
    %cst_64 = arith.constant dense<0.000000e+00> : vector<16x128xf32>
    %81 = tpu.matmul %80, %75, %cst_64 {dimension_numbers = #tpu.dot_dimension_numbers<[1], [0], [0], [1], [0, 0, 1, 1], [], []>} : vector<16x128xbf16>, vector<128x128xbf16>, vector<16x128xf32> -> vector<16x128xf32>
    %cst_65 = arith.constant dense<0.000000e+00> : vector<128xf32>
    %82 = vector.multi_reduction <add>, %81, %cst_65 [0] : vector<16x128xf32> to vector<128xf32>
    %83 = vector.shape_cast %82 : vector<128xf32> to vector<1x128xf32>
    %cst_66 = arith.constant 1.250000e-01 : f32
    %84 = vector.broadcast %cst_66 : f32 to vector<1x128xf32>
    %85 = arith.mulf %83, %84 : vector<1x128xf32>
    %86 = arith.mulf %81, %81 : vector<16x128xf32>
    %cst_67 = arith.constant dense<0.000000e+00> : vector<128xf32>
    %87 = vector.multi_reduction <add>, %86, %cst_67 [0] : vector<16x128xf32> to vector<128xf32>
    %88 = vector.shape_cast %87 : vector<128xf32> to vector<1x128xf32>
    %cst_68 = arith.constant 1.250000e-01 : f32
    %89 = vector.broadcast %cst_68 : f32 to vector<1x128xf32>
    %90 = arith.mulf %88, %89 : vector<1x128xf32>
    %91 = arith.mulf %85, %85 : vector<1x128xf32>
    %92 = arith.subf %90, %91 : vector<1x128xf32>
    %cst_69 = arith.constant 0.000000e+00 : f32
    %93 = vector.broadcast %cst_69 : f32 to vector<1x128xf32>
    %94 = arith.maximumf %92, %93 : vector<1x128xf32>
    %cst_70 = arith.constant 9.99999974E-6 : f32
    %95 = vector.broadcast %cst_70 : f32 to vector<1x128xf32>
    %96 = arith.addf %94, %95 : vector<1x128xf32>
    %97 = math.rsqrt %96 : vector<1x128xf32>
    %98 = arith.mulf %77, %97 : vector<1x128xf32>
    %99 = arith.mulf %85, %98 : vector<1x128xf32>
    %100 = arith.subf %79, %99 : vector<1x128xf32>
    %101 = vector.broadcast %98 : vector<1x128xf32> to vector<16x128xf32>
    %102 = arith.mulf %81, %101 : vector<16x128xf32>
    %103 = vector.broadcast %100 : vector<1x128xf32> to vector<16x128xf32>
    %104 = arith.addf %102, %103 : vector<16x128xf32>
    %cst_71 = arith.constant 0.000000e+00 : f32
    %105 = vector.broadcast %cst_71 : f32 to vector<16x128xf32>
    %106 = arith.maximumf %104, %105 : vector<16x128xf32>
    %107 = arith.mulf %106, %10 : vector<16x128xf32>
    %c3_i32 = arith.constant 3 : i32
    %c1_i32_72 = arith.constant 1 : i32
    %c1_i32_73 = arith.constant 1 : i32
    %c0_i32_74 = arith.constant 0 : i32
    %c0_i32_75 = arith.constant 0 : i32
    %108 = tpu.memref_slice %arg2[%c3_i32, %c0_i32_74, %c0_i32_75] : memref<16x128x128xbf16, #tpu.memory_space<any>> -> memref<1x128x128xbf16, #tpu.memory_space<any>>
    %109 = tpu.memref_squeeze %108 : memref<1x128x128xbf16, #tpu.memory_space<any>> -> memref<128x128xbf16, #tpu.memory_space<any>>
    %c0_i32_76 = arith.constant 0 : i32
    %c0_i32_77 = arith.constant 0 : i32
    %110 = tpu.memref_slice %arg9[%c1_i32_72, %c0_i32_76, %c0_i32_77] : memref<2x128x128xbf16, #tpu.memory_space<vmem>> -> memref<1x128x128xbf16, #tpu.memory_space<vmem>>
    %111 = tpu.memref_squeeze %110 : memref<1x128x128xbf16, #tpu.memory_space<vmem>> -> memref<128x128xbf16, #tpu.memory_space<vmem>>
    %112 = tpu.memref_slice %arg10[%c1_i32_73] : memref<2x!tpu.dma_semaphore, #tpu.memory_space<semaphore_mem>> -> memref<1x!tpu.dma_semaphore, #tpu.memory_space<semaphore_mem>>
    %113 = tpu.memref_squeeze %112 : memref<1x!tpu.dma_semaphore, #tpu.memory_space<semaphore_mem>> -> memref<!tpu.dma_semaphore, #tpu.memory_space<semaphore_mem>>
    tpu.enqueue_dma source(%109 : memref<128x128xbf16, #tpu.memory_space<any>>) target(%111 : memref<128x128xbf16, #tpu.memory_space<vmem>>) target_semaphore(%113 : memref<!tpu.dma_semaphore, #tpu.memory_space<semaphore_mem>>)
    %c2_i32_78 = arith.constant 2 : i32
    %c0_i32_79 = arith.constant 0 : i32
    %c0_i32_80 = arith.constant 0 : i32
    %c0_i32_81 = arith.constant 0 : i32
    %c0_i32_82 = arith.constant 0 : i32
    %114 = tpu.memref_slice %arg2[%c2_i32_78, %c0_i32_81, %c0_i32_82] : memref<16x128x128xbf16, #tpu.memory_space<any>> -> memref<1x128x128xbf16, #tpu.memory_space<any>>
    %115 = tpu.memref_squeeze %114 : memref<1x128x128xbf16, #tpu.memory_space<any>> -> memref<128x128xbf16, #tpu.memory_space<any>>
    %c0_i32_83 = arith.constant 0 : i32
    %c0_i32_84 = arith.constant 0 : i32
    %116 = tpu.memref_slice %arg9[%c0_i32_79, %c0_i32_83, %c0_i32_84] : memref<2x128x128xbf16, #tpu.memory_space<vmem>> -> memref<1x128x128xbf16, #tpu.memory_space<vmem>>
    %117 = tpu.memref_squeeze %116 : memref<1x128x128xbf16, #tpu.memory_space<vmem>> -> memref<128x128xbf16, #tpu.memory_space<vmem>>
    %118 = tpu.memref_slice %arg10[%c0_i32_80] : memref<2x!tpu.dma_semaphore, #tpu.memory_space<semaphore_mem>> -> memref<1x!tpu.dma_semaphore, #tpu.memory_space<semaphore_mem>>
    %119 = tpu.memref_squeeze %118 : memref<1x!tpu.dma_semaphore, #tpu.memory_space<semaphore_mem>> -> memref<!tpu.dma_semaphore, #tpu.memory_space<semaphore_mem>>
    tpu.wait_dma2 semaphore(%119 : memref<!tpu.dma_semaphore, #tpu.memory_space<semaphore_mem>>) src(%115 : memref<128x128xbf16, #tpu.memory_space<any>>) dst(%117 : memref<128x128xbf16, #tpu.memory_space<vmem>>)
    %c0_85 = arith.constant 0 : index
    %c0_86 = arith.constant 0 : index
    %c0_87 = arith.constant 0 : index
    %120 = vector.load %arg9[%c0_85, %c0_86, %c0_87] : memref<2x128x128xbf16, #tpu.memory_space<vmem>>, vector<1x128x128xbf16>
    %121 = vector.shape_cast %120 : vector<1x128x128xbf16> to vector<128x128xbf16>
    %c2 = arith.constant 2 : index
    %c0_88 = arith.constant 0 : index
    %c0_89 = arith.constant 0 : index
    %122 = vector.load %arg3[%c2, %c0_88, %c0_89] : memref<16x1x128xf32, #tpu.memory_space<vmem>>, vector<1x1x128xf32>
    %123 = vector.shape_cast %122 : vector<1x1x128xf32> to vector<1x128xf32>
    %c2_90 = arith.constant 2 : index
    %c0_91 = arith.constant 0 : index
    %c0_92 = arith.constant 0 : index
    %124 = vector.load %arg4[%c2_90, %c0_91, %c0_92] : memref<16x1x128xf32, #tpu.memory_space<vmem>>, vector<1x1x128xf32>
    %125 = vector.shape_cast %124 : vector<1x1x128xf32> to vector<1x128xf32>
    %126 = arith.truncf %107 : vector<16x128xf32> to vector<16x128xbf16>
    %cst_93 = arith.constant dense<0.000000e+00> : vector<16x128xf32>
    %127 = tpu.matmul %126, %121, %cst_93 {dimension_numbers = #tpu.dot_dimension_numbers<[1], [0], [0], [1], [0, 0, 1, 1], [], []>} : vector<16x128xbf16>, vector<128x128xbf16>, vector<16x128xf32> -> vector<16x128xf32>
    %cst_94 = arith.constant dense<0.000000e+00> : vector<128xf32>
    %128 = vector.multi_reduction <add>, %127, %cst_94 [0] : vector<16x128xf32> to vector<128xf32>
    %129 = vector.shape_cast %128 : vector<128xf32> to vector<1x128xf32>
    %cst_95 = arith.constant 1.250000e-01 : f32
    %130 = vector.broadcast %cst_95 : f32 to vector<1x128xf32>
    %131 = arith.mulf %129, %130 : vector<1x128xf32>
    %132 = arith.mulf %127, %127 : vector<16x128xf32>
    %cst_96 = arith.constant dense<0.000000e+00> : vector<128xf32>
    %133 = vector.multi_reduction <add>, %132, %cst_96 [0] : vector<16x128xf32> to vector<128xf32>
    %134 = vector.shape_cast %133 : vector<128xf32> to vector<1x128xf32>
    %cst_97 = arith.constant 1.250000e-01 : f32
    %135 = vector.broadcast %cst_97 : f32 to vector<1x128xf32>
    %136 = arith.mulf %134, %135 : vector<1x128xf32>
    %137 = arith.mulf %131, %131 : vector<1x128xf32>
    %138 = arith.subf %136, %137 : vector<1x128xf32>
    %cst_98 = arith.constant 0.000000e+00 : f32
    %139 = vector.broadcast %cst_98 : f32 to vector<1x128xf32>
    %140 = arith.maximumf %138, %139 : vector<1x128xf32>
    %cst_99 = arith.constant 9.99999974E-6 : f32
    %141 = vector.broadcast %cst_99 : f32 to vector<1x128xf32>
    %142 = arith.addf %140, %141 : vector<1x128xf32>
    %143 = math.rsqrt %142 : vector<1x128xf32>
    %144 = arith.mulf %123, %143 : vector<1x128xf32>
    %145 = arith.mulf %131, %144 : vector<1x128xf32>
    %146 = arith.subf %125, %145 : vector<1x128xf32>
    %147 = vector.broadcast %144 : vector<1x128xf32> to vector<16x128xf32>
    %148 = arith.mulf %127, %147 : vector<16x128xf32>
    %149 = vector.broadcast %146 : vector<1x128xf32> to vector<16x128xf32>
    %150 = arith.addf %148, %149 : vector<16x128xf32>
    %cst_100 = arith.constant 0.000000e+00 : f32
    %151 = vector.broadcast %cst_100 : f32 to vector<16x128xf32>
    %152 = arith.maximumf %150, %151 : vector<16x128xf32>
    %153 = arith.mulf %152, %10 : vector<16x128xf32>
    %c4_i32 = arith.constant 4 : i32
    %c0_i32_101 = arith.constant 0 : i32
    %c0_i32_102 = arith.constant 0 : i32
    %c0_i32_103 = arith.constant 0 : i32
    %c0_i32_104 = arith.constant 0 : i32
    %154 = tpu.memref_slice %arg2[%c4_i32, %c0_i32_103, %c0_i32_104] : memref<16x128x128xbf16, #tpu.memory_space<any>> -> memref<1x128x128xbf16, #tpu.memory_space<any>>
    %155 = tpu.memref_squeeze %154 : memref<1x128x128xbf16, #tpu.memory_space<any>> -> memref<128x128xbf16, #tpu.memory_space<any>>
    %c0_i32_105 = arith.constant 0 : i32
    %c0_i32_106 = arith.constant 0 : i32
    %156 = tpu.memref_slice %arg9[%c0_i32_101, %c0_i32_105, %c0_i32_106] : memref<2x128x128xbf16, #tpu.memory_space<vmem>> -> memref<1x128x128xbf16, #tpu.memory_space<vmem>>
    %157 = tpu.memref_squeeze %156 : memref<1x128x128xbf16, #tpu.memory_space<vmem>> -> memref<128x128xbf16, #tpu.memory_space<vmem>>
    %158 = tpu.memref_slice %arg10[%c0_i32_102] : memref<2x!tpu.dma_semaphore, #tpu.memory_space<semaphore_mem>> -> memref<1x!tpu.dma_semaphore, #tpu.memory_space<semaphore_mem>>
    %159 = tpu.memref_squeeze %158 : memref<1x!tpu.dma_semaphore, #tpu.memory_space<semaphore_mem>> -> memref<!tpu.dma_semaphore, #tpu.memory_space<semaphore_mem>>
    tpu.enqueue_dma source(%155 : memref<128x128xbf16, #tpu.memory_space<any>>) target(%157 : memref<128x128xbf16, #tpu.memory_space<vmem>>) target_semaphore(%159 : memref<!tpu.dma_semaphore, #tpu.memory_space<semaphore_mem>>)
    %c3_i32_107 = arith.constant 3 : i32
    %c1_i32_108 = arith.constant 1 : i32
    %c1_i32_109 = arith.constant 1 : i32
    %c0_i32_110 = arith.constant 0 : i32
    %c0_i32_111 = arith.constant 0 : i32
    %160 = tpu.memref_slice %arg2[%c3_i32_107, %c0_i32_110, %c0_i32_111] : memref<16x128x128xbf16, #tpu.memory_space<any>> -> memref<1x128x128xbf16, #tpu.memory_space<any>>
    %161 = tpu.memref_squeeze %160 : memref<1x128x128xbf16, #tpu.memory_space<any>> -> memref<128x128xbf16, #tpu.memory_space<any>>
    %c0_i32_112 = arith.constant 0 : i32
    %c0_i32_113 = arith.constant 0 : i32
    %162 = tpu.memref_slice %arg9[%c1_i32_108, %c0_i32_112, %c0_i32_113] : memref<2x128x128xbf16, #tpu.memory_space<vmem>> -> memref<1x128x128xbf16, #tpu.memory_space<vmem>>
    %163 = tpu.memref_squeeze %162 : memref<1x128x128xbf16, #tpu.memory_space<vmem>> -> memref<128x128xbf16, #tpu.memory_space<vmem>>
    %164 = tpu.memref_slice %arg10[%c1_i32_109] : memref<2x!tpu.dma_semaphore, #tpu.memory_space<semaphore_mem>> -> memref<1x!tpu.dma_semaphore, #tpu.memory_space<semaphore_mem>>
    %165 = tpu.memref_squeeze %164 : memref<1x!tpu.dma_semaphore, #tpu.memory_space<semaphore_mem>> -> memref<!tpu.dma_semaphore, #tpu.memory_space<semaphore_mem>>
    tpu.wait_dma2 semaphore(%165 : memref<!tpu.dma_semaphore, #tpu.memory_space<semaphore_mem>>) src(%161 : memref<128x128xbf16, #tpu.memory_space<any>>) dst(%163 : memref<128x128xbf16, #tpu.memory_space<vmem>>)
    %c1_114 = arith.constant 1 : index
    %c0_115 = arith.constant 0 : index
    %c0_116 = arith.constant 0 : index
    %166 = vector.load %arg9[%c1_114, %c0_115, %c0_116] : memref<2x128x128xbf16, #tpu.memory_space<vmem>>, vector<1x128x128xbf16>
    %167 = vector.shape_cast %166 : vector<1x128x128xbf16> to vector<128x128xbf16>
    %c3 = arith.constant 3 : index
    %c0_117 = arith.constant 0 : index
    %c0_118 = arith.constant 0 : index
    %168 = vector.load %arg3[%c3, %c0_117, %c0_118] : memref<16x1x128xf32, #tpu.memory_space<vmem>>, vector<1x1x128xf32>
    %169 = vector.shape_cast %168 : vector<1x1x128xf32> to vector<1x128xf32>
    %c3_119 = arith.constant 3 : index
    %c0_120 = arith.constant 0 : index
    %c0_121 = arith.constant 0 : index
    %170 = vector.load %arg4[%c3_119, %c0_120, %c0_121] : memref<16x1x128xf32, #tpu.memory_space<vmem>>, vector<1x1x128xf32>
    %171 = vector.shape_cast %170 : vector<1x1x128xf32> to vector<1x128xf32>
    %172 = arith.truncf %153 : vector<16x128xf32> to vector<16x128xbf16>
    %cst_122 = arith.constant dense<0.000000e+00> : vector<16x128xf32>
    %173 = tpu.matmul %172, %167, %cst_122 {dimension_numbers = #tpu.dot_dimension_numbers<[1], [0], [0], [1], [0, 0, 1, 1], [], []>} : vector<16x128xbf16>, vector<128x128xbf16>, vector<16x128xf32> -> vector<16x128xf32>
    %cst_123 = arith.constant dense<0.000000e+00> : vector<128xf32>
    %174 = vector.multi_reduction <add>, %173, %cst_123 [0] : vector<16x128xf32> to vector<128xf32>
    %175 = vector.shape_cast %174 : vector<128xf32> to vector<1x128xf32>
    %cst_124 = arith.constant 1.250000e-01 : f32
    %176 = vector.broadcast %cst_124 : f32 to vector<1x128xf32>
    %177 = arith.mulf %175, %176 : vector<1x128xf32>
    %178 = arith.mulf %173, %173 : vector<16x128xf32>
    %cst_125 = arith.constant dense<0.000000e+00> : vector<128xf32>
    %179 = vector.multi_reduction <add>, %178, %cst_125 [0] : vector<16x128xf32> to vector<128xf32>
    %180 = vector.shape_cast %179 : vector<128xf32> to vector<1x128xf32>
    %cst_126 = arith.constant 1.250000e-01 : f32
    %181 = vector.broadcast %cst_126 : f32 to vector<1x128xf32>
    %182 = arith.mulf %180, %181 : vector<1x128xf32>
    %183 = arith.mulf %177, %177 : vector<1x128xf32>
    %184 = arith.subf %182, %183 : vector<1x128xf32>
    %cst_127 = arith.constant 0.000000e+00 : f32
    %185 = vector.broadcast %cst_127 : f32 to vector<1x128xf32>
    %186 = arith.maximumf %184, %185 : vector<1x128xf32>
    %cst_128 = arith.constant 9.99999974E-6 : f32
    %187 = vector.broadcast %cst_128 : f32 to vector<1x128xf32>
    %188 = arith.addf %186, %187 : vector<1x128xf32>
    %189 = math.rsqrt %188 : vector<1x128xf32>
    %190 = arith.mulf %169, %189 : vector<1x128xf32>
    %191 = arith.mulf %177, %190 : vector<1x128xf32>
    %192 = arith.subf %171, %191 : vector<1x128xf32>
    %193 = vector.broadcast %190 : vector<1x128xf32> to vector<16x128xf32>
    %194 = arith.mulf %173, %193 : vector<16x128xf32>
    %195 = vector.broadcast %192 : vector<1x128xf32> to vector<16x128xf32>
    %196 = arith.addf %194, %195 : vector<16x128xf32>
    %cst_129 = arith.constant 0.000000e+00 : f32
    %197 = vector.broadcast %cst_129 : f32 to vector<16x128xf32>
    %198 = arith.maximumf %196, %197 : vector<16x128xf32>
    %199 = arith.mulf %198, %10 : vector<16x128xf32>
    %c5_i32 = arith.constant 5 : i32
    %c1_i32_130 = arith.constant 1 : i32
    %c1_i32_131 = arith.constant 1 : i32
    %c0_i32_132 = arith.constant 0 : i32
    %c0_i32_133 = arith.constant 0 : i32
    %200 = tpu.memref_slice %arg2[%c5_i32, %c0_i32_132, %c0_i32_133] : memref<16x128x128xbf16, #tpu.memory_space<any>> -> memref<1x128x128xbf16, #tpu.memory_space<any>>
    %201 = tpu.memref_squeeze %200 : memref<1x128x128xbf16, #tpu.memory_space<any>> -> memref<128x128xbf16, #tpu.memory_space<any>>
    %c0_i32_134 = arith.constant 0 : i32
    %c0_i32_135 = arith.constant 0 : i32
    %202 = tpu.memref_slice %arg9[%c1_i32_130, %c0_i32_134, %c0_i32_135] : memref<2x128x128xbf16, #tpu.memory_space<vmem>> -> memref<1x128x128xbf16, #tpu.memory_space<vmem>>
    %203 = tpu.memref_squeeze %202 : memref<1x128x128xbf16, #tpu.memory_space<vmem>> -> memref<128x128xbf16, #tpu.memory_space<vmem>>
    %204 = tpu.memref_slice %arg10[%c1_i32_131] : memref<2x!tpu.dma_semaphore, #tpu.memory_space<semaphore_mem>> -> memref<1x!tpu.dma_semaphore, #tpu.memory_space<semaphore_mem>>
    %205 = tpu.memref_squeeze %204 : memref<1x!tpu.dma_semaphore, #tpu.memory_space<semaphore_mem>> -> memref<!tpu.dma_semaphore, #tpu.memory_space<semaphore_mem>>
    tpu.enqueue_dma source(%201 : memref<128x128xbf16, #tpu.memory_space<any>>) target(%203 : memref<128x128xbf16, #tpu.memory_space<vmem>>) target_semaphore(%205 : memref<!tpu.dma_semaphore, #tpu.memory_space<semaphore_mem>>)
    %c4_i32_136 = arith.constant 4 : i32
    %c0_i32_137 = arith.constant 0 : i32
    %c0_i32_138 = arith.constant 0 : i32
    %c0_i32_139 = arith.constant 0 : i32
    %c0_i32_140 = arith.constant 0 : i32
    %206 = tpu.memref_slice %arg2[%c4_i32_136, %c0_i32_139, %c0_i32_140] : memref<16x128x128xbf16, #tpu.memory_space<any>> -> memref<1x128x128xbf16, #tpu.memory_space<any>>
    %207 = tpu.memref_squeeze %206 : memref<1x128x128xbf16, #tpu.memory_space<any>> -> memref<128x128xbf16, #tpu.memory_space<any>>
    %c0_i32_141 = arith.constant 0 : i32
    %c0_i32_142 = arith.constant 0 : i32
    %208 = tpu.memref_slice %arg9[%c0_i32_137, %c0_i32_141, %c0_i32_142] : memref<2x128x128xbf16, #tpu.memory_space<vmem>> -> memref<1x128x128xbf16, #tpu.memory_space<vmem>>
    %209 = tpu.memref_squeeze %208 : memref<1x128x128xbf16, #tpu.memory_space<vmem>> -> memref<128x128xbf16, #tpu.memory_space<vmem>>
    %210 = tpu.memref_slice %arg10[%c0_i32_138] : memref<2x!tpu.dma_semaphore, #tpu.memory_space<semaphore_mem>> -> memref<1x!tpu.dma_semaphore, #tpu.memory_space<semaphore_mem>>
    %211 = tpu.memref_squeeze %210 : memref<1x!tpu.dma_semaphore, #tpu.memory_space<semaphore_mem>> -> memref<!tpu.dma_semaphore, #tpu.memory_space<semaphore_mem>>
    tpu.wait_dma2 semaphore(%211 : memref<!tpu.dma_semaphore, #tpu.memory_space<semaphore_mem>>) src(%207 : memref<128x128xbf16, #tpu.memory_space<any>>) dst(%209 : memref<128x128xbf16, #tpu.memory_space<vmem>>)
    %c0_143 = arith.constant 0 : index
    %c0_144 = arith.constant 0 : index
    %c0_145 = arith.constant 0 : index
    %212 = vector.load %arg9[%c0_143, %c0_144, %c0_145] : memref<2x128x128xbf16, #tpu.memory_space<vmem>>, vector<1x128x128xbf16>
    %213 = vector.shape_cast %212 : vector<1x128x128xbf16> to vector<128x128xbf16>
    %c4 = arith.constant 4 : index
    %c0_146 = arith.constant 0 : index
    %c0_147 = arith.constant 0 : index
    %214 = vector.load %arg3[%c4, %c0_146, %c0_147] : memref<16x1x128xf32, #tpu.memory_space<vmem>>, vector<1x1x128xf32>
    %215 = vector.shape_cast %214 : vector<1x1x128xf32> to vector<1x128xf32>
    %c4_148 = arith.constant 4 : index
    %c0_149 = arith.constant 0 : index
    %c0_150 = arith.constant 0 : index
    %216 = vector.load %arg4[%c4_148, %c0_149, %c0_150] : memref<16x1x128xf32, #tpu.memory_space<vmem>>, vector<1x1x128xf32>
    %217 = vector.shape_cast %216 : vector<1x1x128xf32> to vector<1x128xf32>
    %218 = arith.truncf %199 : vector<16x128xf32> to vector<16x128xbf16>
    %cst_151 = arith.constant dense<0.000000e+00> : vector<16x128xf32>
    %219 = tpu.matmul %218, %213, %cst_151 {dimension_numbers = #tpu.dot_dimension_numbers<[1], [0], [0], [1], [0, 0, 1, 1], [], []>} : vector<16x128xbf16>, vector<128x128xbf16>, vector<16x128xf32> -> vector<16x128xf32>
    %cst_152 = arith.constant dense<0.000000e+00> : vector<128xf32>
    %220 = vector.multi_reduction <add>, %219, %cst_152 [0] : vector<16x128xf32> to vector<128xf32>
    %221 = vector.shape_cast %220 : vector<128xf32> to vector<1x128xf32>
    %cst_153 = arith.constant 1.250000e-01 : f32
    %222 = vector.broadcast %cst_153 : f32 to vector<1x128xf32>
    %223 = arith.mulf %221, %222 : vector<1x128xf32>
    %224 = arith.mulf %219, %219 : vector<16x128xf32>
    %cst_154 = arith.constant dense<0.000000e+00> : vector<128xf32>
    %225 = vector.multi_reduction <add>, %224, %cst_154 [0] : vector<16x128xf32> to vector<128xf32>
    %226 = vector.shape_cast %225 : vector<128xf32> to vector<1x128xf32>
    %cst_155 = arith.constant 1.250000e-01 : f32
    %227 = vector.broadcast %cst_155 : f32 to vector<1x128xf32>
    %228 = arith.mulf %226, %227 : vector<1x128xf32>
    %229 = arith.mulf %223, %223 : vector<1x128xf32>
    %230 = arith.subf %228, %229 : vector<1x128xf32>
    %cst_156 = arith.constant 0.000000e+00 : f32
    %231 = vector.broadcast %cst_156 : f32 to vector<1x128xf32>
    %232 = arith.maximumf %230, %231 : vector<1x128xf32>
    %cst_157 = arith.constant 9.99999974E-6 : f32
    %233 = vector.broadcast %cst_157 : f32 to vector<1x128xf32>
    %234 = arith.addf %232, %233 : vector<1x128xf32>
    %235 = math.rsqrt %234 : vector<1x128xf32>
    %236 = arith.mulf %215, %235 : vector<1x128xf32>
    %237 = arith.mulf %223, %236 : vector<1x128xf32>
    %238 = arith.subf %217, %237 : vector<1x128xf32>
    %239 = vector.broadcast %236 : vector<1x128xf32> to vector<16x128xf32>
    %240 = arith.mulf %219, %239 : vector<16x128xf32>
    %241 = vector.broadcast %238 : vector<1x128xf32> to vector<16x128xf32>
    %242 = arith.addf %240, %241 : vector<16x128xf32>
    %cst_158 = arith.constant 0.000000e+00 : f32
    %243 = vector.broadcast %cst_158 : f32 to vector<16x128xf32>
    %244 = arith.maximumf %242, %243 : vector<16x128xf32>
    %245 = arith.mulf %244, %10 : vector<16x128xf32>
    %c6_i32 = arith.constant 6 : i32
    %c0_i32_159 = arith.constant 0 : i32
    %c0_i32_160 = arith.constant 0 : i32
    %c0_i32_161 = arith.constant 0 : i32
    %c0_i32_162 = arith.constant 0 : i32
    %246 = tpu.memref_slice %arg2[%c6_i32, %c0_i32_161, %c0_i32_162] : memref<16x128x128xbf16, #tpu.memory_space<any>> -> memref<1x128x128xbf16, #tpu.memory_space<any>>
    %247 = tpu.memref_squeeze %246 : memref<1x128x128xbf16, #tpu.memory_space<any>> -> memref<128x128xbf16, #tpu.memory_space<any>>
    %c0_i32_163 = arith.constant 0 : i32
    %c0_i32_164 = arith.constant 0 : i32
    %248 = tpu.memref_slice %arg9[%c0_i32_159, %c0_i32_163, %c0_i32_164] : memref<2x128x128xbf16, #tpu.memory_space<vmem>> -> memref<1x128x128xbf16, #tpu.memory_space<vmem>>
    %249 = tpu.memref_squeeze %248 : memref<1x128x128xbf16, #tpu.memory_space<vmem>> -> memref<128x128xbf16, #tpu.memory_space<vmem>>
    %250 = tpu.memref_slice %arg10[%c0_i32_160] : memref<2x!tpu.dma_semaphore, #tpu.memory_space<semaphore_mem>> -> memref<1x!tpu.dma_semaphore, #tpu.memory_space<semaphore_mem>>
    %251 = tpu.memref_squeeze %250 : memref<1x!tpu.dma_semaphore, #tpu.memory_space<semaphore_mem>> -> memref<!tpu.dma_semaphore, #tpu.memory_space<semaphore_mem>>
    tpu.enqueue_dma source(%247 : memref<128x128xbf16, #tpu.memory_space<any>>) target(%249 : memref<128x128xbf16, #tpu.memory_space<vmem>>) target_semaphore(%251 : memref<!tpu.dma_semaphore, #tpu.memory_space<semaphore_mem>>)
    %c5_i32_165 = arith.constant 5 : i32
    %c1_i32_166 = arith.constant 1 : i32
    %c1_i32_167 = arith.constant 1 : i32
    %c0_i32_168 = arith.constant 0 : i32
    %c0_i32_169 = arith.constant 0 : i32
    %252 = tpu.memref_slice %arg2[%c5_i32_165, %c0_i32_168, %c0_i32_169] : memref<16x128x128xbf16, #tpu.memory_space<any>> -> memref<1x128x128xbf16, #tpu.memory_space<any>>
    %253 = tpu.memref_squeeze %252 : memref<1x128x128xbf16, #tpu.memory_space<any>> -> memref<128x128xbf16, #tpu.memory_space<any>>
    %c0_i32_170 = arith.constant 0 : i32
    %c0_i32_171 = arith.constant 0 : i32
    %254 = tpu.memref_slice %arg9[%c1_i32_166, %c0_i32_170, %c0_i32_171] : memref<2x128x128xbf16, #tpu.memory_space<vmem>> -> memref<1x128x128xbf16, #tpu.memory_space<vmem>>
    %255 = tpu.memref_squeeze %254 : memref<1x128x128xbf16, #tpu.memory_space<vmem>> -> memref<128x128xbf16, #tpu.memory_space<vmem>>
    %256 = tpu.memref_slice %arg10[%c1_i32_167] : memref<2x!tpu.dma_semaphore, #tpu.memory_space<semaphore_mem>> -> memref<1x!tpu.dma_semaphore, #tpu.memory_space<semaphore_mem>>
    %257 = tpu.memref_squeeze %256 : memref<1x!tpu.dma_semaphore, #tpu.memory_space<semaphore_mem>> -> memref<!tpu.dma_semaphore, #tpu.memory_space<semaphore_mem>>
    tpu.wait_dma2 semaphore(%257 : memref<!tpu.dma_semaphore, #tpu.memory_space<semaphore_mem>>) src(%253 : memref<128x128xbf16, #tpu.memory_space<any>>) dst(%255 : memref<128x128xbf16, #tpu.memory_space<vmem>>)
    %c1_172 = arith.constant 1 : index
    %c0_173 = arith.constant 0 : index
    %c0_174 = arith.constant 0 : index
    %258 = vector.load %arg9[%c1_172, %c0_173, %c0_174] : memref<2x128x128xbf16, #tpu.memory_space<vmem>>, vector<1x128x128xbf16>
    %259 = vector.shape_cast %258 : vector<1x128x128xbf16> to vector<128x128xbf16>
    %c5 = arith.constant 5 : index
    %c0_175 = arith.constant 0 : index
    %c0_176 = arith.constant 0 : index
    %260 = vector.load %arg3[%c5, %c0_175, %c0_176] : memref<16x1x128xf32, #tpu.memory_space<vmem>>, vector<1x1x128xf32>
    %261 = vector.shape_cast %260 : vector<1x1x128xf32> to vector<1x128xf32>
    %c5_177 = arith.constant 5 : index
    %c0_178 = arith.constant 0 : index
    %c0_179 = arith.constant 0 : index
    %262 = vector.load %arg4[%c5_177, %c0_178, %c0_179] : memref<16x1x128xf32, #tpu.memory_space<vmem>>, vector<1x1x128xf32>
    %263 = vector.shape_cast %262 : vector<1x1x128xf32> to vector<1x128xf32>
    %264 = arith.truncf %245 : vector<16x128xf32> to vector<16x128xbf16>
    %cst_180 = arith.constant dense<0.000000e+00> : vector<16x128xf32>
    %265 = tpu.matmul %264, %259, %cst_180 {dimension_numbers = #tpu.dot_dimension_numbers<[1], [0], [0], [1], [0, 0, 1, 1], [], []>} : vector<16x128xbf16>, vector<128x128xbf16>, vector<16x128xf32> -> vector<16x128xf32>
    %cst_181 = arith.constant dense<0.000000e+00> : vector<128xf32>
    %266 = vector.multi_reduction <add>, %265, %cst_181 [0] : vector<16x128xf32> to vector<128xf32>
    %267 = vector.shape_cast %266 : vector<128xf32> to vector<1x128xf32>
    %cst_182 = arith.constant 1.250000e-01 : f32
    %268 = vector.broadcast %cst_182 : f32 to vector<1x128xf32>
    %269 = arith.mulf %267, %268 : vector<1x128xf32>
    %270 = arith.mulf %265, %265 : vector<16x128xf32>
    %cst_183 = arith.constant dense<0.000000e+00> : vector<128xf32>
    %271 = vector.multi_reduction <add>, %270, %cst_183 [0] : vector<16x128xf32> to vector<128xf32>
    %272 = vector.shape_cast %271 : vector<128xf32> to vector<1x128xf32>
    %cst_184 = arith.constant 1.250000e-01 : f32
    %273 = vector.broadcast %cst_184 : f32 to vector<1x128xf32>
    %274 = arith.mulf %272, %273 : vector<1x128xf32>
    %275 = arith.mulf %269, %269 : vector<1x128xf32>
    %276 = arith.subf %274, %275 : vector<1x128xf32>
    %cst_185 = arith.constant 0.000000e+00 : f32
    %277 = vector.broadcast %cst_185 : f32 to vector<1x128xf32>
    %278 = arith.maximumf %276, %277 : vector<1x128xf32>
    %cst_186 = arith.constant 9.99999974E-6 : f32
    %279 = vector.broadcast %cst_186 : f32 to vector<1x128xf32>
    %280 = arith.addf %278, %279 : vector<1x128xf32>
    %281 = math.rsqrt %280 : vector<1x128xf32>
    %282 = arith.mulf %261, %281 : vector<1x128xf32>
    %283 = arith.mulf %269, %282 : vector<1x128xf32>
    %284 = arith.subf %263, %283 : vector<1x128xf32>
    %285 = vector.broadcast %282 : vector<1x128xf32> to vector<16x128xf32>
    %286 = arith.mulf %265, %285 : vector<16x128xf32>
    %287 = vector.broadcast %284 : vector<1x128xf32> to vector<16x128xf32>
    %288 = arith.addf %286, %287 : vector<16x128xf32>
    %cst_187 = arith.constant 0.000000e+00 : f32
    %289 = vector.broadcast %cst_187 : f32 to vector<16x128xf32>
    %290 = arith.maximumf %288, %289 : vector<16x128xf32>
    %291 = arith.mulf %290, %10 : vector<16x128xf32>
    %c7_i32 = arith.constant 7 : i32
    %c1_i32_188 = arith.constant 1 : i32
    %c1_i32_189 = arith.constant 1 : i32
    %c0_i32_190 = arith.constant 0 : i32
    %c0_i32_191 = arith.constant 0 : i32
    %292 = tpu.memref_slice %arg2[%c7_i32, %c0_i32_190, %c0_i32_191] : memref<16x128x128xbf16, #tpu.memory_space<any>> -> memref<1x128x128xbf16, #tpu.memory_space<any>>
    %293 = tpu.memref_squeeze %292 : memref<1x128x128xbf16, #tpu.memory_space<any>> -> memref<128x128xbf16, #tpu.memory_space<any>>
    %c0_i32_192 = arith.constant 0 : i32
    %c0_i32_193 = arith.constant 0 : i32
    %294 = tpu.memref_slice %arg9[%c1_i32_188, %c0_i32_192, %c0_i32_193] : memref<2x128x128xbf16, #tpu.memory_space<vmem>> -> memref<1x128x128xbf16, #tpu.memory_space<vmem>>
    %295 = tpu.memref_squeeze %294 : memref<1x128x128xbf16, #tpu.memory_space<vmem>> -> memref<128x128xbf16, #tpu.memory_space<vmem>>
    %296 = tpu.memref_slice %arg10[%c1_i32_189] : memref<2x!tpu.dma_semaphore, #tpu.memory_space<semaphore_mem>> -> memref<1x!tpu.dma_semaphore, #tpu.memory_space<semaphore_mem>>
    %297 = tpu.memref_squeeze %296 : memref<1x!tpu.dma_semaphore, #tpu.memory_space<semaphore_mem>> -> memref<!tpu.dma_semaphore, #tpu.memory_space<semaphore_mem>>
    tpu.enqueue_dma source(%293 : memref<128x128xbf16, #tpu.memory_space<any>>) target(%295 : memref<128x128xbf16, #tpu.memory_space<vmem>>) target_semaphore(%297 : memref<!tpu.dma_semaphore, #tpu.memory_space<semaphore_mem>>)
    %c6_i32_194 = arith.constant 6 : i32
    %c0_i32_195 = arith.constant 0 : i32
    %c0_i32_196 = arith.constant 0 : i32
    %c0_i32_197 = arith.constant 0 : i32
    %c0_i32_198 = arith.constant 0 : i32
    %298 = tpu.memref_slice %arg2[%c6_i32_194, %c0_i32_197, %c0_i32_198] : memref<16x128x128xbf16, #tpu.memory_space<any>> -> memref<1x128x128xbf16, #tpu.memory_space<any>>
    %299 = tpu.memref_squeeze %298 : memref<1x128x128xbf16, #tpu.memory_space<any>> -> memref<128x128xbf16, #tpu.memory_space<any>>
    %c0_i32_199 = arith.constant 0 : i32
    %c0_i32_200 = arith.constant 0 : i32
    %300 = tpu.memref_slice %arg9[%c0_i32_195, %c0_i32_199, %c0_i32_200] : memref<2x128x128xbf16, #tpu.memory_space<vmem>> -> memref<1x128x128xbf16, #tpu.memory_space<vmem>>
    %301 = tpu.memref_squeeze %300 : memref<1x128x128xbf16, #tpu.memory_space<vmem>> -> memref<128x128xbf16, #tpu.memory_space<vmem>>
    %302 = tpu.memref_slice %arg10[%c0_i32_196] : memref<2x!tpu.dma_semaphore, #tpu.memory_space<semaphore_mem>> -> memref<1x!tpu.dma_semaphore, #tpu.memory_space<semaphore_mem>>
    %303 = tpu.memref_squeeze %302 : memref<1x!tpu.dma_semaphore, #tpu.memory_space<semaphore_mem>> -> memref<!tpu.dma_semaphore, #tpu.memory_space<semaphore_mem>>
    tpu.wait_dma2 semaphore(%303 : memref<!tpu.dma_semaphore, #tpu.memory_space<semaphore_mem>>) src(%299 : memref<128x128xbf16, #tpu.memory_space<any>>) dst(%301 : memref<128x128xbf16, #tpu.memory_space<vmem>>)
    %c0_201 = arith.constant 0 : index
    %c0_202 = arith.constant 0 : index
    %c0_203 = arith.constant 0 : index
    %304 = vector.load %arg9[%c0_201, %c0_202, %c0_203] : memref<2x128x128xbf16, #tpu.memory_space<vmem>>, vector<1x128x128xbf16>
    %305 = vector.shape_cast %304 : vector<1x128x128xbf16> to vector<128x128xbf16>
    %c6 = arith.constant 6 : index
    %c0_204 = arith.constant 0 : index
    %c0_205 = arith.constant 0 : index
    %306 = vector.load %arg3[%c6, %c0_204, %c0_205] : memref<16x1x128xf32, #tpu.memory_space<vmem>>, vector<1x1x128xf32>
    %307 = vector.shape_cast %306 : vector<1x1x128xf32> to vector<1x128xf32>
    %c6_206 = arith.constant 6 : index
    %c0_207 = arith.constant 0 : index
    %c0_208 = arith.constant 0 : index
    %308 = vector.load %arg4[%c6_206, %c0_207, %c0_208] : memref<16x1x128xf32, #tpu.memory_space<vmem>>, vector<1x1x128xf32>
    %309 = vector.shape_cast %308 : vector<1x1x128xf32> to vector<1x128xf32>
    %310 = arith.truncf %291 : vector<16x128xf32> to vector<16x128xbf16>
    %cst_209 = arith.constant dense<0.000000e+00> : vector<16x128xf32>
    %311 = tpu.matmul %310, %305, %cst_209 {dimension_numbers = #tpu.dot_dimension_numbers<[1], [0], [0], [1], [0, 0, 1, 1], [], []>} : vector<16x128xbf16>, vector<128x128xbf16>, vector<16x128xf32> -> vector<16x128xf32>
    %cst_210 = arith.constant dense<0.000000e+00> : vector<128xf32>
    %312 = vector.multi_reduction <add>, %311, %cst_210 [0] : vector<16x128xf32> to vector<128xf32>
    %313 = vector.shape_cast %312 : vector<128xf32> to vector<1x128xf32>
    %cst_211 = arith.constant 1.250000e-01 : f32
    %314 = vector.broadcast %cst_211 : f32 to vector<1x128xf32>
    %315 = arith.mulf %313, %314 : vector<1x128xf32>
    %316 = arith.mulf %311, %311 : vector<16x128xf32>
    %cst_212 = arith.constant dense<0.000000e+00> : vector<128xf32>
    %317 = vector.multi_reduction <add>, %316, %cst_212 [0] : vector<16x128xf32> to vector<128xf32>
    %318 = vector.shape_cast %317 : vector<128xf32> to vector<1x128xf32>
    %cst_213 = arith.constant 1.250000e-01 : f32
    %319 = vector.broadcast %cst_213 : f32 to vector<1x128xf32>
    %320 = arith.mulf %318, %319 : vector<1x128xf32>
    %321 = arith.mulf %315, %315 : vector<1x128xf32>
    %322 = arith.subf %320, %321 : vector<1x128xf32>
    %cst_214 = arith.constant 0.000000e+00 : f32
    %323 = vector.broadcast %cst_214 : f32 to vector<1x128xf32>
    %324 = arith.maximumf %322, %323 : vector<1x128xf32>
    %cst_215 = arith.constant 9.99999974E-6 : f32
    %325 = vector.broadcast %cst_215 : f32 to vector<1x128xf32>
    %326 = arith.addf %324, %325 : vector<1x128xf32>
    %327 = math.rsqrt %326 : vector<1x128xf32>
    %328 = arith.mulf %307, %327 : vector<1x128xf32>
    %329 = arith.mulf %315, %328 : vector<1x128xf32>
    %330 = arith.subf %309, %329 : vector<1x128xf32>
    %331 = vector.broadcast %328 : vector<1x128xf32> to vector<16x128xf32>
    %332 = arith.mulf %311, %331 : vector<16x128xf32>
    %333 = vector.broadcast %330 : vector<1x128xf32> to vector<16x128xf32>
    %334 = arith.addf %332, %333 : vector<16x128xf32>
    %cst_216 = arith.constant 0.000000e+00 : f32
    %335 = vector.broadcast %cst_216 : f32 to vector<16x128xf32>
    %336 = arith.maximumf %334, %335 : vector<16x128xf32>
    %337 = arith.mulf %336, %10 : vector<16x128xf32>
    %c8_i32_217 = arith.constant 8 : i32
    %c0_i32_218 = arith.constant 0 : i32
    %c0_i32_219 = arith.constant 0 : i32
    %c0_i32_220 = arith.constant 0 : i32
    %c0_i32_221 = arith.constant 0 : i32
    %338 = tpu.memref_slice %arg2[%c8_i32_217, %c0_i32_220, %c0_i32_221] : memref<16x128x128xbf16, #tpu.memory_space<any>> -> memref<1x128x128xbf16, #tpu.memory_space<any>>
    %339 = tpu.memref_squeeze %338 : memref<1x128x128xbf16, #tpu.memory_space<any>> -> memref<128x128xbf16, #tpu.memory_space<any>>
    %c0_i32_222 = arith.constant 0 : i32
    %c0_i32_223 = arith.constant 0 : i32
    %340 = tpu.memref_slice %arg9[%c0_i32_218, %c0_i32_222, %c0_i32_223] : memref<2x128x128xbf16, #tpu.memory_space<vmem>> -> memref<1x128x128xbf16, #tpu.memory_space<vmem>>
    %341 = tpu.memref_squeeze %340 : memref<1x128x128xbf16, #tpu.memory_space<vmem>> -> memref<128x128xbf16, #tpu.memory_space<vmem>>
    %342 = tpu.memref_slice %arg10[%c0_i32_219] : memref<2x!tpu.dma_semaphore, #tpu.memory_space<semaphore_mem>> -> memref<1x!tpu.dma_semaphore, #tpu.memory_space<semaphore_mem>>
    %343 = tpu.memref_squeeze %342 : memref<1x!tpu.dma_semaphore, #tpu.memory_space<semaphore_mem>> -> memref<!tpu.dma_semaphore, #tpu.memory_space<semaphore_mem>>
    tpu.enqueue_dma source(%339 : memref<128x128xbf16, #tpu.memory_space<any>>) target(%341 : memref<128x128xbf16, #tpu.memory_space<vmem>>) target_semaphore(%343 : memref<!tpu.dma_semaphore, #tpu.memory_space<semaphore_mem>>)
    %c7_i32_224 = arith.constant 7 : i32
    %c1_i32_225 = arith.constant 1 : i32
    %c1_i32_226 = arith.constant 1 : i32
    %c0_i32_227 = arith.constant 0 : i32
    %c0_i32_228 = arith.constant 0 : i32
    %344 = tpu.memref_slice %arg2[%c7_i32_224, %c0_i32_227, %c0_i32_228] : memref<16x128x128xbf16, #tpu.memory_space<any>> -> memref<1x128x128xbf16, #tpu.memory_space<any>>
    %345 = tpu.memref_squeeze %344 : memref<1x128x128xbf16, #tpu.memory_space<any>> -> memref<128x128xbf16, #tpu.memory_space<any>>
    %c0_i32_229 = arith.constant 0 : i32
    %c0_i32_230 = arith.constant 0 : i32
    %346 = tpu.memref_slice %arg9[%c1_i32_225, %c0_i32_229, %c0_i32_230] : memref<2x128x128xbf16, #tpu.memory_space<vmem>> -> memref<1x128x128xbf16, #tpu.memory_space<vmem>>
    %347 = tpu.memref_squeeze %346 : memref<1x128x128xbf16, #tpu.memory_space<vmem>> -> memref<128x128xbf16, #tpu.memory_space<vmem>>
    %348 = tpu.memref_slice %arg10[%c1_i32_226] : memref<2x!tpu.dma_semaphore, #tpu.memory_space<semaphore_mem>> -> memref<1x!tpu.dma_semaphore, #tpu.memory_space<semaphore_mem>>
    %349 = tpu.memref_squeeze %348 : memref<1x!tpu.dma_semaphore, #tpu.memory_space<semaphore_mem>> -> memref<!tpu.dma_semaphore, #tpu.memory_space<semaphore_mem>>
    tpu.wait_dma2 semaphore(%349 : memref<!tpu.dma_semaphore, #tpu.memory_space<semaphore_mem>>) src(%345 : memref<128x128xbf16, #tpu.memory_space<any>>) dst(%347 : memref<128x128xbf16, #tpu.memory_space<vmem>>)
    %c1_231 = arith.constant 1 : index
    %c0_232 = arith.constant 0 : index
    %c0_233 = arith.constant 0 : index
    %350 = vector.load %arg9[%c1_231, %c0_232, %c0_233] : memref<2x128x128xbf16, #tpu.memory_space<vmem>>, vector<1x128x128xbf16>
    %351 = vector.shape_cast %350 : vector<1x128x128xbf16> to vector<128x128xbf16>
    %c7 = arith.constant 7 : index
    %c0_234 = arith.constant 0 : index
    %c0_235 = arith.constant 0 : index
    %352 = vector.load %arg4[%c7, %c0_234, %c0_235] : memref<16x1x128xf32, #tpu.memory_space<vmem>>, vector<1x1x128xf32>
    %353 = vector.shape_cast %352 : vector<1x1x128xf32> to vector<1x128xf32>
    %354 = arith.truncf %337 : vector<16x128xf32> to vector<16x128xbf16>
    %cst_236 = arith.constant dense<0.000000e+00> : vector<16x128xf32>
    %355 = tpu.matmul %354, %351, %cst_236 {dimension_numbers = #tpu.dot_dimension_numbers<[1], [0], [0], [1], [0, 0, 1, 1], [], []>} : vector<16x128xbf16>, vector<128x128xbf16>, vector<16x128xf32> -> vector<16x128xf32>
    %356 = vector.broadcast %353 : vector<1x128xf32> to vector<16x128xf32>
    %357 = arith.addf %355, %356 : vector<16x128xf32>
    %c0_237 = arith.constant 0 : index
    %c0_238 = arith.constant 0 : index
    %358 = vector.load %arg6[%c0_237, %c0_238] : memref<16x128xf32, #tpu.memory_space<vmem>>, vector<16x128xf32>
    tpu.vector_store %arg6[%c0_237, %c0_238], %357 {strides = array<i32>} : memref<16x128xf32, #tpu.memory_space<vmem>>, vector<16x128xf32>,
    %c9_i32 = arith.constant 9 : i32
    %c1_i32_239 = arith.constant 1 : i32
    %c1_i32_240 = arith.constant 1 : i32
    %c0_i32_241 = arith.constant 0 : i32
    %c0_i32_242 = arith.constant 0 : i32
    %359 = tpu.memref_slice %arg2[%c9_i32, %c0_i32_241, %c0_i32_242] : memref<16x128x128xbf16, #tpu.memory_space<any>> -> memref<1x128x128xbf16, #tpu.memory_space<any>>
    %360 = tpu.memref_squeeze %359 : memref<1x128x128xbf16, #tpu.memory_space<any>> -> memref<128x128xbf16, #tpu.memory_space<any>>
    %c0_i32_243 = arith.constant 0 : i32
    %c0_i32_244 = arith.constant 0 : i32
    %361 = tpu.memref_slice %arg9[%c1_i32_239, %c0_i32_243, %c0_i32_244] : memref<2x128x128xbf16, #tpu.memory_space<vmem>> -> memref<1x128x128xbf16, #tpu.memory_space<vmem>>
    %362 = tpu.memref_squeeze %361 : memref<1x128x128xbf16, #tpu.memory_space<vmem>> -> memref<128x128xbf16, #tpu.memory_space<vmem>>
    %363 = tpu.memref_slice %arg10[%c1_i32_240] : memref<2x!tpu.dma_semaphore, #tpu.memory_space<semaphore_mem>> -> memref<1x!tpu.dma_semaphore, #tpu.memory_space<semaphore_mem>>
    %364 = tpu.memref_squeeze %363 : memref<1x!tpu.dma_semaphore, #tpu.memory_space<semaphore_mem>> -> memref<!tpu.dma_semaphore, #tpu.memory_space<semaphore_mem>>
    tpu.enqueue_dma source(%360 : memref<128x128xbf16, #tpu.memory_space<any>>) target(%362 : memref<128x128xbf16, #tpu.memory_space<vmem>>) target_semaphore(%364 : memref<!tpu.dma_semaphore, #tpu.memory_space<semaphore_mem>>)
    %c8_i32_245 = arith.constant 8 : i32
    %c0_i32_246 = arith.constant 0 : i32
    %c0_i32_247 = arith.constant 0 : i32
    %c0_i32_248 = arith.constant 0 : i32
    %c0_i32_249 = arith.constant 0 : i32
    %365 = tpu.memref_slice %arg2[%c8_i32_245, %c0_i32_248, %c0_i32_249] : memref<16x128x128xbf16, #tpu.memory_space<any>> -> memref<1x128x128xbf16, #tpu.memory_space<any>>
    %366 = tpu.memref_squeeze %365 : memref<1x128x128xbf16, #tpu.memory_space<any>> -> memref<128x128xbf16, #tpu.memory_space<any>>
    %c0_i32_250 = arith.constant 0 : i32
    %c0_i32_251 = arith.constant 0 : i32
    %367 = tpu.memref_slice %arg9[%c0_i32_246, %c0_i32_250, %c0_i32_251] : memref<2x128x128xbf16, #tpu.memory_space<vmem>> -> memref<1x128x128xbf16, #tpu.memory_space<vmem>>
    %368 = tpu.memref_squeeze %367 : memref<1x128x128xbf16, #tpu.memory_space<vmem>> -> memref<128x128xbf16, #tpu.memory_space<vmem>>
    %369 = tpu.memref_slice %arg10[%c0_i32_247] : memref<2x!tpu.dma_semaphore, #tpu.memory_space<semaphore_mem>> -> memref<1x!tpu.dma_semaphore, #tpu.memory_space<semaphore_mem>>
    %370 = tpu.memref_squeeze %369 : memref<1x!tpu.dma_semaphore, #tpu.memory_space<semaphore_mem>> -> memref<!tpu.dma_semaphore, #tpu.memory_space<semaphore_mem>>
    tpu.wait_dma2 semaphore(%370 : memref<!tpu.dma_semaphore, #tpu.memory_space<semaphore_mem>>) src(%366 : memref<128x128xbf16, #tpu.memory_space<any>>) dst(%368 : memref<128x128xbf16, #tpu.memory_space<vmem>>)
    %c0_252 = arith.constant 0 : index
    %c0_253 = arith.constant 0 : index
    %c0_254 = arith.constant 0 : index
    %371 = vector.load %arg9[%c0_252, %c0_253, %c0_254] : memref<2x128x128xbf16, #tpu.memory_space<vmem>>, vector<1x128x128xbf16>
    %372 = vector.shape_cast %371 : vector<1x128x128xbf16> to vector<128x128xbf16>
    %c8 = arith.constant 8 : index
    %c0_255 = arith.constant 0 : index
    %c0_256 = arith.constant 0 : index
    %373 = vector.load %arg4[%c8, %c0_255, %c0_256] : memref<16x1x128xf32, #tpu.memory_space<vmem>>, vector<1x1x128xf32>
    %374 = vector.shape_cast %373 : vector<1x1x128xf32> to vector<1x128xf32>
    %375 = arith.truncf %337 : vector<16x128xf32> to vector<16x128xbf16>
    %cst_257 = arith.constant dense<0.000000e+00> : vector<16x128xf32>
    %376 = tpu.matmul %375, %372, %cst_257 {dimension_numbers = #tpu.dot_dimension_numbers<[1], [0], [0], [1], [0, 0, 1, 1], [], []>} : vector<16x128xbf16>, vector<128x128xbf16>, vector<16x128xf32> -> vector<16x128xf32>
    %377 = vector.broadcast %374 : vector<1x128xf32> to vector<16x128xf32>
    %378 = arith.addf %376, %377 : vector<16x128xf32>
    %c0_258 = arith.constant 0 : index
    %c0_259 = arith.constant 0 : index
    %379 = vector.load %arg7[%c0_258, %c0_259] : memref<16x128xf32, #tpu.memory_space<vmem>>, vector<16x128xf32>
    tpu.vector_store %arg7[%c0_258, %c0_259], %378 {strides = array<i32>} : memref<16x128xf32, #tpu.memory_space<vmem>>, vector<16x128xf32>,
    %cst_260 = arith.constant 0.000000e+00 : f32
    %380 = vector.broadcast %cst_260 : f32 to vector<16x128xf32>
    %c0_261 = arith.constant 0 : index
    %c0_262 = arith.constant 0 : index
    %381 = vector.load %arg8[%c0_261, %c0_262] : memref<16x128xf32, #tpu.memory_space<vmem>>, vector<16x128xf32>
    tpu.vector_store %arg8[%c0_261, %c0_262], %380 {strides = array<i32>} : memref<16x128xf32, #tpu.memory_space<vmem>>, vector<16x128xf32>,
    %c0_263 = arith.constant 0 : index
    %c0_264 = arith.constant 0 : index
    %382 = vector.load %arg1[%c0_263, %c0_264] : memref<8x32xf32, #tpu.memory_space<vmem>>, vector<8x32xf32>
    %c0_265 = arith.constant 0 : index
    %c0_266 = arith.constant 0 : index
    %383 = vector.load %arg8[%c0_265, %c0_266] : memref<16x128xf32, #tpu.memory_space<vmem>>, vector<8x32xf32>
    tpu.vector_store %arg8[%c0_265, %c0_266], %382 {strides = array<i32>} : memref<16x128xf32, #tpu.memory_space<vmem>>, vector<8x32xf32>,
    %c0_267 = arith.constant 0 : index
    %c0_268 = arith.constant 0 : index
    %384 = vector.load %arg8[%c0_267, %c0_268] : memref<16x128xf32, #tpu.memory_space<vmem>>, vector<16x128xf32>
    %cst_269 = arith.constant 5.000000e-01 : f32
    %385 = vector.broadcast %cst_269 : f32 to vector<16x128xf32>
    %386 = arith.mulf %385, %378 : vector<16x128xf32>
    %387 = math.exp %386 : vector<16x128xf32>
    %388 = arith.mulf %384, %387 : vector<16x128xf32>
    %389 = arith.addf %357, %388 : vector<16x128xf32>
    %390 = arith.mulf %389, %10 : vector<16x128xf32>
    %c10_i32 = arith.constant 10 : i32
    %c0_i32_270 = arith.constant 0 : i32
    %c0_i32_271 = arith.constant 0 : i32
    %c0_i32_272 = arith.constant 0 : i32
    %c0_i32_273 = arith.constant 0 : i32
    %391 = tpu.memref_slice %arg2[%c10_i32, %c0_i32_272, %c0_i32_273] : memref<16x128x128xbf16, #tpu.memory_space<any>> -> memref<1x128x128xbf16, #tpu.memory_space<any>>
    %392 = tpu.memref_squeeze %391 : memref<1x128x128xbf16, #tpu.memory_space<any>> -> memref<128x128xbf16, #tpu.memory_space<any>>
    %c0_i32_274 = arith.constant 0 : i32
    %c0_i32_275 = arith.constant 0 : i32
    %393 = tpu.memref_slice %arg9[%c0_i32_270, %c0_i32_274, %c0_i32_275] : memref<2x128x128xbf16, #tpu.memory_space<vmem>> -> memref<1x128x128xbf16, #tpu.memory_space<vmem>>
    %394 = tpu.memref_squeeze %393 : memref<1x128x128xbf16, #tpu.memory_space<vmem>> -> memref<128x128xbf16, #tpu.memory_space<vmem>>
    %395 = tpu.memref_slice %arg10[%c0_i32_271] : memref<2x!tpu.dma_semaphore, #tpu.memory_space<semaphore_mem>> -> memref<1x!tpu.dma_semaphore, #tpu.memory_space<semaphore_mem>>
    %396 = tpu.memref_squeeze %395 : memref<1x!tpu.dma_semaphore, #tpu.memory_space<semaphore_mem>> -> memref<!tpu.dma_semaphore, #tpu.memory_space<semaphore_mem>>
    tpu.enqueue_dma source(%392 : memref<128x128xbf16, #tpu.memory_space<any>>) target(%394 : memref<128x128xbf16, #tpu.memory_space<vmem>>) target_semaphore(%396 : memref<!tpu.dma_semaphore, #tpu.memory_space<semaphore_mem>>)
    %c9_i32_276 = arith.constant 9 : i32
    %c1_i32_277 = arith.constant 1 : i32
    %c1_i32_278 = arith.constant 1 : i32
    %c0_i32_279 = arith.constant 0 : i32
    %c0_i32_280 = arith.constant 0 : i32
    %397 = tpu.memref_slice %arg2[%c9_i32_276, %c0_i32_279, %c0_i32_280] : memref<16x128x128xbf16, #tpu.memory_space<any>> -> memref<1x128x128xbf16, #tpu.memory_space<any>>
    %398 = tpu.memref_squeeze %397 : memref<1x128x128xbf16, #tpu.memory_space<any>> -> memref<128x128xbf16, #tpu.memory_space<any>>
    %c0_i32_281 = arith.constant 0 : i32
    %c0_i32_282 = arith.constant 0 : i32
    %399 = tpu.memref_slice %arg9[%c1_i32_277, %c0_i32_281, %c0_i32_282] : memref<2x128x128xbf16, #tpu.memory_space<vmem>> -> memref<1x128x128xbf16, #tpu.memory_space<vmem>>
    %400 = tpu.memref_squeeze %399 : memref<1x128x128xbf16, #tpu.memory_space<vmem>> -> memref<128x128xbf16, #tpu.memory_space<vmem>>
    %401 = tpu.memref_slice %arg10[%c1_i32_278] : memref<2x!tpu.dma_semaphore, #tpu.memory_space<semaphore_mem>> -> memref<1x!tpu.dma_semaphore, #tpu.memory_space<semaphore_mem>>
    %402 = tpu.memref_squeeze %401 : memref<1x!tpu.dma_semaphore, #tpu.memory_space<semaphore_mem>> -> memref<!tpu.dma_semaphore, #tpu.memory_space<semaphore_mem>>
    tpu.wait_dma2 semaphore(%402 : memref<!tpu.dma_semaphore, #tpu.memory_space<semaphore_mem>>) src(%398 : memref<128x128xbf16, #tpu.memory_space<any>>) dst(%400 : memref<128x128xbf16, #tpu.memory_space<vmem>>)
    %c1_283 = arith.constant 1 : index
    %c0_284 = arith.constant 0 : index
    %c0_285 = arith.constant 0 : index
    %403 = vector.load %arg9[%c1_283, %c0_284, %c0_285] : memref<2x128x128xbf16, #tpu.memory_space<vmem>>, vector<1x128x128xbf16>
    %404 = vector.shape_cast %403 : vector<1x128x128xbf16> to vector<128x128xbf16>
    %c9 = arith.constant 9 : index
    %c0_286 = arith.constant 0 : index
    %c0_287 = arith.constant 0 : index
    %405 = vector.load %arg3[%c9, %c0_286, %c0_287] : memref<16x1x128xf32, #tpu.memory_space<vmem>>, vector<1x1x128xf32>
    %406 = vector.shape_cast %405 : vector<1x1x128xf32> to vector<1x128xf32>
    %c9_288 = arith.constant 9 : index
    %c0_289 = arith.constant 0 : index
    %c0_290 = arith.constant 0 : index
    %407 = vector.load %arg4[%c9_288, %c0_289, %c0_290] : memref<16x1x128xf32, #tpu.memory_space<vmem>>, vector<1x1x128xf32>
    %408 = vector.shape_cast %407 : vector<1x1x128xf32> to vector<1x128xf32>
    %409 = arith.truncf %390 : vector<16x128xf32> to vector<16x128xbf16>
    %cst_291 = arith.constant dense<0.000000e+00> : vector<16x128xf32>
    %410 = tpu.matmul %409, %404, %cst_291 {dimension_numbers = #tpu.dot_dimension_numbers<[1], [0], [0], [1], [0, 0, 1, 1], [], []>} : vector<16x128xbf16>, vector<128x128xbf16>, vector<16x128xf32> -> vector<16x128xf32>
    %cst_292 = arith.constant dense<0.000000e+00> : vector<128xf32>
    %411 = vector.multi_reduction <add>, %410, %cst_292 [0] : vector<16x128xf32> to vector<128xf32>
    %412 = vector.shape_cast %411 : vector<128xf32> to vector<1x128xf32>
    %cst_293 = arith.constant 1.250000e-01 : f32
    %413 = vector.broadcast %cst_293 : f32 to vector<1x128xf32>
    %414 = arith.mulf %412, %413 : vector<1x128xf32>
    %415 = arith.mulf %410, %410 : vector<16x128xf32>
    %cst_294 = arith.constant dense<0.000000e+00> : vector<128xf32>
    %416 = vector.multi_reduction <add>, %415, %cst_294 [0] : vector<16x128xf32> to vector<128xf32>
    %417 = vector.shape_cast %416 : vector<128xf32> to vector<1x128xf32>
    %cst_295 = arith.constant 1.250000e-01 : f32
    %418 = vector.broadcast %cst_295 : f32 to vector<1x128xf32>
    %419 = arith.mulf %417, %418 : vector<1x128xf32>
    %420 = arith.mulf %414, %414 : vector<1x128xf32>
    %421 = arith.subf %419, %420 : vector<1x128xf32>
    %cst_296 = arith.constant 0.000000e+00 : f32
    %422 = vector.broadcast %cst_296 : f32 to vector<1x128xf32>
    %423 = arith.maximumf %421, %422 : vector<1x128xf32>
    %cst_297 = arith.constant 9.99999974E-6 : f32
    %424 = vector.broadcast %cst_297 : f32 to vector<1x128xf32>
    %425 = arith.addf %423, %424 : vector<1x128xf32>
    %426 = math.rsqrt %425 : vector<1x128xf32>
    %427 = arith.mulf %406, %426 : vector<1x128xf32>
    %428 = arith.mulf %414, %427 : vector<1x128xf32>
    %429 = arith.subf %408, %428 : vector<1x128xf32>
    %430 = vector.broadcast %427 : vector<1x128xf32> to vector<16x128xf32>
    %431 = arith.mulf %410, %430 : vector<16x128xf32>
    %432 = vector.broadcast %429 : vector<1x128xf32> to vector<16x128xf32>
    %433 = arith.addf %431, %432 : vector<16x128xf32>
    %cst_298 = arith.constant 0.000000e+00 : f32
    %434 = vector.broadcast %cst_298 : f32 to vector<16x128xf32>
    %435 = arith.maximumf %433, %434 : vector<16x128xf32>
    %436 = arith.mulf %435, %10 : vector<16x128xf32>
    %c11_i32 = arith.constant 11 : i32
    %c1_i32_299 = arith.constant 1 : i32
    %c1_i32_300 = arith.constant 1 : i32
    %c0_i32_301 = arith.constant 0 : i32
    %c0_i32_302 = arith.constant 0 : i32
    %437 = tpu.memref_slice %arg2[%c11_i32, %c0_i32_301, %c0_i32_302] : memref<16x128x128xbf16, #tpu.memory_space<any>> -> memref<1x128x128xbf16, #tpu.memory_space<any>>
    %438 = tpu.memref_squeeze %437 : memref<1x128x128xbf16, #tpu.memory_space<any>> -> memref<128x128xbf16, #tpu.memory_space<any>>
    %c0_i32_303 = arith.constant 0 : i32
    %c0_i32_304 = arith.constant 0 : i32
    %439 = tpu.memref_slice %arg9[%c1_i32_299, %c0_i32_303, %c0_i32_304] : memref<2x128x128xbf16, #tpu.memory_space<vmem>> -> memref<1x128x128xbf16, #tpu.memory_space<vmem>>
    %440 = tpu.memref_squeeze %439 : memref<1x128x128xbf16, #tpu.memory_space<vmem>> -> memref<128x128xbf16, #tpu.memory_space<vmem>>
    %441 = tpu.memref_slice %arg10[%c1_i32_300] : memref<2x!tpu.dma_semaphore, #tpu.memory_space<semaphore_mem>> -> memref<1x!tpu.dma_semaphore, #tpu.memory_space<semaphore_mem>>
    %442 = tpu.memref_squeeze %441 : memref<1x!tpu.dma_semaphore, #tpu.memory_space<semaphore_mem>> -> memref<!tpu.dma_semaphore, #tpu.memory_space<semaphore_mem>>
    tpu.enqueue_dma source(%438 : memref<128x128xbf16, #tpu.memory_space<any>>) target(%440 : memref<128x128xbf16, #tpu.memory_space<vmem>>) target_semaphore(%442 : memref<!tpu.dma_semaphore, #tpu.memory_space<semaphore_mem>>)
    %c10_i32_305 = arith.constant 10 : i32
    %c0_i32_306 = arith.constant 0 : i32
    %c0_i32_307 = arith.constant 0 : i32
    %c0_i32_308 = arith.constant 0 : i32
    %c0_i32_309 = arith.constant 0 : i32
    %443 = tpu.memref_slice %arg2[%c10_i32_305, %c0_i32_308, %c0_i32_309] : memref<16x128x128xbf16, #tpu.memory_space<any>> -> memref<1x128x128xbf16, #tpu.memory_space<any>>
    %444 = tpu.memref_squeeze %443 : memref<1x128x128xbf16, #tpu.memory_space<any>> -> memref<128x128xbf16, #tpu.memory_space<any>>
    %c0_i32_310 = arith.constant 0 : i32
    %c0_i32_311 = arith.constant 0 : i32
    %445 = tpu.memref_slice %arg9[%c0_i32_306, %c0_i32_310, %c0_i32_311] : memref<2x128x128xbf16, #tpu.memory_space<vmem>> -> memref<1x128x128xbf16, #tpu.memory_space<vmem>>
    %446 = tpu.memref_squeeze %445 : memref<1x128x128xbf16, #tpu.memory_space<vmem>> -> memref<128x128xbf16, #tpu.memory_space<vmem>>
    %447 = tpu.memref_slice %arg10[%c0_i32_307] : memref<2x!tpu.dma_semaphore, #tpu.memory_space<semaphore_mem>> -> memref<1x!tpu.dma_semaphore, #tpu.memory_space<semaphore_mem>>
    %448 = tpu.memref_squeeze %447 : memref<1x!tpu.dma_semaphore, #tpu.memory_space<semaphore_mem>> -> memref<!tpu.dma_semaphore, #tpu.memory_space<semaphore_mem>>
    tpu.wait_dma2 semaphore(%448 : memref<!tpu.dma_semaphore, #tpu.memory_space<semaphore_mem>>) src(%444 : memref<128x128xbf16, #tpu.memory_space<any>>) dst(%446 : memref<128x128xbf16, #tpu.memory_space<vmem>>)
    %c0_312 = arith.constant 0 : index
    %c0_313 = arith.constant 0 : index
    %c0_314 = arith.constant 0 : index
    %449 = vector.load %arg9[%c0_312, %c0_313, %c0_314] : memref<2x128x128xbf16, #tpu.memory_space<vmem>>, vector<1x128x128xbf16>
    %450 = vector.shape_cast %449 : vector<1x128x128xbf16> to vector<128x128xbf16>
    %c10 = arith.constant 10 : index
    %c0_315 = arith.constant 0 : index
    %c0_316 = arith.constant 0 : index
    %451 = vector.load %arg3[%c10, %c0_315, %c0_316] : memref<16x1x128xf32, #tpu.memory_space<vmem>>, vector<1x1x128xf32>
    %452 = vector.shape_cast %451 : vector<1x1x128xf32> to vector<1x128xf32>
    %c10_317 = arith.constant 10 : index
    %c0_318 = arith.constant 0 : index
    %c0_319 = arith.constant 0 : index
    %453 = vector.load %arg4[%c10_317, %c0_318, %c0_319] : memref<16x1x128xf32, #tpu.memory_space<vmem>>, vector<1x1x128xf32>
    %454 = vector.shape_cast %453 : vector<1x1x128xf32> to vector<1x128xf32>
    %455 = arith.truncf %436 : vector<16x128xf32> to vector<16x128xbf16>
    %cst_320 = arith.constant dense<0.000000e+00> : vector<16x128xf32>
    %456 = tpu.matmul %455, %450, %cst_320 {dimension_numbers = #tpu.dot_dimension_numbers<[1], [0], [0], [1], [0, 0, 1, 1], [], []>} : vector<16x128xbf16>, vector<128x128xbf16>, vector<16x128xf32> -> vector<16x128xf32>
    %cst_321 = arith.constant dense<0.000000e+00> : vector<128xf32>
    %457 = vector.multi_reduction <add>, %456, %cst_321 [0] : vector<16x128xf32> to vector<128xf32>
    %458 = vector.shape_cast %457 : vector<128xf32> to vector<1x128xf32>
    %cst_322 = arith.constant 1.250000e-01 : f32
    %459 = vector.broadcast %cst_322 : f32 to vector<1x128xf32>
    %460 = arith.mulf %458, %459 : vector<1x128xf32>
    %461 = arith.mulf %456, %456 : vector<16x128xf32>
    %cst_323 = arith.constant dense<0.000000e+00> : vector<128xf32>
    %462 = vector.multi_reduction <add>, %461, %cst_323 [0] : vector<16x128xf32> to vector<128xf32>
    %463 = vector.shape_cast %462 : vector<128xf32> to vector<1x128xf32>
    %cst_324 = arith.constant 1.250000e-01 : f32
    %464 = vector.broadcast %cst_324 : f32 to vector<1x128xf32>
    %465 = arith.mulf %463, %464 : vector<1x128xf32>
    %466 = arith.mulf %460, %460 : vector<1x128xf32>
    %467 = arith.subf %465, %466 : vector<1x128xf32>
    %cst_325 = arith.constant 0.000000e+00 : f32
    %468 = vector.broadcast %cst_325 : f32 to vector<1x128xf32>
    %469 = arith.maximumf %467, %468 : vector<1x128xf32>
    %cst_326 = arith.constant 9.99999974E-6 : f32
    %470 = vector.broadcast %cst_326 : f32 to vector<1x128xf32>
    %471 = arith.addf %469, %470 : vector<1x128xf32>
    %472 = math.rsqrt %471 : vector<1x128xf32>
    %473 = arith.mulf %452, %472 : vector<1x128xf32>
    %474 = arith.mulf %460, %473 : vector<1x128xf32>
    %475 = arith.subf %454, %474 : vector<1x128xf32>
    %476 = vector.broadcast %473 : vector<1x128xf32> to vector<16x128xf32>
    %477 = arith.mulf %456, %476 : vector<16x128xf32>
    %478 = vector.broadcast %475 : vector<1x128xf32> to vector<16x128xf32>
    %479 = arith.addf %477, %478 : vector<16x128xf32>
    %cst_327 = arith.constant 0.000000e+00 : f32
    %480 = vector.broadcast %cst_327 : f32 to vector<16x128xf32>
    %481 = arith.maximumf %479, %480 : vector<16x128xf32>
    %482 = arith.mulf %481, %10 : vector<16x128xf32>
    %c12_i32 = arith.constant 12 : i32
    %c0_i32_328 = arith.constant 0 : i32
    %c0_i32_329 = arith.constant 0 : i32
    %c0_i32_330 = arith.constant 0 : i32
    %c0_i32_331 = arith.constant 0 : i32
    %483 = tpu.memref_slice %arg2[%c12_i32, %c0_i32_330, %c0_i32_331] : memref<16x128x128xbf16, #tpu.memory_space<any>> -> memref<1x128x128xbf16, #tpu.memory_space<any>>
    %484 = tpu.memref_squeeze %483 : memref<1x128x128xbf16, #tpu.memory_space<any>> -> memref<128x128xbf16, #tpu.memory_space<any>>
    %c0_i32_332 = arith.constant 0 : i32
    %c0_i32_333 = arith.constant 0 : i32
    %485 = tpu.memref_slice %arg9[%c0_i32_328, %c0_i32_332, %c0_i32_333] : memref<2x128x128xbf16, #tpu.memory_space<vmem>> -> memref<1x128x128xbf16, #tpu.memory_space<vmem>>
    %486 = tpu.memref_squeeze %485 : memref<1x128x128xbf16, #tpu.memory_space<vmem>> -> memref<128x128xbf16, #tpu.memory_space<vmem>>
    %487 = tpu.memref_slice %arg10[%c0_i32_329] : memref<2x!tpu.dma_semaphore, #tpu.memory_space<semaphore_mem>> -> memref<1x!tpu.dma_semaphore, #tpu.memory_space<semaphore_mem>>
    %488 = tpu.memref_squeeze %487 : memref<1x!tpu.dma_semaphore, #tpu.memory_space<semaphore_mem>> -> memref<!tpu.dma_semaphore, #tpu.memory_space<semaphore_mem>>
    tpu.enqueue_dma source(%484 : memref<128x128xbf16, #tpu.memory_space<any>>) target(%486 : memref<128x128xbf16, #tpu.memory_space<vmem>>) target_semaphore(%488 : memref<!tpu.dma_semaphore, #tpu.memory_space<semaphore_mem>>)
    %c11_i32_334 = arith.constant 11 : i32
    %c1_i32_335 = arith.constant 1 : i32
    %c1_i32_336 = arith.constant 1 : i32
    %c0_i32_337 = arith.constant 0 : i32
    %c0_i32_338 = arith.constant 0 : i32
    %489 = tpu.memref_slice %arg2[%c11_i32_334, %c0_i32_337, %c0_i32_338] : memref<16x128x128xbf16, #tpu.memory_space<any>> -> memref<1x128x128xbf16, #tpu.memory_space<any>>
    %490 = tpu.memref_squeeze %489 : memref<1x128x128xbf16, #tpu.memory_space<any>> -> memref<128x128xbf16, #tpu.memory_space<any>>
    %c0_i32_339 = arith.constant 0 : i32
    %c0_i32_340 = arith.constant 0 : i32
    %491 = tpu.memref_slice %arg9[%c1_i32_335, %c0_i32_339, %c0_i32_340] : memref<2x128x128xbf16, #tpu.memory_space<vmem>> -> memref<1x128x128xbf16, #tpu.memory_space<vmem>>
    %492 = tpu.memref_squeeze %491 : memref<1x128x128xbf16, #tpu.memory_space<vmem>> -> memref<128x128xbf16, #tpu.memory_space<vmem>>
    %493 = tpu.memref_slice %arg10[%c1_i32_336] : memref<2x!tpu.dma_semaphore, #tpu.memory_space<semaphore_mem>> -> memref<1x!tpu.dma_semaphore, #tpu.memory_space<semaphore_mem>>
    %494 = tpu.memref_squeeze %493 : memref<1x!tpu.dma_semaphore, #tpu.memory_space<semaphore_mem>> -> memref<!tpu.dma_semaphore, #tpu.memory_space<semaphore_mem>>
    tpu.wait_dma2 semaphore(%494 : memref<!tpu.dma_semaphore, #tpu.memory_space<semaphore_mem>>) src(%490 : memref<128x128xbf16, #tpu.memory_space<any>>) dst(%492 : memref<128x128xbf16, #tpu.memory_space<vmem>>)
    %c1_341 = arith.constant 1 : index
    %c0_342 = arith.constant 0 : index
    %c0_343 = arith.constant 0 : index
    %495 = vector.load %arg9[%c1_341, %c0_342, %c0_343] : memref<2x128x128xbf16, #tpu.memory_space<vmem>>, vector<1x128x128xbf16>
    %496 = vector.shape_cast %495 : vector<1x128x128xbf16> to vector<128x128xbf16>
    %c11 = arith.constant 11 : index
    %c0_344 = arith.constant 0 : index
    %c0_345 = arith.constant 0 : index
    %497 = vector.load %arg3[%c11, %c0_344, %c0_345] : memref<16x1x128xf32, #tpu.memory_space<vmem>>, vector<1x1x128xf32>
    %498 = vector.shape_cast %497 : vector<1x1x128xf32> to vector<1x128xf32>
    %c11_346 = arith.constant 11 : index
    %c0_347 = arith.constant 0 : index
    %c0_348 = arith.constant 0 : index
    %499 = vector.load %arg4[%c11_346, %c0_347, %c0_348] : memref<16x1x128xf32, #tpu.memory_space<vmem>>, vector<1x1x128xf32>
    %500 = vector.shape_cast %499 : vector<1x1x128xf32> to vector<1x128xf32>
    %501 = arith.truncf %482 : vector<16x128xf32> to vector<16x128xbf16>
    %cst_349 = arith.constant dense<0.000000e+00> : vector<16x128xf32>
    %502 = tpu.matmul %501, %496, %cst_349 {dimension_numbers = #tpu.dot_dimension_numbers<[1], [0], [0], [1], [0, 0, 1, 1], [], []>} : vector<16x128xbf16>, vector<128x128xbf16>, vector<16x128xf32> -> vector<16x128xf32>
    %cst_350 = arith.constant dense<0.000000e+00> : vector<128xf32>
    %503 = vector.multi_reduction <add>, %502, %cst_350 [0] : vector<16x128xf32> to vector<128xf32>
    %504 = vector.shape_cast %503 : vector<128xf32> to vector<1x128xf32>
    %cst_351 = arith.constant 1.250000e-01 : f32
    %505 = vector.broadcast %cst_351 : f32 to vector<1x128xf32>
    %506 = arith.mulf %504, %505 : vector<1x128xf32>
    %507 = arith.mulf %502, %502 : vector<16x128xf32>
    %cst_352 = arith.constant dense<0.000000e+00> : vector<128xf32>
    %508 = vector.multi_reduction <add>, %507, %cst_352 [0] : vector<16x128xf32> to vector<128xf32>
    %509 = vector.shape_cast %508 : vector<128xf32> to vector<1x128xf32>
    %cst_353 = arith.constant 1.250000e-01 : f32
    %510 = vector.broadcast %cst_353 : f32 to vector<1x128xf32>
    %511 = arith.mulf %509, %510 : vector<1x128xf32>
    %512 = arith.mulf %506, %506 : vector<1x128xf32>
    %513 = arith.subf %511, %512 : vector<1x128xf32>
    %cst_354 = arith.constant 0.000000e+00 : f32
    %514 = vector.broadcast %cst_354 : f32 to vector<1x128xf32>
    %515 = arith.maximumf %513, %514 : vector<1x128xf32>
    %cst_355 = arith.constant 9.99999974E-6 : f32
    %516 = vector.broadcast %cst_355 : f32 to vector<1x128xf32>
    %517 = arith.addf %515, %516 : vector<1x128xf32>
    %518 = math.rsqrt %517 : vector<1x128xf32>
    %519 = arith.mulf %498, %518 : vector<1x128xf32>
    %520 = arith.mulf %506, %519 : vector<1x128xf32>
    %521 = arith.subf %500, %520 : vector<1x128xf32>
    %522 = vector.broadcast %519 : vector<1x128xf32> to vector<16x128xf32>
    %523 = arith.mulf %502, %522 : vector<16x128xf32>
    %524 = vector.broadcast %521 : vector<1x128xf32> to vector<16x128xf32>
    %525 = arith.addf %523, %524 : vector<16x128xf32>
    %cst_356 = arith.constant 0.000000e+00 : f32
    %526 = vector.broadcast %cst_356 : f32 to vector<16x128xf32>
    %527 = arith.maximumf %525, %526 : vector<16x128xf32>
    %528 = arith.mulf %527, %10 : vector<16x128xf32>
    %c13_i32 = arith.constant 13 : i32
    %c1_i32_357 = arith.constant 1 : i32
    %c1_i32_358 = arith.constant 1 : i32
    %c0_i32_359 = arith.constant 0 : i32
    %c0_i32_360 = arith.constant 0 : i32
    %529 = tpu.memref_slice %arg2[%c13_i32, %c0_i32_359, %c0_i32_360] : memref<16x128x128xbf16, #tpu.memory_space<any>> -> memref<1x128x128xbf16, #tpu.memory_space<any>>
    %530 = tpu.memref_squeeze %529 : memref<1x128x128xbf16, #tpu.memory_space<any>> -> memref<128x128xbf16, #tpu.memory_space<any>>
    %c0_i32_361 = arith.constant 0 : i32
    %c0_i32_362 = arith.constant 0 : i32
    %531 = tpu.memref_slice %arg9[%c1_i32_357, %c0_i32_361, %c0_i32_362] : memref<2x128x128xbf16, #tpu.memory_space<vmem>> -> memref<1x128x128xbf16, #tpu.memory_space<vmem>>
    %532 = tpu.memref_squeeze %531 : memref<1x128x128xbf16, #tpu.memory_space<vmem>> -> memref<128x128xbf16, #tpu.memory_space<vmem>>
    %533 = tpu.memref_slice %arg10[%c1_i32_358] : memref<2x!tpu.dma_semaphore, #tpu.memory_space<semaphore_mem>> -> memref<1x!tpu.dma_semaphore, #tpu.memory_space<semaphore_mem>>
    %534 = tpu.memref_squeeze %533 : memref<1x!tpu.dma_semaphore, #tpu.memory_space<semaphore_mem>> -> memref<!tpu.dma_semaphore, #tpu.memory_space<semaphore_mem>>
    tpu.enqueue_dma source(%530 : memref<128x128xbf16, #tpu.memory_space<any>>) target(%532 : memref<128x128xbf16, #tpu.memory_space<vmem>>) target_semaphore(%534 : memref<!tpu.dma_semaphore, #tpu.memory_space<semaphore_mem>>)
    %c12_i32_363 = arith.constant 12 : i32
    %c0_i32_364 = arith.constant 0 : i32
    %c0_i32_365 = arith.constant 0 : i32
    %c0_i32_366 = arith.constant 0 : i32
    %c0_i32_367 = arith.constant 0 : i32
    %535 = tpu.memref_slice %arg2[%c12_i32_363, %c0_i32_366, %c0_i32_367] : memref<16x128x128xbf16, #tpu.memory_space<any>> -> memref<1x128x128xbf16, #tpu.memory_space<any>>
    %536 = tpu.memref_squeeze %535 : memref<1x128x128xbf16, #tpu.memory_space<any>> -> memref<128x128xbf16, #tpu.memory_space<any>>
    %c0_i32_368 = arith.constant 0 : i32
    %c0_i32_369 = arith.constant 0 : i32
    %537 = tpu.memref_slice %arg9[%c0_i32_364, %c0_i32_368, %c0_i32_369] : memref<2x128x128xbf16, #tpu.memory_space<vmem>> -> memref<1x128x128xbf16, #tpu.memory_space<vmem>>
    %538 = tpu.memref_squeeze %537 : memref<1x128x128xbf16, #tpu.memory_space<vmem>> -> memref<128x128xbf16, #tpu.memory_space<vmem>>
    %539 = tpu.memref_slice %arg10[%c0_i32_365] : memref<2x!tpu.dma_semaphore, #tpu.memory_space<semaphore_mem>> -> memref<1x!tpu.dma_semaphore, #tpu.memory_space<semaphore_mem>>
    %540 = tpu.memref_squeeze %539 : memref<1x!tpu.dma_semaphore, #tpu.memory_space<semaphore_mem>> -> memref<!tpu.dma_semaphore, #tpu.memory_space<semaphore_mem>>
    tpu.wait_dma2 semaphore(%540 : memref<!tpu.dma_semaphore, #tpu.memory_space<semaphore_mem>>) src(%536 : memref<128x128xbf16, #tpu.memory_space<any>>) dst(%538 : memref<128x128xbf16, #tpu.memory_space<vmem>>)
    %c0_370 = arith.constant 0 : index
    %c0_371 = arith.constant 0 : index
    %c0_372 = arith.constant 0 : index
    %541 = vector.load %arg9[%c0_370, %c0_371, %c0_372] : memref<2x128x128xbf16, #tpu.memory_space<vmem>>, vector<1x128x128xbf16>
    %542 = vector.shape_cast %541 : vector<1x128x128xbf16> to vector<128x128xbf16>
    %c12 = arith.constant 12 : index
    %c0_373 = arith.constant 0 : index
    %c0_374 = arith.constant 0 : index
    %543 = vector.load %arg3[%c12, %c0_373, %c0_374] : memref<16x1x128xf32, #tpu.memory_space<vmem>>, vector<1x1x128xf32>
    %544 = vector.shape_cast %543 : vector<1x1x128xf32> to vector<1x128xf32>
    %c12_375 = arith.constant 12 : index
    %c0_376 = arith.constant 0 : index
    %c0_377 = arith.constant 0 : index
    %545 = vector.load %arg4[%c12_375, %c0_376, %c0_377] : memref<16x1x128xf32, #tpu.memory_space<vmem>>, vector<1x1x128xf32>
    %546 = vector.shape_cast %545 : vector<1x1x128xf32> to vector<1x128xf32>
    %547 = arith.truncf %528 : vector<16x128xf32> to vector<16x128xbf16>
    %cst_378 = arith.constant dense<0.000000e+00> : vector<16x128xf32>
    %548 = tpu.matmul %547, %542, %cst_378 {dimension_numbers = #tpu.dot_dimension_numbers<[1], [0], [0], [1], [0, 0, 1, 1], [], []>} : vector<16x128xbf16>, vector<128x128xbf16>, vector<16x128xf32> -> vector<16x128xf32>
    %cst_379 = arith.constant dense<0.000000e+00> : vector<128xf32>
    %549 = vector.multi_reduction <add>, %548, %cst_379 [0] : vector<16x128xf32> to vector<128xf32>
    %550 = vector.shape_cast %549 : vector<128xf32> to vector<1x128xf32>
    %cst_380 = arith.constant 1.250000e-01 : f32
    %551 = vector.broadcast %cst_380 : f32 to vector<1x128xf32>
    %552 = arith.mulf %550, %551 : vector<1x128xf32>
    %553 = arith.mulf %548, %548 : vector<16x128xf32>
    %cst_381 = arith.constant dense<0.000000e+00> : vector<128xf32>
    %554 = vector.multi_reduction <add>, %553, %cst_381 [0] : vector<16x128xf32> to vector<128xf32>
    %555 = vector.shape_cast %554 : vector<128xf32> to vector<1x128xf32>
    %cst_382 = arith.constant 1.250000e-01 : f32
    %556 = vector.broadcast %cst_382 : f32 to vector<1x128xf32>
    %557 = arith.mulf %555, %556 : vector<1x128xf32>
    %558 = arith.mulf %552, %552 : vector<1x128xf32>
    %559 = arith.subf %557, %558 : vector<1x128xf32>
    %cst_383 = arith.constant 0.000000e+00 : f32
    %560 = vector.broadcast %cst_383 : f32 to vector<1x128xf32>
    %561 = arith.maximumf %559, %560 : vector<1x128xf32>
    %cst_384 = arith.constant 9.99999974E-6 : f32
    %562 = vector.broadcast %cst_384 : f32 to vector<1x128xf32>
    %563 = arith.addf %561, %562 : vector<1x128xf32>
    %564 = math.rsqrt %563 : vector<1x128xf32>
    %565 = arith.mulf %544, %564 : vector<1x128xf32>
    %566 = arith.mulf %552, %565 : vector<1x128xf32>
    %567 = arith.subf %546, %566 : vector<1x128xf32>
    %568 = vector.broadcast %565 : vector<1x128xf32> to vector<16x128xf32>
    %569 = arith.mulf %548, %568 : vector<16x128xf32>
    %570 = vector.broadcast %567 : vector<1x128xf32> to vector<16x128xf32>
    %571 = arith.addf %569, %570 : vector<16x128xf32>
    %cst_385 = arith.constant 0.000000e+00 : f32
    %572 = vector.broadcast %cst_385 : f32 to vector<16x128xf32>
    %573 = arith.maximumf %571, %572 : vector<16x128xf32>
    %574 = arith.mulf %573, %10 : vector<16x128xf32>
    %c14_i32 = arith.constant 14 : i32
    %c0_i32_386 = arith.constant 0 : i32
    %c0_i32_387 = arith.constant 0 : i32
    %c0_i32_388 = arith.constant 0 : i32
    %c0_i32_389 = arith.constant 0 : i32
    %575 = tpu.memref_slice %arg2[%c14_i32, %c0_i32_388, %c0_i32_389] : memref<16x128x128xbf16, #tpu.memory_space<any>> -> memref<1x128x128xbf16, #tpu.memory_space<any>>
    %576 = tpu.memref_squeeze %575 : memref<1x128x128xbf16, #tpu.memory_space<any>> -> memref<128x128xbf16, #tpu.memory_space<any>>
    %c0_i32_390 = arith.constant 0 : i32
    %c0_i32_391 = arith.constant 0 : i32
    %577 = tpu.memref_slice %arg9[%c0_i32_386, %c0_i32_390, %c0_i32_391] : memref<2x128x128xbf16, #tpu.memory_space<vmem>> -> memref<1x128x128xbf16, #tpu.memory_space<vmem>>
    %578 = tpu.memref_squeeze %577 : memref<1x128x128xbf16, #tpu.memory_space<vmem>> -> memref<128x128xbf16, #tpu.memory_space<vmem>>
    %579 = tpu.memref_slice %arg10[%c0_i32_387] : memref<2x!tpu.dma_semaphore, #tpu.memory_space<semaphore_mem>> -> memref<1x!tpu.dma_semaphore, #tpu.memory_space<semaphore_mem>>
    %580 = tpu.memref_squeeze %579 : memref<1x!tpu.dma_semaphore, #tpu.memory_space<semaphore_mem>> -> memref<!tpu.dma_semaphore, #tpu.memory_space<semaphore_mem>>
    tpu.enqueue_dma source(%576 : memref<128x128xbf16, #tpu.memory_space<any>>) target(%578 : memref<128x128xbf16, #tpu.memory_space<vmem>>) target_semaphore(%580 : memref<!tpu.dma_semaphore, #tpu.memory_space<semaphore_mem>>)
    %c13_i32_392 = arith.constant 13 : i32
    %c1_i32_393 = arith.constant 1 : i32
    %c1_i32_394 = arith.constant 1 : i32
    %c0_i32_395 = arith.constant 0 : i32
    %c0_i32_396 = arith.constant 0 : i32
    %581 = tpu.memref_slice %arg2[%c13_i32_392, %c0_i32_395, %c0_i32_396] : memref<16x128x128xbf16, #tpu.memory_space<any>> -> memref<1x128x128xbf16, #tpu.memory_space<any>>
    %582 = tpu.memref_squeeze %581 : memref<1x128x128xbf16, #tpu.memory_space<any>> -> memref<128x128xbf16, #tpu.memory_space<any>>
    %c0_i32_397 = arith.constant 0 : i32
    %c0_i32_398 = arith.constant 0 : i32
    %583 = tpu.memref_slice %arg9[%c1_i32_393, %c0_i32_397, %c0_i32_398] : memref<2x128x128xbf16, #tpu.memory_space<vmem>> -> memref<1x128x128xbf16, #tpu.memory_space<vmem>>
    %584 = tpu.memref_squeeze %583 : memref<1x128x128xbf16, #tpu.memory_space<vmem>> -> memref<128x128xbf16, #tpu.memory_space<vmem>>
    %585 = tpu.memref_slice %arg10[%c1_i32_394] : memref<2x!tpu.dma_semaphore, #tpu.memory_space<semaphore_mem>> -> memref<1x!tpu.dma_semaphore, #tpu.memory_space<semaphore_mem>>
    %586 = tpu.memref_squeeze %585 : memref<1x!tpu.dma_semaphore, #tpu.memory_space<semaphore_mem>> -> memref<!tpu.dma_semaphore, #tpu.memory_space<semaphore_mem>>
    tpu.wait_dma2 semaphore(%586 : memref<!tpu.dma_semaphore, #tpu.memory_space<semaphore_mem>>) src(%582 : memref<128x128xbf16, #tpu.memory_space<any>>) dst(%584 : memref<128x128xbf16, #tpu.memory_space<vmem>>)
    %c1_399 = arith.constant 1 : index
    %c0_400 = arith.constant 0 : index
    %c0_401 = arith.constant 0 : index
    %587 = vector.load %arg9[%c1_399, %c0_400, %c0_401] : memref<2x128x128xbf16, #tpu.memory_space<vmem>>, vector<1x128x128xbf16>
    %588 = vector.shape_cast %587 : vector<1x128x128xbf16> to vector<128x128xbf16>
    %c13 = arith.constant 13 : index
    %c0_402 = arith.constant 0 : index
    %c0_403 = arith.constant 0 : index
    %589 = vector.load %arg3[%c13, %c0_402, %c0_403] : memref<16x1x128xf32, #tpu.memory_space<vmem>>, vector<1x1x128xf32>
    %590 = vector.shape_cast %589 : vector<1x1x128xf32> to vector<1x128xf32>
    %c13_404 = arith.constant 13 : index
    %c0_405 = arith.constant 0 : index
    %c0_406 = arith.constant 0 : index
    %591 = vector.load %arg4[%c13_404, %c0_405, %c0_406] : memref<16x1x128xf32, #tpu.memory_space<vmem>>, vector<1x1x128xf32>
    %592 = vector.shape_cast %591 : vector<1x1x128xf32> to vector<1x128xf32>
    %593 = arith.truncf %574 : vector<16x128xf32> to vector<16x128xbf16>
    %cst_407 = arith.constant dense<0.000000e+00> : vector<16x128xf32>
    %594 = tpu.matmul %593, %588, %cst_407 {dimension_numbers = #tpu.dot_dimension_numbers<[1], [0], [0], [1], [0, 0, 1, 1], [], []>} : vector<16x128xbf16>, vector<128x128xbf16>, vector<16x128xf32> -> vector<16x128xf32>
    %cst_408 = arith.constant dense<0.000000e+00> : vector<128xf32>
    %595 = vector.multi_reduction <add>, %594, %cst_408 [0] : vector<16x128xf32> to vector<128xf32>
    %596 = vector.shape_cast %595 : vector<128xf32> to vector<1x128xf32>
    %cst_409 = arith.constant 1.250000e-01 : f32
    %597 = vector.broadcast %cst_409 : f32 to vector<1x128xf32>
    %598 = arith.mulf %596, %597 : vector<1x128xf32>
    %599 = arith.mulf %594, %594 : vector<16x128xf32>
    %cst_410 = arith.constant dense<0.000000e+00> : vector<128xf32>
    %600 = vector.multi_reduction <add>, %599, %cst_410 [0] : vector<16x128xf32> to vector<128xf32>
    %601 = vector.shape_cast %600 : vector<128xf32> to vector<1x128xf32>
    %cst_411 = arith.constant 1.250000e-01 : f32
    %602 = vector.broadcast %cst_411 : f32 to vector<1x128xf32>
    %603 = arith.mulf %601, %602 : vector<1x128xf32>
    %604 = arith.mulf %598, %598 : vector<1x128xf32>
    %605 = arith.subf %603, %604 : vector<1x128xf32>
    %cst_412 = arith.constant 0.000000e+00 : f32
    %606 = vector.broadcast %cst_412 : f32 to vector<1x128xf32>
    %607 = arith.maximumf %605, %606 : vector<1x128xf32>
    %cst_413 = arith.constant 9.99999974E-6 : f32
    %608 = vector.broadcast %cst_413 : f32 to vector<1x128xf32>
    %609 = arith.addf %607, %608 : vector<1x128xf32>
    %610 = math.rsqrt %609 : vector<1x128xf32>
    %611 = arith.mulf %590, %610 : vector<1x128xf32>
    %612 = arith.mulf %598, %611 : vector<1x128xf32>
    %613 = arith.subf %592, %612 : vector<1x128xf32>
    %614 = vector.broadcast %611 : vector<1x128xf32> to vector<16x128xf32>
    %615 = arith.mulf %594, %614 : vector<16x128xf32>
    %616 = vector.broadcast %613 : vector<1x128xf32> to vector<16x128xf32>
    %617 = arith.addf %615, %616 : vector<16x128xf32>
    %cst_414 = arith.constant 0.000000e+00 : f32
    %618 = vector.broadcast %cst_414 : f32 to vector<16x128xf32>
    %619 = arith.maximumf %617, %618 : vector<16x128xf32>
    %620 = arith.mulf %619, %10 : vector<16x128xf32>
    %c15_i32 = arith.constant 15 : i32
    %c1_i32_415 = arith.constant 1 : i32
    %c1_i32_416 = arith.constant 1 : i32
    %c0_i32_417 = arith.constant 0 : i32
    %c0_i32_418 = arith.constant 0 : i32
    %621 = tpu.memref_slice %arg2[%c15_i32, %c0_i32_417, %c0_i32_418] : memref<16x128x128xbf16, #tpu.memory_space<any>> -> memref<1x128x128xbf16, #tpu.memory_space<any>>
    %622 = tpu.memref_squeeze %621 : memref<1x128x128xbf16, #tpu.memory_space<any>> -> memref<128x128xbf16, #tpu.memory_space<any>>
    %c0_i32_419 = arith.constant 0 : i32
    %c0_i32_420 = arith.constant 0 : i32
    %623 = tpu.memref_slice %arg9[%c1_i32_415, %c0_i32_419, %c0_i32_420] : memref<2x128x128xbf16, #tpu.memory_space<vmem>> -> memref<1x128x128xbf16, #tpu.memory_space<vmem>>
    %624 = tpu.memref_squeeze %623 : memref<1x128x128xbf16, #tpu.memory_space<vmem>> -> memref<128x128xbf16, #tpu.memory_space<vmem>>
    %625 = tpu.memref_slice %arg10[%c1_i32_416] : memref<2x!tpu.dma_semaphore, #tpu.memory_space<semaphore_mem>> -> memref<1x!tpu.dma_semaphore, #tpu.memory_space<semaphore_mem>>
    %626 = tpu.memref_squeeze %625 : memref<1x!tpu.dma_semaphore, #tpu.memory_space<semaphore_mem>> -> memref<!tpu.dma_semaphore, #tpu.memory_space<semaphore_mem>>
    tpu.enqueue_dma source(%622 : memref<128x128xbf16, #tpu.memory_space<any>>) target(%624 : memref<128x128xbf16, #tpu.memory_space<vmem>>) target_semaphore(%626 : memref<!tpu.dma_semaphore, #tpu.memory_space<semaphore_mem>>)
    %c14_i32_421 = arith.constant 14 : i32
    %c0_i32_422 = arith.constant 0 : i32
    %c0_i32_423 = arith.constant 0 : i32
    %c0_i32_424 = arith.constant 0 : i32
    %c0_i32_425 = arith.constant 0 : i32
    %627 = tpu.memref_slice %arg2[%c14_i32_421, %c0_i32_424, %c0_i32_425] : memref<16x128x128xbf16, #tpu.memory_space<any>> -> memref<1x128x128xbf16, #tpu.memory_space<any>>
    %628 = tpu.memref_squeeze %627 : memref<1x128x128xbf16, #tpu.memory_space<any>> -> memref<128x128xbf16, #tpu.memory_space<any>>
    %c0_i32_426 = arith.constant 0 : i32
    %c0_i32_427 = arith.constant 0 : i32
    %629 = tpu.memref_slice %arg9[%c0_i32_422, %c0_i32_426, %c0_i32_427] : memref<2x128x128xbf16, #tpu.memory_space<vmem>> -> memref<1x128x128xbf16, #tpu.memory_space<vmem>>
    %630 = tpu.memref_squeeze %629 : memref<1x128x128xbf16, #tpu.memory_space<vmem>> -> memref<128x128xbf16, #tpu.memory_space<vmem>>
    %631 = tpu.memref_slice %arg10[%c0_i32_423] : memref<2x!tpu.dma_semaphore, #tpu.memory_space<semaphore_mem>> -> memref<1x!tpu.dma_semaphore, #tpu.memory_space<semaphore_mem>>
    %632 = tpu.memref_squeeze %631 : memref<1x!tpu.dma_semaphore, #tpu.memory_space<semaphore_mem>> -> memref<!tpu.dma_semaphore, #tpu.memory_space<semaphore_mem>>
    tpu.wait_dma2 semaphore(%632 : memref<!tpu.dma_semaphore, #tpu.memory_space<semaphore_mem>>) src(%628 : memref<128x128xbf16, #tpu.memory_space<any>>) dst(%630 : memref<128x128xbf16, #tpu.memory_space<vmem>>)
    %c0_428 = arith.constant 0 : index
    %c0_429 = arith.constant 0 : index
    %c0_430 = arith.constant 0 : index
    %633 = vector.load %arg9[%c0_428, %c0_429, %c0_430] : memref<2x128x128xbf16, #tpu.memory_space<vmem>>, vector<1x128x128xbf16>
    %634 = vector.shape_cast %633 : vector<1x128x128xbf16> to vector<128x128xbf16>
    %c14 = arith.constant 14 : index
    %c0_431 = arith.constant 0 : index
    %c0_432 = arith.constant 0 : index
    %635 = vector.load %arg3[%c14, %c0_431, %c0_432] : memref<16x1x128xf32, #tpu.memory_space<vmem>>, vector<1x1x128xf32>
    %636 = vector.shape_cast %635 : vector<1x1x128xf32> to vector<1x128xf32>
    %c14_433 = arith.constant 14 : index
    %c0_434 = arith.constant 0 : index
    %c0_435 = arith.constant 0 : index
    %637 = vector.load %arg4[%c14_433, %c0_434, %c0_435] : memref<16x1x128xf32, #tpu.memory_space<vmem>>, vector<1x1x128xf32>
    %638 = vector.shape_cast %637 : vector<1x1x128xf32> to vector<1x128xf32>
    %639 = arith.truncf %620 : vector<16x128xf32> to vector<16x128xbf16>
    %cst_436 = arith.constant dense<0.000000e+00> : vector<16x128xf32>
    %640 = tpu.matmul %639, %634, %cst_436 {dimension_numbers = #tpu.dot_dimension_numbers<[1], [0], [0], [1], [0, 0, 1, 1], [], []>} : vector<16x128xbf16>, vector<128x128xbf16>, vector<16x128xf32> -> vector<16x128xf32>
    %cst_437 = arith.constant dense<0.000000e+00> : vector<128xf32>
    %641 = vector.multi_reduction <add>, %640, %cst_437 [0] : vector<16x128xf32> to vector<128xf32>
    %642 = vector.shape_cast %641 : vector<128xf32> to vector<1x128xf32>
    %cst_438 = arith.constant 1.250000e-01 : f32
    %643 = vector.broadcast %cst_438 : f32 to vector<1x128xf32>
    %644 = arith.mulf %642, %643 : vector<1x128xf32>
    %645 = arith.mulf %640, %640 : vector<16x128xf32>
    %cst_439 = arith.constant dense<0.000000e+00> : vector<128xf32>
    %646 = vector.multi_reduction <add>, %645, %cst_439 [0] : vector<16x128xf32> to vector<128xf32>
    %647 = vector.shape_cast %646 : vector<128xf32> to vector<1x128xf32>
    %cst_440 = arith.constant 1.250000e-01 : f32
    %648 = vector.broadcast %cst_440 : f32 to vector<1x128xf32>
    %649 = arith.mulf %647, %648 : vector<1x128xf32>
    %650 = arith.mulf %644, %644 : vector<1x128xf32>
    %651 = arith.subf %649, %650 : vector<1x128xf32>
    %cst_441 = arith.constant 0.000000e+00 : f32
    %652 = vector.broadcast %cst_441 : f32 to vector<1x128xf32>
    %653 = arith.maximumf %651, %652 : vector<1x128xf32>
    %cst_442 = arith.constant 9.99999974E-6 : f32
    %654 = vector.broadcast %cst_442 : f32 to vector<1x128xf32>
    %655 = arith.addf %653, %654 : vector<1x128xf32>
    %656 = math.rsqrt %655 : vector<1x128xf32>
    %657 = arith.mulf %636, %656 : vector<1x128xf32>
    %658 = arith.mulf %644, %657 : vector<1x128xf32>
    %659 = arith.subf %638, %658 : vector<1x128xf32>
    %660 = vector.broadcast %657 : vector<1x128xf32> to vector<16x128xf32>
    %661 = arith.mulf %640, %660 : vector<16x128xf32>
    %662 = vector.broadcast %659 : vector<1x128xf32> to vector<16x128xf32>
    %663 = arith.addf %661, %662 : vector<16x128xf32>
    %cst_443 = arith.constant 0.000000e+00 : f32
    %664 = vector.broadcast %cst_443 : f32 to vector<16x128xf32>
    %665 = arith.maximumf %663, %664 : vector<16x128xf32>
    %666 = arith.mulf %665, %10 : vector<16x128xf32>
    %c15_i32_444 = arith.constant 15 : i32
    %c1_i32_445 = arith.constant 1 : i32
    %c1_i32_446 = arith.constant 1 : i32
    %c0_i32_447 = arith.constant 0 : i32
    %c0_i32_448 = arith.constant 0 : i32
    %667 = tpu.memref_slice %arg2[%c15_i32_444, %c0_i32_447, %c0_i32_448] : memref<16x128x128xbf16, #tpu.memory_space<any>> -> memref<1x128x128xbf16, #tpu.memory_space<any>>
    %668 = tpu.memref_squeeze %667 : memref<1x128x128xbf16, #tpu.memory_space<any>> -> memref<128x128xbf16, #tpu.memory_space<any>>
    %c0_i32_449 = arith.constant 0 : i32
    %c0_i32_450 = arith.constant 0 : i32
    %669 = tpu.memref_slice %arg9[%c1_i32_445, %c0_i32_449, %c0_i32_450] : memref<2x128x128xbf16, #tpu.memory_space<vmem>> -> memref<1x128x128xbf16, #tpu.memory_space<vmem>>
    %670 = tpu.memref_squeeze %669 : memref<1x128x128xbf16, #tpu.memory_space<vmem>> -> memref<128x128xbf16, #tpu.memory_space<vmem>>
    %671 = tpu.memref_slice %arg10[%c1_i32_446] : memref<2x!tpu.dma_semaphore, #tpu.memory_space<semaphore_mem>> -> memref<1x!tpu.dma_semaphore, #tpu.memory_space<semaphore_mem>>
    %672 = tpu.memref_squeeze %671 : memref<1x!tpu.dma_semaphore, #tpu.memory_space<semaphore_mem>> -> memref<!tpu.dma_semaphore, #tpu.memory_space<semaphore_mem>>
    tpu.wait_dma2 semaphore(%672 : memref<!tpu.dma_semaphore, #tpu.memory_space<semaphore_mem>>) src(%668 : memref<128x128xbf16, #tpu.memory_space<any>>) dst(%670 : memref<128x128xbf16, #tpu.memory_space<vmem>>)
    %c1_451 = arith.constant 1 : index
    %c0_452 = arith.constant 0 : index
    %c0_453 = arith.constant 0 : index
    %673 = vector.load %arg9[%c1_451, %c0_452, %c0_453] : memref<2x128x128xbf16, #tpu.memory_space<vmem>>, vector<1x128x128xbf16>
    %674 = vector.shape_cast %673 : vector<1x128x128xbf16> to vector<128x128xbf16>
    %c15 = arith.constant 15 : index
    %c0_454 = arith.constant 0 : index
    %c0_455 = arith.constant 0 : index
    %675 = vector.load %arg3[%c15, %c0_454, %c0_455] : memref<16x1x128xf32, #tpu.memory_space<vmem>>, vector<1x1x128xf32>
    %676 = vector.shape_cast %675 : vector<1x1x128xf32> to vector<1x128xf32>
    %c15_456 = arith.constant 15 : index
    %c0_457 = arith.constant 0 : index
    %c0_458 = arith.constant 0 : index
    %677 = vector.load %arg4[%c15_456, %c0_457, %c0_458] : memref<16x1x128xf32, #tpu.memory_space<vmem>>, vector<1x1x128xf32>
    %678 = vector.shape_cast %677 : vector<1x1x128xf32> to vector<1x128xf32>
    %679 = arith.truncf %666 : vector<16x128xf32> to vector<16x128xbf16>
    %cst_459 = arith.constant dense<0.000000e+00> : vector<16x128xf32>
    %680 = tpu.matmul %679, %674, %cst_459 {dimension_numbers = #tpu.dot_dimension_numbers<[1], [0], [0], [1], [0, 0, 1, 1], [], []>} : vector<16x128xbf16>, vector<128x128xbf16>, vector<16x128xf32> -> vector<16x128xf32>
    %cst_460 = arith.constant dense<0.000000e+00> : vector<128xf32>
    %681 = vector.multi_reduction <add>, %680, %cst_460 [0] : vector<16x128xf32> to vector<128xf32>
    %682 = vector.shape_cast %681 : vector<128xf32> to vector<1x128xf32>
    %cst_461 = arith.constant 1.250000e-01 : f32
    %683 = vector.broadcast %cst_461 : f32 to vector<1x128xf32>
    %684 = arith.mulf %682, %683 : vector<1x128xf32>
    %685 = arith.mulf %680, %680 : vector<16x128xf32>
    %cst_462 = arith.constant dense<0.000000e+00> : vector<128xf32>
    %686 = vector.multi_reduction <add>, %685, %cst_462 [0] : vector<16x128xf32> to vector<128xf32>
    %687 = vector.shape_cast %686 : vector<128xf32> to vector<1x128xf32>
    %cst_463 = arith.constant 1.250000e-01 : f32
    %688 = vector.broadcast %cst_463 : f32 to vector<1x128xf32>
    %689 = arith.mulf %687, %688 : vector<1x128xf32>
    %690 = arith.mulf %684, %684 : vector<1x128xf32>
    %691 = arith.subf %689, %690 : vector<1x128xf32>
    %cst_464 = arith.constant 0.000000e+00 : f32
    %692 = vector.broadcast %cst_464 : f32 to vector<1x128xf32>
    %693 = arith.maximumf %691, %692 : vector<1x128xf32>
    %cst_465 = arith.constant 9.99999974E-6 : f32
    %694 = vector.broadcast %cst_465 : f32 to vector<1x128xf32>
    %695 = arith.addf %693, %694 : vector<1x128xf32>
    %696 = math.rsqrt %695 : vector<1x128xf32>
    %697 = arith.mulf %676, %696 : vector<1x128xf32>
    %698 = arith.mulf %684, %697 : vector<1x128xf32>
    %699 = arith.subf %678, %698 : vector<1x128xf32>
    %700 = vector.broadcast %697 : vector<1x128xf32> to vector<16x128xf32>
    %701 = arith.mulf %680, %700 : vector<16x128xf32>
    %702 = vector.broadcast %699 : vector<1x128xf32> to vector<16x128xf32>
    %703 = arith.addf %701, %702 : vector<16x128xf32>
    %cst_466 = arith.constant 0.000000e+00 : f32
    %704 = vector.broadcast %cst_466 : f32 to vector<16x128xf32>
    %705 = arith.maximumf %703, %704 : vector<16x128xf32>
    %706 = arith.negf %705 : vector<16x128xf32>
    %707 = math.exp %706 : vector<16x128xf32>
    %cst_467 = arith.constant 1.000000e+00 : f32
    %708 = vector.broadcast %cst_467 : f32 to vector<16x128xf32>
    %709 = arith.addf %708, %707 : vector<16x128xf32>
    %710 = arith.divf %708, %709 : vector<16x128xf32>
    %c0_468 = arith.constant 0 : index
    %c0_469 = arith.constant 0 : index
    %711 = vector.load %arg5[%c0_468, %c0_469] : memref<16x128xf32, #tpu.memory_space<vmem>>, vector<16x128xf32>
    tpu.vector_store %arg5[%c0_468, %c0_469], %710 {strides = array<i32>} : memref<16x128xf32, #tpu.memory_space<vmem>>, vector<16x128xf32>,
    return
  }
}

</mosaic_0001>

<llo_original>
// kernel: forward.1
$region0: #{forward.1}
  #allocation0 [shape = 'u32[]', space=smem, size = 0x4, offset = 0x4, fixed_abs, tag = 'smem constant byte address 0x4 - core index']
  #allocation1 [shape = 'u32[144,128]{1,0:T(1,128)}', space=vmem, size = 0x12000, scoped, tag = 'internal scratch']
  #allocation2 [shape = 'f32[16,128]{1,0:T(8,128)}', space=vmem, size = 0x2000, scoped, tag = 'scratch operand']
  #allocation3 [shape = 'bf16[2,128,128]{2,1,0:T(8,128)(2,1)}', space=vmem, size = 0x10000, scoped, tag = 'scratch operand']
  #allocation4 [shape = 's32[2]{0}', space=sflag, size = 0x8, scoped, tag = 'scratch operand']
  #allocation12 [shape = 's32[]', space=sflag, size = 0x4, offset = 0, fixed_abs, tag = 'sflag constant byte address 0x0 - dummy sync flag']
  #allocation13 [shape = 's32[]', space=sflag, size = 0x4, offset = 0, fixed_abs, tag = 'sflag constant byte address 0x0 - dummy sync flag']
  #allocation14 [shape = 'u32[]', space=smem, size = 0x4, offset = 0x44, fixed_abs, tag = 'smem constant byte address 0x44 - assertion arg 0']
  #allocation15 [shape = 'u32[]', space=smem, size = 0x4, offset = 0x48, fixed_abs, tag = 'smem constant byte address 0x48 - assertion arg 1']
  #allocation16 [shape = 's32[]', space=sflag, size = 0x4, offset = 0, fixed_abs, tag = 'sflag constant byte address 0x0 - dummy sync flag']
  #allocation17 [shape = 's32[]', space=sflag, size = 0x4, offset = 0, fixed_abs, tag = 'sflag constant byte address 0x0 - dummy sync flag']
  #allocation18 [shape = 's32[]', space=sflag, size = 0x4, offset = 0, fixed_abs, tag = 'sflag constant byte address 0x0 - dummy sync flag']
  #allocation19 [shape = 's32[]', space=sflag, size = 0x4, offset = 0, fixed_abs, tag = 'sflag constant byte address 0x0 - dummy sync flag']
  #allocation20 [shape = 's32[]', space=sflag, size = 0x4, offset = 0, fixed_abs, tag = 'sflag constant byte address 0x0 - dummy sync flag']
  #allocation21 [shape = 's32[]', space=sflag, size = 0x4, offset = 0, fixed_abs, tag = 'sflag constant byte address 0x0 - dummy sync flag']
  #allocation22 [shape = 's32[]', space=sflag, size = 0x4, offset = 0, fixed_abs, tag = 'sflag constant byte address 0x0 - dummy sync flag']
  #allocation23 [shape = 's32[]', space=sflag, size = 0x4, offset = 0, fixed_abs, tag = 'sflag constant byte address 0x0 - dummy sync flag']
  #allocation24 [shape = 's32[]', space=sflag, size = 0x4, offset = 0, fixed_abs, tag = 'sflag constant byte address 0x0 - dummy sync flag']
  #allocation25 [shape = 's32[]', space=sflag, size = 0x4, offset = 0, fixed_abs, tag = 'sflag constant byte address 0x0 - dummy sync flag']
  #allocation26 [shape = 's32[]', space=sflag, size = 0x4, offset = 0, fixed_abs, tag = 'sflag constant byte address 0x0 - dummy sync flag']
  #allocation27 [shape = 's32[]', space=sflag, size = 0x4, offset = 0, fixed_abs, tag = 'sflag constant byte address 0x0 - dummy sync flag']
  #allocation28 [shape = 's32[]', space=sflag, size = 0x4, offset = 0, fixed_abs, tag = 'sflag constant byte address 0x0 - dummy sync flag']
  #allocation29 [shape = 's32[]', space=sflag, size = 0x4, offset = 0, fixed_abs, tag = 'sflag constant byte address 0x0 - dummy sync flag']
  #allocation30 [shape = 's32[]', space=sflag, size = 0x4, offset = 0, fixed_abs, tag = 'sflag constant byte address 0x0 - dummy sync flag']
  #allocation31 [shape = 's32[]', space=sflag, size = 0x4, offset = 0, fixed_abs, tag = 'sflag constant byte address 0x0 - dummy sync flag']
  #allocation32 [shape = 's32[]', space=sflag, size = 0x4, offset = 0, fixed_abs, tag = 'sflag constant byte address 0x0 - dummy sync flag']
  #allocation33 [shape = 's32[]', space=sflag, size = 0x4, offset = 0, fixed_abs, tag = 'sflag constant byte address 0x0 - dummy sync flag']
  #allocation34 [shape = 's32[]', space=sflag, size = 0x4, offset = 0, fixed_abs, tag = 'sflag constant byte address 0x0 - dummy sync flag']
  #allocation35 [shape = 's32[]', space=sflag, size = 0x4, offset = 0, fixed_abs, tag = 'sflag constant byte address 0x0 - dummy sync flag']
  #allocation36 [shape = 's32[]', space=sflag, size = 0x4, offset = 0, fixed_abs, tag = 'sflag constant byte address 0x0 - dummy sync flag']
  #allocation37 [shape = 's32[]', space=sflag, size = 0x4, offset = 0, fixed_abs, tag = 'sflag constant byte address 0x0 - dummy sync flag']
  #allocation38 [shape = 's32[]', space=sflag, size = 0x4, offset = 0, fixed_abs, tag = 'sflag constant byte address 0x0 - dummy sync flag']
  #allocation39 [shape = 's32[]', space=sflag, size = 0x4, offset = 0, fixed_abs, tag = 'sflag constant byte address 0x0 - dummy sync flag']
  #allocation40 [shape = 's32[]', space=sflag, size = 0x4, offset = 0, fixed_abs, tag = 'sflag constant byte address 0x0 - dummy sync flag']
  #allocation41 [shape = 's32[]', space=sflag, size = 0x4, offset = 0, fixed_abs, tag = 'sflag constant byte address 0x0 - dummy sync flag']
  #allocation42 [shape = 's32[]', space=sflag, size = 0x4, offset = 0, fixed_abs, tag = 'sflag constant byte address 0x0 - dummy sync flag']
  #allocation43 [shape = 's32[]', space=sflag, size = 0x4, offset = 0, fixed_abs, tag = 'sflag constant byte address 0x0 - dummy sync flag']
  #allocation44 [shape = 's32[]', space=sflag, size = 0x4, offset = 0, fixed_abs, tag = 'sflag constant byte address 0x0 - dummy sync flag']
  #allocation45 [shape = 's32[]', space=sflag, size = 0x4, offset = 0, fixed_abs, tag = 'sflag constant byte address 0x0 - dummy sync flag']
  %s0 = inlined_call_operand.hbm [shape: f32[8,64], index: 0, kind: input, shape index: {}]
  %s1 = inlined_call_operand.hbm [shape: f32[8,32], index: 1, kind: input, shape index: {}]
  %s2 = inlined_call_operand.hbm [shape: bf16[16,128,128], index: 2, kind: input, shape index: {}]
  %s3 = inlined_call_operand.hbm [shape: f32[16,1,128], index: 3, kind: input, shape index: {}]
  %s4 = inlined_call_operand.hbm [shape: f32[16,1,128], index: 4, kind: input, shape index: {}]
  %s5 = inlined_call_operand.vmem [shape: f32[16,128], index: 5, kind: output, shape index: {0}]
  %s6 = inlined_call_operand.vmem [shape: f32[16,128], index: 6, kind: output, shape index: {1}]
  %s7 = inlined_call_operand.vmem [shape: f32[16,128], index: 7, kind: output, shape index: {2}]
  %8 = xla_tuple %s5, %s6, %s7
  %s9 = sld [smem:[#allocation0]]
  $region122: #{forward.1} parent=0
    _
  %s11 = ssub.s32 1, %s9
  %s12 = scalar_select 0, %s11, %s9
  $region1: #{forward.1} parent=0
    #allocation5 [shape = 'u8[4096]{0}', space=vmem, size = 0x1000, scoped, tag = 'input window, operand 0, single buffered']
    #allocation6 [shape = 's32[1]{0}', space=sflag, size = 0x4, scoped, tag = 'scoped memory for forward.1']
    #allocation7 [shape = 'u8[4096]{0}', space=vmem, size = 0x1000, scoped, tag = 'input window, operand 1, single buffered']
    #allocation8 [shape = 's32[1]{0}', space=sflag, size = 0x4, scoped, tag = 'scoped memory for forward.1']
    #allocation9 [shape = 'u8[8192]{0}', space=vmem, size = 0x2000, scoped, tag = 'input window, operand 3, single buffered']
    #allocation10 [shape = 'u8[8192]{0}', space=vmem, size = 0x2000, scoped, tag = 'input window, operand 4, single buffered']
    #allocation11 [shape = 's32[1]{0}', space=sflag, size = 0x4, scoped, tag = 'scoped memory for forward.1']
    %13 = vsyncpa [#allocation6], 0
    %14 = vsyncpa [#allocation8], 0
    %15 = vsyncpa [#allocation11], 0
    // Predicated region
    $region2: #{forward.1} parent=1 // pred_check
      _
    $region3: #{forward.1} parent=1 // pred_check_branch
      %17 = sbr.rel (0) target = $region5
    $region4: #{forward.1} parent=1 // pred_region
      %s19 = ssub.s32 128, 128
      %20 = vsyncadd [#allocation6], %s19
      %s22 = sshll.u32 [#allocation5], 4
      %s23 = int_to_ptr.vmem [resolvable:$true] %s22
      %25 = dma.hbm_to_vmem [thread:$0]  %s0, 128, %s23, [#allocation6]
    $region5: #{forward.1} parent=1 // pred_fallthru
      _
    // Predicated region
    $region6: #{forward.1} parent=1 // pred_check
      _
    $region7: #{forward.1} parent=1 // pred_check_branch
      %27 = sbr.rel (0) target = $region9
    $region8: #{forward.1} parent=1 // pred_region
      %s29 = ssub.s32 128, 128
      %30 = vsyncadd [#allocation8], %s29
      %s32 = sshll.u32 [#allocation7], 4
      %s33 = int_to_ptr.vmem [resolvable:$true] %s32
      %35 = dma.hbm_to_vmem [thread:$0]  %s1, 128, %s33, [#allocation8]
    $region9: #{forward.1} parent=1 // pred_fallthru
      _
    // Predicated region
    $region10: #{forward.1} parent=1 // pred_check
      _
    $region11: #{forward.1} parent=1 // pred_check_branch
      %37 = sbr.rel (0) target = $region13
    $region12: #{forward.1} parent=1 // pred_region
      %s39 = ssub.s32 256, 256
      %40 = vsyncadd [#allocation8], %s39
      %s41 = sshll.u32 [#allocation9], 4
      %s42 = int_to_ptr.vmem [resolvable:$true] %s41
      %47 = dma.hbm_to_vmem [thread:$0]  %s3, 256, %s42, [#allocation8], 16, 16, 1
    $region13: #{forward.1} parent=1 // pred_fallthru
      _
    // Predicated region
    $region14: #{forward.1} parent=1 // pred_check
      _
    $region15: #{forward.1} parent=1 // pred_check_branch
      %49 = sbr.rel (0) target = $region17
    $region16: #{forward.1} parent=1 // pred_region
      %s51 = ssub.s32 256, 256
      %52 = vsyncadd [#allocation11], %s51
      %s53 = sshll.u32 [#allocation10], 4
      %s54 = int_to_ptr.vmem [resolvable:$true] %s53
      %59 = dma.hbm_to_vmem [thread:$0]  %s4, 256, %s54, [#allocation11], 16, 16, 1
    $region17: #{forward.1} parent=1 // pred_fallthru
      _
    // Predicated region
    $region18: #{forward.1} parent=1 // pred_check
      _
    $region19: #{forward.1} parent=1 // pred_check_branch
      %61 = sbr.rel (0) target = $region21
    $region20: #{forward.1} parent=1 // pred_region
      %62 = dma.done [#allocation6], 128
    $region21: #{forward.1} parent=1 // pred_fallthru
      _
    // Predicated region
    $region22: #{forward.1} parent=1 // pred_check
      _
    $region23: #{forward.1} parent=1 // pred_check_branch
      %64 = sbr.rel (0) target = $region25
    $region24: #{forward.1} parent=1 // pred_region
      %65 = dma.done [#allocation8], 128
    $region25: #{forward.1} parent=1 // pred_fallthru
      _
    // Predicated region
    $region26: #{forward.1} parent=1 // pred_check
      _
    $region27: #{forward.1} parent=1 // pred_check_branch
      %67 = sbr.rel (0) target = $region29
    $region28: #{forward.1} parent=1 // pred_region
      %68 = dma.done [#allocation8], 256
    $region29: #{forward.1} parent=1 // pred_fallthru
      _
    // Predicated region
    $region30: #{forward.1} parent=1 // pred_check
      _
    $region31: #{forward.1} parent=1 // pred_check_branch
      %70 = sbr.rel (0) target = $region33
    $region32: #{forward.1} parent=1 // pred_region
      %71 = dma.done [#allocation11], 256
    $region33: #{forward.1} parent=1 // pred_fallthru
      _
    // Predicated region
    $region34: #{forward.1} parent=1 // pred_check
      _
    $region35: #{forward.1} parent=1 // pred_check_branch
      %74 = sbr.rel target = $region37
    $region36: #{forward.1} parent=1 // pred_region
      %75 = sst [smem:[#allocation14]] [#allocation13]
      %76 = sst [smem:[#allocation15]] [#allocation12]
    $region37: #{forward.1} parent=1 // pred_fallthru
      _
    %78 = shalt.err (0)
    %s80 = sshll.u32 [#allocation3], 4
    %s81 = int_to_ptr.vmem [resolvable:$true] %s80
    %83 = dma.hbm_to_vmem [thread:$0]  %s2, 1024, %s81, [#allocation4]
    %v84 = vlaneseq
    %v85 = vshrl.u32 %v84, 7
    %v86 = vadd.s32 %v85, 8
    %vm87 = vcmp.lt.s32.totalorder %v85, 8
    %vm88 = vcmp.lt.s32.totalorder %v86, 8
    %v89 = vsel %vm87, 1, 0
    %v90 = vsel %vm88, 1, 0
    %v91 = vcvt.s32.f32 %v89
    %v92 = vcvt.s32.f32 %v90
    %93 = vst [vmem:[#allocation2] sm:$0xff] 0.0
    %94 = vst [vmem:[#allocation2 + $0x8] sm:$0xff] 0.0
    %v95 = vld [vmem:[#allocation5] sm:$0xff]
    %vm96 = vcmask 523264
    %97 = vst.msk [vmem:[#allocation2] sm:$0xff] %vm96, %v95
    %v98 = vld [vmem:[#allocation2] sm:$0xff]
    %v99 = vld [vmem:[#allocation2 + $0x8] sm:$0xff]
    %s100 = scalar_lea.hbm %s2, 1024
    %s101 = scalar_lea.vmem [#allocation3], 64
    %s102 = scalar_lea.sflag [#allocation4], 1
    // Predicated region
    $region38: #{forward.1} parent=1 // pred_check
      _
    $region39: #{forward.1} parent=1 // pred_check_branch
      %104 = sbr.rel target = $region41
    $region40: #{forward.1} parent=1 // pred_region
      %105 = sst [smem:[#allocation14]] [#allocation17]
      %106 = sst [smem:[#allocation15]] [#allocation16]
    $region41: #{forward.1} parent=1 // pred_fallthru
      _
    %108 = shalt.err (0)
    %s110 = sshll.u32 %s101, 4
    %s111 = int_to_ptr.vmem [resolvable:$true] %s110
    %113 = dma.hbm_to_vmem [thread:$0]  %s100, 1024, %s111, %s102
    %s114 = smul.u32 4, 16
    %s115 = smul.u32 %s114, 1
    %s116 = sshll.u32 %s115, 4
    %117 = dma.done [#allocation4], %s116
    %v118 = vld [vmem:[#allocation3] sm:$0xf]
    %v119 = vld [vmem:[#allocation3 + $0x4] sm:$0xf]
    %v120 = vld [vmem:[#allocation3 + $0x8] sm:$0xf]
    %v121 = vld [vmem:[#allocation3 + $0xc] sm:$0xf]
    %v122 = vld [vmem:[#allocation3 + $0x10] sm:$0xf]
    %v123 = vld [vmem:[#allocation3 + $0x14] sm:$0xf]
    %v124 = vld [vmem:[#allocation3 + $0x18] sm:$0xf]
    %v125 = vld [vmem:[#allocation3 + $0x1c] sm:$0xf]
    %v126 = vld [vmem:[#allocation3 + $0x20] sm:$0xf]
    %v127 = vld [vmem:[#allocation3 + $0x24] sm:$0xf]
    %v128 = vld [vmem:[#allocation3 + $0x28] sm:$0xf]
    %v129 = vld [vmem:[#allocation3 + $0x2c] sm:$0xf]
    %v130 = vld [vmem:[#allocation3 + $0x30] sm:$0xf]
    %v131 = vld [vmem:[#allocation3 + $0x34] sm:$0xf]
    %v132 = vld [vmem:[#allocation3 + $0x38] sm:$0xf]
    %v133 = vld [vmem:[#allocation3 + $0x3c] sm:$0xf]
    %v134 = vld [vmem:[#allocation9] sm:$0x1]
    %v135 = vld [vmem:[#allocation10] sm:$0x1]
    %v136 = vpack.c.bf16 %v99, %v98
    %v153 = vunpack.c.l.b16 %v118
    %v154 = vunpack.c.l.b16 %v119
    %v155 = vunpack.c.l.b16 %v120
    %v156 = vunpack.c.l.b16 %v121
    %v157 = vunpack.c.l.b16 %v122
    %v158 = vunpack.c.l.b16 %v123
    %v159 = vunpack.c.l.b16 %v124
    %v160 = vunpack.c.l.b16 %v125
    %v161 = vunpack.c.l.b16 %v126
    %v162 = vunpack.c.l.b16 %v127
    %v163 = vunpack.c.l.b16 %v128
    %v164 = vunpack.c.l.b16 %v129
    %v165 = vunpack.c.l.b16 %v130
    %v166 = vunpack.c.l.b16 %v131
    %v167 = vunpack.c.l.b16 %v132
    %v168 = vunpack.c.l.b16 %v133
    %v169 = vpack.c.b16 %v154, %v153
    %v170 = vpack.c.b16 %v156, %v155
    %v171 = vpack.c.b16 %v158, %v157
    %v172 = vpack.c.b16 %v160, %v159
    %v173 = vpack.c.b16 %v162, %v161
    %v174 = vpack.c.b16 %v164, %v163
    %v175 = vpack.c.b16 %v166, %v165
    %v176 = vpack.c.b16 %v168, %v167
    %185 = vmatprep.subr.bf16.mxu0 0
    %186 = vmatpush1.bf16.msra.mxu0 %v176
    %187 = vmatprep.subr.bf16.mxu0 0
    %188 = vmatpush1.bf16.msra.mxu0 %v175
    %189 = vmatprep.subr.bf16.mxu0 0
    %190 = vmatpush1.bf16.msra.mxu0 %v174
    %191 = vmatprep.subr.bf16.mxu0 0
    %192 = vmatpush1.bf16.msra.mxu0 %v173
    %193 = vmatprep.subr.bf16.mxu0 0
    %194 = vmatpush1.bf16.msra.mxu0 %v172
    %195 = vmatprep.subr.bf16.mxu0 0
    %196 = vmatpush1.bf16.msra.mxu0 %v171
    %197 = vmatprep.subr.bf16.mxu0 0
    %198 = vmatpush1.bf16.msra.mxu0 %v170
    %199 = vmatprep.subr.bf16.mxu0 0
    %200 = vmatpush1.bf16.msra.mxu0 %v169
    %201 = vmatprep.subr.bf16.mxu0 0
    %202 = vmatpush2.bf16.msra.mxu0 0
    %203 = vmatprep.subr.bf16.mxu0 0
    %204 = vmatpush2.bf16.msra.mxu0 0
    %205 = vmatprep.subr.bf16.mxu0 0
    %206 = vmatpush2.bf16.msra.mxu0 0
    %207 = vmatprep.subr.bf16.mxu0 0
    %208 = vmatpush2.bf16.msra.mxu0 0
    %209 = vmatprep.subr.bf16.mxu0 0
    %210 = vmatpush2.bf16.msra.mxu0 0
    %211 = vmatprep.subr.bf16.mxu0 0
    %212 = vmatpush2.bf16.msra.mxu0 0
    %213 = vmatprep.subr.bf16.mxu0 0
    %214 = vmatpush2.bf16.msra.mxu0 0
    %215 = vmatprep.subr.bf16.mxu0 0
    %216 = vmatpush2.bf16.msra.mxu0 0
    %217 = vmatprep.mubr.bf16.mxu0 0
    %218 = vmatmul.mubr.bf16.gmra.mxu0 %v136
    %v219 = vpop.f32.mrf.mxu0
    %v220 = vadd.f32 0.0, %v219
    %v221 = vpop.f32.mrf.mxu0
    %v222 = vpop.f32.mrf.mxu0
    %v223 = vadd.f32 0.0, %v222
    %v224 = vpop.f32.mrf.mxu0
    %225 = vdwg.mxu0
    %v226 = vadd.f32 %v220, %v223
    %v227 = vrot.slane %v226, 4
    %v228 = vadd.f32 %v226, %v227
    %v229 = vrot.slane %v228, 2
    %v230 = vadd.f32 %v228, %v229
    %v231 = vrot.slane %v230, 1
    %v232 = vadd.f32 %v230, %v231
    %v233 = vmul.f32 %v232, 0.125
    %v234 = vmul.f32 %v220, %v220
    %v235 = vmul.f32 %v223, %v223
    %v236 = vadd.f32 %v234, %v235
    %v237 = vrot.slane %v236, 4
    %v238 = vadd.f32 %v236, %v237
    %v239 = vrot.slane %v238, 2
    %v240 = vadd.f32 %v238, %v239
    %v241 = vrot.slane %v240, 1
    %v242 = vadd.f32 %v240, %v241
    %v243 = vmul.f32 %v242, 0.125
    %v244 = vmul.f32 %v233, %v233
    %v245 = vsub.f32 %v243, %v244
    %v246 = vmax.f32 %v245, 0.0
    %v247 = vadd.f32 %v246, 1e-05
    %v248 = vrsqrt.pop %v247
    %v249 = vmul.f32 %v134, %v248
    %v250 = vmul.f32 %v233, %v249
    %v251 = vsub.f32 %v135, %v250
    %v253 = vlaneseq
    %v254 = vshrl.u32 %v253, 7
    %v255 = vsub.s32 0, %v254
    %v256 = vrot.slane %v249, %v255
    %v258 = vmul.f32 %v220, %v256
    %v259 = vmul.f32 %v223, %v256
    %v261 = vlaneseq
    %v262 = vshrl.u32 %v261, 7
    %v263 = vsub.s32 0, %v262
    %v264 = vrot.slane %v251, %v263
    %v266 = vadd.f32 %v258, %v264
    %v267 = vadd.f32 %v259, %v264
    %v268 = vmax.f32 %v266, 0.0
    %v269 = vmax.f32 %v267, 0.0
    %v270 = vmul.f32 %v268, %v91
    %v271 = vmul.f32 %v269, %v92
    %s272 = scalar_lea.hbm %s2, 2048
    // Predicated region
    $region42: #{forward.1} parent=1 // pred_check
      _
    $region43: #{forward.1} parent=1 // pred_check_branch
      %274 = sbr.rel target = $region45
    $region44: #{forward.1} parent=1 // pred_region
      %275 = sst [smem:[#allocation14]] [#allocation19]
      %276 = sst [smem:[#allocation15]] [#allocation18]
    $region45: #{forward.1} parent=1 // pred_fallthru
      _
    %278 = shalt.err (0)
    %s280 = sshll.u32 [#allocation3], 4
    %s281 = int_to_ptr.vmem [resolvable:$true] %s280
    %283 = dma.hbm_to_vmem [thread:$0]  %s272, 1024, %s281, [#allocation4]
    %s284 = sshll.u32 %s115, 4
    %285 = dma.done %s102, %s284
    %v286 = vld [vmem:[%s101] sm:$0xf]
    %v287 = vld [vmem:[%s101 + $0x4] sm:$0xf]
    %v288 = vld [vmem:[%s101 + $0x8] sm:$0xf]
    %v289 = vld [vmem:[%s101 + $0xc] sm:$0xf]
    %v290 = vld [vmem:[%s101 + $0x10] sm:$0xf]
    %v291 = vld [vmem:[%s101 + $0x14] sm:$0xf]
    %v292 = vld [vmem:[%s101 + $0x18] sm:$0xf]
    %v293 = vld [vmem:[%s101 + $0x1c] sm:$0xf]
    %v294 = vld [vmem:[%s101 + $0x20] sm:$0xf]
    %v295 = vld [vmem:[%s101 + $0x24] sm:$0xf]
    %v296 = vld [vmem:[%s101 + $0x28] sm:$0xf]
    %v297 = vld [vmem:[%s101 + $0x2c] sm:$0xf]
    %v298 = vld [vmem:[%s101 + $0x30] sm:$0xf]
    %v299 = vld [vmem:[%s101 + $0x34] sm:$0xf]
    %v300 = vld [vmem:[%s101 + $0x38] sm:$0xf]
    %v301 = vld [vmem:[%s101 + $0x3c] sm:$0xf]
    %s302 = scalar_lea.vmem [#allocation9], 1
    %v303 = vld [vmem:[%s302] sm:$0x1]
    %s304 = scalar_lea.vmem [#allocation10], 1
    %v305 = vld [vmem:[%s304] sm:$0x1]
    %v306 = vpack.c.bf16 %v271, %v270
    %v323 = vunpack.c.l.b16 %v286
    %v324 = vunpack.c.l.b16 %v287
    %v325 = vunpack.c.l.b16 %v288
    %v326 = vunpack.c.l.b16 %v289
    %v327 = vunpack.c.l.b16 %v290
    %v328 = vunpack.c.l.b16 %v291
    %v329 = vunpack.c.l.b16 %v292
    %v330 = vunpack.c.l.b16 %v293
    %v331 = vunpack.c.l.b16 %v294
    %v332 = vunpack.c.l.b16 %v295
    %v333 = vunpack.c.l.b16 %v296
    %v334 = vunpack.c.l.b16 %v297
    %v335 = vunpack.c.l.b16 %v298
    %v336 = vunpack.c.l.b16 %v299
    %v337 = vunpack.c.l.b16 %v300
    %v338 = vunpack.c.l.b16 %v301
    %v339 = vpack.c.b16 %v324, %v323
    %v340 = vpack.c.b16 %v326, %v325
    %v341 = vpack.c.b16 %v328, %v327
    %v342 = vpack.c.b16 %v330, %v329
    %v343 = vpack.c.b16 %v332, %v331
    %v344 = vpack.c.b16 %v334, %v333
    %v345 = vpack.c.b16 %v336, %v335
    %v346 = vpack.c.b16 %v338, %v337
    %355 = vmatprep.subr.bf16.mxu0 0
    %356 = vmatpush1.bf16.msra.mxu0 %v346
    %357 = vmatprep.subr.bf16.mxu0 0
    %358 = vmatpush1.bf16.msra.mxu0 %v345
    %359 = vmatprep.subr.bf16.mxu0 0
    %360 = vmatpush1.bf16.msra.mxu0 %v344
    %361 = vmatprep.subr.bf16.mxu0 0
    %362 = vmatpush1.bf16.msra.mxu0 %v343
    %363 = vmatprep.subr.bf16.mxu0 0
    %364 = vmatpush1.bf16.msra.mxu0 %v342
    %365 = vmatprep.subr.bf16.mxu0 0
    %366 = vmatpush1.bf16.msra.mxu0 %v341
    %367 = vmatprep.subr.bf16.mxu0 0
    %368 = vmatpush1.bf16.msra.mxu0 %v340
    %369 = vmatprep.subr.bf16.mxu0 0
    %370 = vmatpush1.bf16.msra.mxu0 %v339
    %371 = vmatprep.subr.bf16.mxu0 0
    %372 = vmatpush2.bf16.msra.mxu0 0
    %373 = vmatprep.subr.bf16.mxu0 0
    %374 = vmatpush2.bf16.msra.mxu0 0
    %375 = vmatprep.subr.bf16.mxu0 0
    %376 = vmatpush2.bf16.msra.mxu0 0
    %377 = vmatprep.subr.bf16.mxu0 0
    %378 = vmatpush2.bf16.msra.mxu0 0
    %379 = vmatprep.subr.bf16.mxu0 0
    %380 = vmatpush2.bf16.msra.mxu0 0
    %381 = vmatprep.subr.bf16.mxu0 0
    %382 = vmatpush2.bf16.msra.mxu0 0
    %383 = vmatprep.subr.bf16.mxu0 0
    %384 = vmatpush2.bf16.msra.mxu0 0
    %385 = vmatprep.subr.bf16.mxu0 0
    %386 = vmatpush2.bf16.msra.mxu0 0
    %387 = vmatprep.mubr.bf16.mxu0 0
    %388 = vmatmul.mubr.bf16.gmra.mxu0 %v306
    %v389 = vpop.f32.mrf.mxu0
    %v390 = vadd.f32 0.0, %v389
    %v391 = vpop.f32.mrf.mxu0
    %v392 = vpop.f32.mrf.mxu0
    %v393 = vadd.f32 0.0, %v392
    %v394 = vpop.f32.mrf.mxu0
    %395 = vdwg.mxu0
    %v396 = vadd.f32 %v390, %v393
    %v397 = vrot.slane %v396, 4
    %v398 = vadd.f32 %v396, %v397
    %v399 = vrot.slane %v398, 2
    %v400 = vadd.f32 %v398, %v399
    %v401 = vrot.slane %v400, 1
    %v402 = vadd.f32 %v400, %v401
    %v403 = vmul.f32 %v402, 0.125
    %v404 = vmul.f32 %v390, %v390
    %v405 = vmul.f32 %v393, %v393
    %v406 = vadd.f32 %v404, %v405
    %v407 = vrot.slane %v406, 4
    %v408 = vadd.f32 %v406, %v407
    %v409 = vrot.slane %v408, 2
    %v410 = vadd.f32 %v408, %v409
    %v411 = vrot.slane %v410, 1
    %v412 = vadd.f32 %v410, %v411
    %v413 = vmul.f32 %v412, 0.125
    %v414 = vmul.f32 %v403, %v403
    %v415 = vsub.f32 %v413, %v414
    %v416 = vmax.f32 %v415, 0.0
    %v417 = vadd.f32 %v416, 1e-05
    %v418 = vrsqrt.pop %v417
    %v419 = vmul.f32 %v303, %v418
    %v420 = vmul.f32 %v403, %v419
    %v421 = vsub.f32 %v305, %v420
    %v423 = vlaneseq
    %v424 = vshrl.u32 %v423, 7
    %v425 = vsub.s32 0, %v424
    %v426 = vrot.slane %v419, %v425
    %v428 = vmul.f32 %v390, %v426
    %v429 = vmul.f32 %v393, %v426
    %v431 = vlaneseq
    %v432 = vshrl.u32 %v431, 7
    %v433 = vsub.s32 0, %v432
    %v434 = vrot.slane %v421, %v433
    %v436 = vadd.f32 %v428, %v434
    %v437 = vadd.f32 %v429, %v434
    %v438 = vmax.f32 %v436, 0.0
    %v439 = vmax.f32 %v437, 0.0
    %v440 = vmul.f32 %v438, %v91
    %v441 = vmul.f32 %v439, %v92
    %s442 = scalar_lea.hbm %s2, 3072
    // Predicated region
    $region46: #{forward.1} parent=1 // pred_check
      _
    $region47: #{forward.1} parent=1 // pred_check_branch
      %444 = sbr.rel target = $region49
    $region48: #{forward.1} parent=1 // pred_region
      %445 = sst [smem:[#allocation14]] [#allocation21]
      %446 = sst [smem:[#allocation15]] [#allocation20]
    $region49: #{forward.1} parent=1 // pred_fallthru
      _
    %448 = shalt.err (0)
    %s450 = sshll.u32 %s101, 4
    %s451 = int_to_ptr.vmem [resolvable:$true] %s450
    %453 = dma.hbm_to_vmem [thread:$0]  %s442, 1024, %s451, %s102
    %s454 = sshll.u32 %s115, 4
    %455 = dma.done [#allocation4], %s454
    %v456 = vld [vmem:[#allocation3] sm:$0xf]
    %v457 = vld [vmem:[#allocation3 + $0x4] sm:$0xf]
    %v458 = vld [vmem:[#allocation3 + $0x8] sm:$0xf]
    %v459 = vld [vmem:[#allocation3 + $0xc] sm:$0xf]
    %v460 = vld [vmem:[#allocation3 + $0x10] sm:$0xf]
    %v461 = vld [vmem:[#allocation3 + $0x14] sm:$0xf]
    %v462 = vld [vmem:[#allocation3 + $0x18] sm:$0xf]
    %v463 = vld [vmem:[#allocation3 + $0x1c] sm:$0xf]
    %v464 = vld [vmem:[#allocation3 + $0x20] sm:$0xf]
    %v465 = vld [vmem:[#allocation3 + $0x24] sm:$0xf]
    %v466 = vld [vmem:[#allocation3 + $0x28] sm:$0xf]
    %v467 = vld [vmem:[#allocation3 + $0x2c] sm:$0xf]
    %v468 = vld [vmem:[#allocation3 + $0x30] sm:$0xf]
    %v469 = vld [vmem:[#allocation3 + $0x34] sm:$0xf]
    %v470 = vld [vmem:[#allocation3 + $0x38] sm:$0xf]
    %v471 = vld [vmem:[#allocation3 + $0x3c] sm:$0xf]
    %s472 = scalar_lea.vmem [#allocation9], 2
    %v473 = vld [vmem:[%s472] sm:$0x1]
    %s474 = scalar_lea.vmem [#allocation10], 2
    %v475 = vld [vmem:[%s474] sm:$0x1]
    %v476 = vpack.c.bf16 %v441, %v440
    %v493 = vunpack.c.l.b16 %v456
    %v494 = vunpack.c.l.b16 %v457
    %v495 = vunpack.c.l.b16 %v458
    %v496 = vunpack.c.l.b16 %v459
    %v497 = vunpack.c.l.b16 %v460
    %v498 = vunpack.c.l.b16 %v461
    %v499 = vunpack.c.l.b16 %v462
    %v500 = vunpack.c.l.b16 %v463
    %v501 = vunpack.c.l.b16 %v464
    %v502 = vunpack.c.l.b16 %v465
    %v503 = vunpack.c.l.b16 %v466
    %v504 = vunpack.c.l.b16 %v467
    %v505 = vunpack.c.l.b16 %v468
    %v506 = vunpack.c.l.b16 %v469
    %v507 = vunpack.c.l.b16 %v470
    %v508 = vunpack.c.l.b16 %v471
    %v509 = vpack.c.b16 %v494, %v493
    %v510 = vpack.c.b16 %v496, %v495
    %v511 = vpack.c.b16 %v498, %v497
    %v512 = vpack.c.b16 %v500, %v499
    %v513 = vpack.c.b16 %v502, %v501
    %v514 = vpack.c.b16 %v504, %v503
    %v515 = vpack.c.b16 %v506, %v505
    %v516 = vpack.c.b16 %v508, %v507
    %525 = vmatprep.subr.bf16.mxu0 0
    %526 = vmatpush1.bf16.msra.mxu0 %v516
    %527 = vmatprep.subr.bf16.mxu0 0
    %528 = vmatpush1.bf16.msra.mxu0 %v515
    %529 = vmatprep.subr.bf16.mxu0 0
    %530 = vmatpush1.bf16.msra.mxu0 %v514
    %531 = vmatprep.subr.bf16.mxu0 0
    %532 = vmatpush1.bf16.msra.mxu0 %v513
    %533 = vmatprep.subr.bf16.mxu0 0
    %534 = vmatpush1.bf16.msra.mxu0 %v512
    %535 = vmatprep.subr.bf16.mxu0 0
    %536 = vmatpush1.bf16.msra.mxu0 %v511
    %537 = vmatprep.subr.bf16.mxu0 0
    %538 = vmatpush1.bf16.msra.mxu0 %v510
    %539 = vmatprep.subr.bf16.mxu0 0
    %540 = vmatpush1.bf16.msra.mxu0 %v509
    %541 = vmatprep.subr.bf16.mxu0 0
    %542 = vmatpush2.bf16.msra.mxu0 0
    %543 = vmatprep.subr.bf16.mxu0 0
    %544 = vmatpush2.bf16.msra.mxu0 0
    %545 = vmatprep.subr.bf16.mxu0 0
    %546 = vmatpush2.bf16.msra.mxu0 0
    %547 = vmatprep.subr.bf16.mxu0 0
    %548 = vmatpush2.bf16.msra.mxu0 0
    %549 = vmatprep.subr.bf16.mxu0 0
    %550 = vmatpush2.bf16.msra.mxu0 0
    %551 = vmatprep.subr.bf16.mxu0 0
    %552 = vmatpush2.bf16.msra.mxu0 0
    %553 = vmatprep.subr.bf16.mxu0 0
    %554 = vmatpush2.bf16.msra.mxu0 0
    %555 = vmatprep.subr.bf16.mxu0 0
    %556 = vmatpush2.bf16.msra.mxu0 0
    %557 = vmatprep.mubr.bf16.mxu0 0
    %558 = vmatmul.mubr.bf16.gmra.mxu0 %v476
    %v559 = vpop.f32.mrf.mxu0
    %v560 = vadd.f32 0.0, %v559
    %v561 = vpop.f32.mrf.mxu0
    %v562 = vpop.f32.mrf.mxu0
    %v563 = vadd.f32 0.0, %v562
    %v564 = vpop.f32.mrf.mxu0
    %565 = vdwg.mxu0
    %v566 = vadd.f32 %v560, %v563
    %v567 = vrot.slane %v566, 4
    %v568 = vadd.f32 %v566, %v567
    %v569 = vrot.slane %v568, 2
    %v570 = vadd.f32 %v568, %v569
    %v571 = vrot.slane %v570, 1
    %v572 = vadd.f32 %v570, %v571
    %v573 = vmul.f32 %v572, 0.125
    %v574 = vmul.f32 %v560, %v560
    %v575 = vmul.f32 %v563, %v563
    %v576 = vadd.f32 %v574, %v575
    %v577 = vrot.slane %v576, 4
    %v578 = vadd.f32 %v576, %v577
    %v579 = vrot.slane %v578, 2
    %v580 = vadd.f32 %v578, %v579
    %v581 = vrot.slane %v580, 1
    %v582 = vadd.f32 %v580, %v581
    %v583 = vmul.f32 %v582, 0.125
    %v584 = vmul.f32 %v573, %v573
    %v585 = vsub.f32 %v583, %v584
    %v586 = vmax.f32 %v585, 0.0
    %v587 = vadd.f32 %v586, 1e-05
    %v588 = vrsqrt.pop %v587
    %v589 = vmul.f32 %v473, %v588
    %v590 = vmul.f32 %v573, %v589
    %v591 = vsub.f32 %v475, %v590
    %v593 = vlaneseq
    %v594 = vshrl.u32 %v593, 7
    %v595 = vsub.s32 0, %v594
    %v596 = vrot.slane %v589, %v595
    %v598 = vmul.f32 %v560, %v596
    %v599 = vmul.f32 %v563, %v596
    %v601 = vlaneseq
    %v602 = vshrl.u32 %v601, 7
    %v603 = vsub.s32 0, %v602
    %v604 = vrot.slane %v591, %v603
    %v606 = vadd.f32 %v598, %v604
    %v607 = vadd.f32 %v599, %v604
    %v608 = vmax.f32 %v606, 0.0
    %v609 = vmax.f32 %v607, 0.0
    %v610 = vmul.f32 %v608, %v91
    %v611 = vmul.f32 %v609, %v92
    %s612 = scalar_lea.hbm %s2, 4096
    // Predicated region
    $region50: #{forward.1} parent=1 // pred_check
      _
    $region51: #{forward.1} parent=1 // pred_check_branch
      %614 = sbr.rel target = $region53
    $region52: #{forward.1} parent=1 // pred_region
      %615 = sst [smem:[#allocation14]] [#allocation23]
      %616 = sst [smem:[#allocation15]] [#allocation22]
    $region53: #{forward.1} parent=1 // pred_fallthru
      _
    %618 = shalt.err (0)
    %s620 = sshll.u32 [#allocation3], 4
    %s621 = int_to_ptr.vmem [resolvable:$true] %s620
    %623 = dma.hbm_to_vmem [thread:$0]  %s612, 1024, %s621, [#allocation4]
    %s624 = sshll.u32 %s115, 4
    %625 = dma.done %s102, %s624
    %v626 = vld [vmem:[%s101] sm:$0xf]
    %v627 = vld [vmem:[%s101 + $0x4] sm:$0xf]
    %v628 = vld [vmem:[%s101 + $0x8] sm:$0xf]
    %v629 = vld [vmem:[%s101 + $0xc] sm:$0xf]
    %v630 = vld [vmem:[%s101 + $0x10] sm:$0xf]
    %v631 = vld [vmem:[%s101 + $0x14] sm:$0xf]
    %v632 = vld [vmem:[%s101 + $0x18] sm:$0xf]
    %v633 = vld [vmem:[%s101 + $0x1c] sm:$0xf]
    %v634 = vld [vmem:[%s101 + $0x20] sm:$0xf]
    %v635 = vld [vmem:[%s101 + $0x24] sm:$0xf]
    %v636 = vld [vmem:[%s101 + $0x28] sm:$0xf]
    %v637 = vld [vmem:[%s101 + $0x2c] sm:$0xf]
    %v638 = vld [vmem:[%s101 + $0x30] sm:$0xf]
    %v639 = vld [vmem:[%s101 + $0x34] sm:$0xf]
    %v640 = vld [vmem:[%s101 + $0x38] sm:$0xf]
    %v641 = vld [vmem:[%s101 + $0x3c] sm:$0xf]
    %s642 = scalar_lea.vmem [#allocation9], 3
    %v643 = vld [vmem:[%s642] sm:$0x1]
    %s644 = scalar_lea.vmem [#allocation10], 3
    %v645 = vld [vmem:[%s644] sm:$0x1]
    %v646 = vpack.c.bf16 %v611, %v610
    %v663 = vunpack.c.l.b16 %v626
    %v664 = vunpack.c.l.b16 %v627
    %v665 = vunpack.c.l.b16 %v628
    %v666 = vunpack.c.l.b16 %v629
    %v667 = vunpack.c.l.b16 %v630
    %v668 = vunpack.c.l.b16 %v631
    %v669 = vunpack.c.l.b16 %v632
    %v670 = vunpack.c.l.b16 %v633
    %v671 = vunpack.c.l.b16 %v634
    %v672 = vunpack.c.l.b16 %v635
    %v673 = vunpack.c.l.b16 %v636
    %v674 = vunpack.c.l.b16 %v637
    %v675 = vunpack.c.l.b16 %v638
    %v676 = vunpack.c.l.b16 %v639
    %v677 = vunpack.c.l.b16 %v640
    %v678 = vunpack.c.l.b16 %v641
    %v679 = vpack.c.b16 %v664, %v663
    %v680 = vpack.c.b16 %v666, %v665
    %v681 = vpack.c.b16 %v668, %v667
    %v682 = vpack.c.b16 %v670, %v669
    %v683 = vpack.c.b16 %v672, %v671
    %v684 = vpack.c.b16 %v674, %v673
    %v685 = vpack.c.b16 %v676, %v675
    %v686 = vpack.c.b16 %v678, %v677
    %695 = vmatprep.subr.bf16.mxu0 0
    %696 = vmatpush1.bf16.msra.mxu0 %v686
    %697 = vmatprep.subr.bf16.mxu0 0
    %698 = vmatpush1.bf16.msra.mxu0 %v685
    %699 = vmatprep.subr.bf16.mxu0 0
    %700 = vmatpush1.bf16.msra.mxu0 %v684
    %701 = vmatprep.subr.bf16.mxu0 0
    %702 = vmatpush1.bf16.msra.mxu0 %v683
    %703 = vmatprep.subr.bf16.mxu0 0
    %704 = vmatpush1.bf16.msra.mxu0 %v682
    %705 = vmatprep.subr.bf16.mxu0 0
    %706 = vmatpush1.bf16.msra.mxu0 %v681
    %707 = vmatprep.subr.bf16.mxu0 0
    %708 = vmatpush1.bf16.msra.mxu0 %v680
    %709 = vmatprep.subr.bf16.mxu0 0
    %710 = vmatpush1.bf16.msra.mxu0 %v679
    %711 = vmatprep.subr.bf16.mxu0 0
    %712 = vmatpush2.bf16.msra.mxu0 0
    %713 = vmatprep.subr.bf16.mxu0 0
    %714 = vmatpush2.bf16.msra.mxu0 0
    %715 = vmatprep.subr.bf16.mxu0 0
    %716 = vmatpush2.bf16.msra.mxu0 0
    %717 = vmatprep.subr.bf16.mxu0 0
    %718 = vmatpush2.bf16.msra.mxu0 0
    %719 = vmatprep.subr.bf16.mxu0 0
    %720 = vmatpush2.bf16.msra.mxu0 0
    %721 = vmatprep.subr.bf16.mxu0 0
    %722 = vmatpush2.bf16.msra.mxu0 0
    %723 = vmatprep.subr.bf16.mxu0 0
    %724 = vmatpush2.bf16.msra.mxu0 0
    %725 = vmatprep.subr.bf16.mxu0 0
    %726 = vmatpush2.bf16.msra.mxu0 0
    %727 = vmatprep.mubr.bf16.mxu0 0
    %728 = vmatmul.mubr.bf16.gmra.mxu0 %v646
    %v729 = vpop.f32.mrf.mxu0
    %v730 = vadd.f32 0.0, %v729
    %v731 = vpop.f32.mrf.mxu0
    %v732 = vpop.f32.mrf.mxu0
    %v733 = vadd.f32 0.0, %v732
    %v734 = vpop.f32.mrf.mxu0
    %735 = vdwg.mxu0
    %v736 = vadd.f32 %v730, %v733
    %v737 = vrot.slane %v736, 4
    %v738 = vadd.f32 %v736, %v737
    %v739 = vrot.slane %v738, 2
    %v740 = vadd.f32 %v738, %v739
    %v741 = vrot.slane %v740, 1
    %v742 = vadd.f32 %v740, %v741
    %v743 = vmul.f32 %v742, 0.125
    %v744 = vmul.f32 %v730, %v730
    %v745 = vmul.f32 %v733, %v733
    %v746 = vadd.f32 %v744, %v745
    %v747 = vrot.slane %v746, 4
    %v748 = vadd.f32 %v746, %v747
    %v749 = vrot.slane %v748, 2
    %v750 = vadd.f32 %v748, %v749
    %v751 = vrot.slane %v750, 1
    %v752 = vadd.f32 %v750, %v751
    %v753 = vmul.f32 %v752, 0.125
    %v754 = vmul.f32 %v743, %v743
    %v755 = vsub.f32 %v753, %v754
    %v756 = vmax.f32 %v755, 0.0
    %v757 = vadd.f32 %v756, 1e-05
    %v758 = vrsqrt.pop %v757
    %v759 = vmul.f32 %v643, %v758
    %v760 = vmul.f32 %v743, %v759
    %v761 = vsub.f32 %v645, %v760
    %v763 = vlaneseq
    %v764 = vshrl.u32 %v763, 7
    %v765 = vsub.s32 0, %v764
    %v766 = vrot.slane %v759, %v765
    %v768 = vmul.f32 %v730, %v766
    %v769 = vmul.f32 %v733, %v766
    %v771 = vlaneseq
    %v772 = vshrl.u32 %v771, 7
    %v773 = vsub.s32 0, %v772
    %v774 = vrot.slane %v761, %v773
    %v776 = vadd.f32 %v768, %v774
    %v777 = vadd.f32 %v769, %v774
    %v778 = vmax.f32 %v776, 0.0
    %v779 = vmax.f32 %v777, 0.0
    %v780 = vmul.f32 %v778, %v91
    %v781 = vmul.f32 %v779, %v92
    %s782 = scalar_lea.hbm %s2, 5120
    // Predicated region
    $region54: #{forward.1} parent=1 // pred_check
      _
    $region55: #{forward.1} parent=1 // pred_check_branch
      %784 = sbr.rel target = $region57
    $region56: #{forward.1} parent=1 // pred_region
      %785 = sst [smem:[#allocation14]] [#allocation25]
      %786 = sst [smem:[#allocation15]] [#allocation24]
    $region57: #{forward.1} parent=1 // pred_fallthru
      _
    %788 = shalt.err (0)
    %s790 = sshll.u32 %s101, 4
    %s791 = int_to_ptr.vmem [resolvable:$true] %s790
    %793 = dma.hbm_to_vmem [thread:$0]  %s782, 1024, %s791, %s102
    %s794 = sshll.u32 %s115, 4
    %795 = dma.done [#allocation4], %s794
    %v796 = vld [vmem:[#allocation3] sm:$0xf]
    %v797 = vld [vmem:[#allocation3 + $0x4] sm:$0xf]
    %v798 = vld [vmem:[#allocation3 + $0x8] sm:$0xf]
    %v799 = vld [vmem:[#allocation3 + $0xc] sm:$0xf]
    %v800 = vld [vmem:[#allocation3 + $0x10] sm:$0xf]
    %v801 = vld [vmem:[#allocation3 + $0x14] sm:$0xf]
    %v802 = vld [vmem:[#allocation3 + $0x18] sm:$0xf]
    %v803 = vld [vmem:[#allocation3 + $0x1c] sm:$0xf]
    %v804 = vld [vmem:[#allocation3 + $0x20] sm:$0xf]
    %v805 = vld [vmem:[#allocation3 + $0x24] sm:$0xf]
    %v806 = vld [vmem:[#allocation3 + $0x28] sm:$0xf]
    %v807 = vld [vmem:[#allocation3 + $0x2c] sm:$0xf]
    %v808 = vld [vmem:[#allocation3 + $0x30] sm:$0xf]
    %v809 = vld [vmem:[#allocation3 + $0x34] sm:$0xf]
    %v810 = vld [vmem:[#allocation3 + $0x38] sm:$0xf]
    %v811 = vld [vmem:[#allocation3 + $0x3c] sm:$0xf]
    %s812 = scalar_lea.vmem [#allocation9], 4
    %v813 = vld [vmem:[%s812] sm:$0x1]
    %s814 = scalar_lea.vmem [#allocation10], 4
    %v815 = vld [vmem:[%s814] sm:$0x1]
    %v816 = vpack.c.bf16 %v781, %v780
    %v833 = vunpack.c.l.b16 %v796
    %v834 = vunpack.c.l.b16 %v797
    %v835 = vunpack.c.l.b16 %v798
    %v836 = vunpack.c.l.b16 %v799
    %v837 = vunpack.c.l.b16 %v800
    %v838 = vunpack.c.l.b16 %v801
    %v839 = vunpack.c.l.b16 %v802
    %v840 = vunpack.c.l.b16 %v803
    %v841 = vunpack.c.l.b16 %v804
    %v842 = vunpack.c.l.b16 %v805
    %v843 = vunpack.c.l.b16 %v806
    %v844 = vunpack.c.l.b16 %v807
    %v845 = vunpack.c.l.b16 %v808
    %v846 = vunpack.c.l.b16 %v809
    %v847 = vunpack.c.l.b16 %v810
    %v848 = vunpack.c.l.b16 %v811
    %v849 = vpack.c.b16 %v834, %v833
    %v850 = vpack.c.b16 %v836, %v835
    %v851 = vpack.c.b16 %v838, %v837
    %v852 = vpack.c.b16 %v840, %v839
    %v853 = vpack.c.b16 %v842, %v841
    %v854 = vpack.c.b16 %v844, %v843
    %v855 = vpack.c.b16 %v846, %v845
    %v856 = vpack.c.b16 %v848, %v847
    %865 = vmatprep.subr.bf16.mxu0 0
    %866 = vmatpush1.bf16.msra.mxu0 %v856
    %867 = vmatprep.subr.bf16.mxu0 0
    %868 = vmatpush1.bf16.msra.mxu0 %v855
    %869 = vmatprep.subr.bf16.mxu0 0
    %870 = vmatpush1.bf16.msra.mxu0 %v854
    %871 = vmatprep.subr.bf16.mxu0 0
    %872 = vmatpush1.bf16.msra.mxu0 %v853
    %873 = vmatprep.subr.bf16.mxu0 0
    %874 = vmatpush1.bf16.msra.mxu0 %v852
    %875 = vmatprep.subr.bf16.mxu0 0
    %876 = vmatpush1.bf16.msra.mxu0 %v851
    %877 = vmatprep.subr.bf16.mxu0 0
    %878 = vmatpush1.bf16.msra.mxu0 %v850
    %879 = vmatprep.subr.bf16.mxu0 0
    %880 = vmatpush1.bf16.msra.mxu0 %v849
    %881 = vmatprep.subr.bf16.mxu0 0
    %882 = vmatpush2.bf16.msra.mxu0 0
    %883 = vmatprep.subr.bf16.mxu0 0
    %884 = vmatpush2.bf16.msra.mxu0 0
    %885 = vmatprep.subr.bf16.mxu0 0
    %886 = vmatpush2.bf16.msra.mxu0 0
    %887 = vmatprep.subr.bf16.mxu0 0
    %888 = vmatpush2.bf16.msra.mxu0 0
    %889 = vmatprep.subr.bf16.mxu0 0
    %890 = vmatpush2.bf16.msra.mxu0 0
    %891 = vmatprep.subr.bf16.mxu0 0
    %892 = vmatpush2.bf16.msra.mxu0 0
    %893 = vmatprep.subr.bf16.mxu0 0
    %894 = vmatpush2.bf16.msra.mxu0 0
    %895 = vmatprep.subr.bf16.mxu0 0
    %896 = vmatpush2.bf16.msra.mxu0 0
    %897 = vmatprep.mubr.bf16.mxu0 0
    %898 = vmatmul.mubr.bf16.gmra.mxu0 %v816
    %v899 = vpop.f32.mrf.mxu0
    %v900 = vadd.f32 0.0, %v899
    %v901 = vpop.f32.mrf.mxu0
    %v902 = vpop.f32.mrf.mxu0
    %v903 = vadd.f32 0.0, %v902
    %v904 = vpop.f32.mrf.mxu0
    %905 = vdwg.mxu0
    %v906 = vadd.f32 %v900, %v903
    %v907 = vrot.slane %v906, 4
    %v908 = vadd.f32 %v906, %v907
    %v909 = vrot.slane %v908, 2
    %v910 = vadd.f32 %v908, %v909
    %v911 = vrot.slane %v910, 1
    %v912 = vadd.f32 %v910, %v911
    %v913 = vmul.f32 %v912, 0.125
    %v914 = vmul.f32 %v900, %v900
    %v915 = vmul.f32 %v903, %v903
    %v916 = vadd.f32 %v914, %v915
    %v917 = vrot.slane %v916, 4
    %v918 = vadd.f32 %v916, %v917
    %v919 = vrot.slane %v918, 2
    %v920 = vadd.f32 %v918, %v919
    %v921 = vrot.slane %v920, 1
    %v922 = vadd.f32 %v920, %v921
    %v923 = vmul.f32 %v922, 0.125
    %v924 = vmul.f32 %v913, %v913
    %v925 = vsub.f32 %v923, %v924
    %v926 = vmax.f32 %v925, 0.0
    %v927 = vadd.f32 %v926, 1e-05
    %v928 = vrsqrt.pop %v927
    %v929 = vmul.f32 %v813, %v928
    %v930 = vmul.f32 %v913, %v929
    %v931 = vsub.f32 %v815, %v930
    %v933 = vlaneseq
    %v934 = vshrl.u32 %v933, 7
    %v935 = vsub.s32 0, %v934
    %v936 = vrot.slane %v929, %v935
    %v938 = vmul.f32 %v900, %v936
    %v939 = vmul.f32 %v903, %v936
    %v941 = vlaneseq
    %v942 = vshrl.u32 %v941, 7
    %v943 = vsub.s32 0, %v942
    %v944 = vrot.slane %v931, %v943
    %v946 = vadd.f32 %v938, %v944
    %v947 = vadd.f32 %v939, %v944
    %v948 = vmax.f32 %v946, 0.0
    %v949 = vmax.f32 %v947, 0.0
    %v950 = vmul.f32 %v948, %v91
    %v951 = vmul.f32 %v949, %v92
    %s952 = scalar_lea.hbm %s2, 6144
    // Predicated region
    $region58: #{forward.1} parent=1 // pred_check
      _
    $region59: #{forward.1} parent=1 // pred_check_branch
      %954 = sbr.rel target = $region61
    $region60: #{forward.1} parent=1 // pred_region
      %955 = sst [smem:[#allocation14]] [#allocation27]
      %956 = sst [smem:[#allocation15]] [#allocation26]
    $region61: #{forward.1} parent=1 // pred_fallthru
      _
    %958 = shalt.err (0)
    %s960 = sshll.u32 [#allocation3], 4
    %s961 = int_to_ptr.vmem [resolvable:$true] %s960
    %963 = dma.hbm_to_vmem [thread:$0]  %s952, 1024, %s961, [#allocation4]
    %s964 = sshll.u32 %s115, 4
    %965 = dma.done %s102, %s964
    %v966 = vld [vmem:[%s101] sm:$0xf]
    %v967 = vld [vmem:[%s101 + $0x4] sm:$0xf]
    %v968 = vld [vmem:[%s101 + $0x8] sm:$0xf]
    %v969 = vld [vmem:[%s101 + $0xc] sm:$0xf]
    %v970 = vld [vmem:[%s101 + $0x10] sm:$0xf]
    %v971 = vld [vmem:[%s101 + $0x14] sm:$0xf]
    %v972 = vld [vmem:[%s101 + $0x18] sm:$0xf]
    %v973 = vld [vmem:[%s101 + $0x1c] sm:$0xf]
    %v974 = vld [vmem:[%s101 + $0x20] sm:$0xf]
    %v975 = vld [vmem:[%s101 + $0x24] sm:$0xf]
    %v976 = vld [vmem:[%s101 + $0x28] sm:$0xf]
    %v977 = vld [vmem:[%s101 + $0x2c] sm:$0xf]
    %v978 = vld [vmem:[%s101 + $0x30] sm:$0xf]
    %v979 = vld [vmem:[%s101 + $0x34] sm:$0xf]
    %v980 = vld [vmem:[%s101 + $0x38] sm:$0xf]
    %v981 = vld [vmem:[%s101 + $0x3c] sm:$0xf]
    %s982 = scalar_lea.vmem [#allocation9], 5
    %v983 = vld [vmem:[%s982] sm:$0x1]
    %s984 = scalar_lea.vmem [#allocation10], 5
    %v985 = vld [vmem:[%s984] sm:$0x1]
    %v986 = vpack.c.bf16 %v951, %v950
    %v1003 = vunpack.c.l.b16 %v966
    %v1004 = vunpack.c.l.b16 %v967
    %v1005 = vunpack.c.l.b16 %v968
    %v1006 = vunpack.c.l.b16 %v969
    %v1007 = vunpack.c.l.b16 %v970
    %v1008 = vunpack.c.l.b16 %v971
    %v1009 = vunpack.c.l.b16 %v972
    %v1010 = vunpack.c.l.b16 %v973
    %v1011 = vunpack.c.l.b16 %v974
    %v1012 = vunpack.c.l.b16 %v975
    %v1013 = vunpack.c.l.b16 %v976
    %v1014 = vunpack.c.l.b16 %v977
    %v1015 = vunpack.c.l.b16 %v978
    %v1016 = vunpack.c.l.b16 %v979
    %v1017 = vunpack.c.l.b16 %v980
    %v1018 = vunpack.c.l.b16 %v981
    %v1019 = vpack.c.b16 %v1004, %v1003
    %v1020 = vpack.c.b16 %v1006, %v1005
    %v1021 = vpack.c.b16 %v1008, %v1007
    %v1022 = vpack.c.b16 %v1010, %v1009
    %v1023 = vpack.c.b16 %v1012, %v1011
    %v1024 = vpack.c.b16 %v1014, %v1013
    %v1025 = vpack.c.b16 %v1016, %v1015
    %v1026 = vpack.c.b16 %v1018, %v1017
    %1035 = vmatprep.subr.bf16.mxu0 0
    %1036 = vmatpush1.bf16.msra.mxu0 %v1026
    %1037 = vmatprep.subr.bf16.mxu0 0
    %1038 = vmatpush1.bf16.msra.mxu0 %v1025
    %1039 = vmatprep.subr.bf16.mxu0 0
    %1040 = vmatpush1.bf16.msra.mxu0 %v1024
    %1041 = vmatprep.subr.bf16.mxu0 0
    %1042 = vmatpush1.bf16.msra.mxu0 %v1023
    %1043 = vmatprep.subr.bf16.mxu0 0
    %1044 = vmatpush1.bf16.msra.mxu0 %v1022
    %1045 = vmatprep.subr.bf16.mxu0 0
    %1046 = vmatpush1.bf16.msra.mxu0 %v1021
    %1047 = vmatprep.subr.bf16.mxu0 0
    %1048 = vmatpush1.bf16.msra.mxu0 %v1020
    %1049 = vmatprep.subr.bf16.mxu0 0
    %1050 = vmatpush1.bf16.msra.mxu0 %v1019
    %1051 = vmatprep.subr.bf16.mxu0 0
    %1052 = vmatpush2.bf16.msra.mxu0 0
    %1053 = vmatprep.subr.bf16.mxu0 0
    %1054 = vmatpush2.bf16.msra.mxu0 0
    %1055 = vmatprep.subr.bf16.mxu0 0
    %1056 = vmatpush2.bf16.msra.mxu0 0
    %1057 = vmatprep.subr.bf16.mxu0 0
    %1058 = vmatpush2.bf16.msra.mxu0 0
    %1059 = vmatprep.subr.bf16.mxu0 0
    %1060 = vmatpush2.bf16.msra.mxu0 0
    %1061 = vmatprep.subr.bf16.mxu0 0
    %1062 = vmatpush2.bf16.msra.mxu0 0
    %1063 = vmatprep.subr.bf16.mxu0 0
    %1064 = vmatpush2.bf16.msra.mxu0 0
    %1065 = vmatprep.subr.bf16.mxu0 0
    %1066 = vmatpush2.bf16.msra.mxu0 0
    %1067 = vmatprep.mubr.bf16.mxu0 0
    %1068 = vmatmul.mubr.bf16.gmra.mxu0 %v986
    %v1069 = vpop.f32.mrf.mxu0
    %v1070 = vadd.f32 0.0, %v1069
    %v1071 = vpop.f32.mrf.mxu0
    %v1072 = vpop.f32.mrf.mxu0
    %v1073 = vadd.f32 0.0, %v1072
    %v1074 = vpop.f32.mrf.mxu0
    %1075 = vdwg.mxu0
    %v1076 = vadd.f32 %v1070, %v1073
    %v1077 = vrot.slane %v1076, 4
    %v1078 = vadd.f32 %v1076, %v1077
    %v1079 = vrot.slane %v1078, 2
    %v1080 = vadd.f32 %v1078, %v1079
    %v1081 = vrot.slane %v1080, 1
    %v1082 = vadd.f32 %v1080, %v1081
    %v1083 = vmul.f32 %v1082, 0.125
    %v1084 = vmul.f32 %v1070, %v1070
    %v1085 = vmul.f32 %v1073, %v1073
    %v1086 = vadd.f32 %v1084, %v1085
    %v1087 = vrot.slane %v1086, 4
    %v1088 = vadd.f32 %v1086, %v1087
    %v1089 = vrot.slane %v1088, 2
    %v1090 = vadd.f32 %v1088, %v1089
    %v1091 = vrot.slane %v1090, 1
    %v1092 = vadd.f32 %v1090, %v1091
    %v1093 = vmul.f32 %v1092, 0.125
    %v1094 = vmul.f32 %v1083, %v1083
    %v1095 = vsub.f32 %v1093, %v1094
    %v1096 = vmax.f32 %v1095, 0.0
    %v1097 = vadd.f32 %v1096, 1e-05
    %v1098 = vrsqrt.pop %v1097
    %v1099 = vmul.f32 %v983, %v1098
    %v1100 = vmul.f32 %v1083, %v1099
    %v1101 = vsub.f32 %v985, %v1100
    %v1103 = vlaneseq
    %v1104 = vshrl.u32 %v1103, 7
    %v1105 = vsub.s32 0, %v1104
    %v1106 = vrot.slane %v1099, %v1105
    %v1108 = vmul.f32 %v1070, %v1106
    %v1109 = vmul.f32 %v1073, %v1106
    %v1111 = vlaneseq
    %v1112 = vshrl.u32 %v1111, 7
    %v1113 = vsub.s32 0, %v1112
    %v1114 = vrot.slane %v1101, %v1113
    %v1116 = vadd.f32 %v1108, %v1114
    %v1117 = vadd.f32 %v1109, %v1114
    %v1118 = vmax.f32 %v1116, 0.0
    %v1119 = vmax.f32 %v1117, 0.0
    %v1120 = vmul.f32 %v1118, %v91
    %v1121 = vmul.f32 %v1119, %v92
    %s1122 = scalar_lea.hbm %s2, 7168
    // Predicated region
    $region62: #{forward.1} parent=1 // pred_check
      _
    $region63: #{forward.1} parent=1 // pred_check_branch
      %1124 = sbr.rel target = $region65
    $region64: #{forward.1} parent=1 // pred_region
      %1125 = sst [smem:[#allocation14]] [#allocation29]
      %1126 = sst [smem:[#allocation15]] [#allocation28]
    $region65: #{forward.1} parent=1 // pred_fallthru
      _
    %1128 = shalt.err (0)
    %s1130 = sshll.u32 %s101, 4
    %s1131 = int_to_ptr.vmem [resolvable:$true] %s1130
    %1133 = dma.hbm_to_vmem [thread:$0]  %s1122, 1024, %s1131, %s102
    %s1134 = sshll.u32 %s115, 4
    %1135 = dma.done [#allocation4], %s1134
    %v1136 = vld [vmem:[#allocation3] sm:$0xf]
    %v1137 = vld [vmem:[#allocation3 + $0x4] sm:$0xf]
    %v1138 = vld [vmem:[#allocation3 + $0x8] sm:$0xf]
    %v1139 = vld [vmem:[#allocation3 + $0xc] sm:$0xf]
    %v1140 = vld [vmem:[#allocation3 + $0x10] sm:$0xf]
    %v1141 = vld [vmem:[#allocation3 + $0x14] sm:$0xf]
    %v1142 = vld [vmem:[#allocation3 + $0x18] sm:$0xf]
    %v1143 = vld [vmem:[#allocation3 + $0x1c] sm:$0xf]
    %v1144 = vld [vmem:[#allocation3 + $0x20] sm:$0xf]
    %v1145 = vld [vmem:[#allocation3 + $0x24] sm:$0xf]
    %v1146 = vld [vmem:[#allocation3 + $0x28] sm:$0xf]
    %v1147 = vld [vmem:[#allocation3 + $0x2c] sm:$0xf]
    %v1148 = vld [vmem:[#allocation3 + $0x30] sm:$0xf]
    %v1149 = vld [vmem:[#allocation3 + $0x34] sm:$0xf]
    %v1150 = vld [vmem:[#allocation3 + $0x38] sm:$0xf]
    %v1151 = vld [vmem:[#allocation3 + $0x3c] sm:$0xf]
    %s1152 = scalar_lea.vmem [#allocation9], 6
    %v1153 = vld [vmem:[%s1152] sm:$0x1]
    %s1154 = scalar_lea.vmem [#allocation10], 6
    %v1155 = vld [vmem:[%s1154] sm:$0x1]
    %v1156 = vpack.c.bf16 %v1121, %v1120
    %v1173 = vunpack.c.l.b16 %v1136
    %v1174 = vunpack.c.l.b16 %v1137
    %v1175 = vunpack.c.l.b16 %v1138
    %v1176 = vunpack.c.l.b16 %v1139
    %v1177 = vunpack.c.l.b16 %v1140
    %v1178 = vunpack.c.l.b16 %v1141
    %v1179 = vunpack.c.l.b16 %v1142
    %v1180 = vunpack.c.l.b16 %v1143
    %v1181 = vunpack.c.l.b16 %v1144
    %v1182 = vunpack.c.l.b16 %v1145
    %v1183 = vunpack.c.l.b16 %v1146
    %v1184 = vunpack.c.l.b16 %v1147
    %v1185 = vunpack.c.l.b16 %v1148
    %v1186 = vunpack.c.l.b16 %v1149
    %v1187 = vunpack.c.l.b16 %v1150
    %v1188 = vunpack.c.l.b16 %v1151
    %v1189 = vpack.c.b16 %v1174, %v1173
    %v1190 = vpack.c.b16 %v1176, %v1175
    %v1191 = vpack.c.b16 %v1178, %v1177
    %v1192 = vpack.c.b16 %v1180, %v1179
    %v1193 = vpack.c.b16 %v1182, %v1181
    %v1194 = vpack.c.b16 %v1184, %v1183
    %v1195 = vpack.c.b16 %v1186, %v1185
    %v1196 = vpack.c.b16 %v1188, %v1187
    %1205 = vmatprep.subr.bf16.mxu0 0
    %1206 = vmatpush1.bf16.msra.mxu0 %v1196
    %1207 = vmatprep.subr.bf16.mxu0 0
    %1208 = vmatpush1.bf16.msra.mxu0 %v1195
    %1209 = vmatprep.subr.bf16.mxu0 0
    %1210 = vmatpush1.bf16.msra.mxu0 %v1194
    %1211 = vmatprep.subr.bf16.mxu0 0
    %1212 = vmatpush1.bf16.msra.mxu0 %v1193
    %1213 = vmatprep.subr.bf16.mxu0 0
    %1214 = vmatpush1.bf16.msra.mxu0 %v1192
    %1215 = vmatprep.subr.bf16.mxu0 0
    %1216 = vmatpush1.bf16.msra.mxu0 %v1191
    %1217 = vmatprep.subr.bf16.mxu0 0
    %1218 = vmatpush1.bf16.msra.mxu0 %v1190
    %1219 = vmatprep.subr.bf16.mxu0 0
    %1220 = vmatpush1.bf16.msra.mxu0 %v1189
    %1221 = vmatprep.subr.bf16.mxu0 0
    %1222 = vmatpush2.bf16.msra.mxu0 0
    %1223 = vmatprep.subr.bf16.mxu0 0
    %1224 = vmatpush2.bf16.msra.mxu0 0
    %1225 = vmatprep.subr.bf16.mxu0 0
    %1226 = vmatpush2.bf16.msra.mxu0 0
    %1227 = vmatprep.subr.bf16.mxu0 0
    %1228 = vmatpush2.bf16.msra.mxu0 0
    %1229 = vmatprep.subr.bf16.mxu0 0
    %1230 = vmatpush2.bf16.msra.mxu0 0
    %1231 = vmatprep.subr.bf16.mxu0 0
    %1232 = vmatpush2.bf16.msra.mxu0 0
    %1233 = vmatprep.subr.bf16.mxu0 0
    %1234 = vmatpush2.bf16.msra.mxu0 0
    %1235 = vmatprep.subr.bf16.mxu0 0
    %1236 = vmatpush2.bf16.msra.mxu0 0
    %1237 = vmatprep.mubr.bf16.mxu0 0
    %1238 = vmatmul.mubr.bf16.gmra.mxu0 %v1156
    %v1239 = vpop.f32.mrf.mxu0
    %v1240 = vadd.f32 0.0, %v1239
    %v1241 = vpop.f32.mrf.mxu0
    %v1242 = vpop.f32.mrf.mxu0
    %v1243 = vadd.f32 0.0, %v1242
    %v1244 = vpop.f32.mrf.mxu0
    %1245 = vdwg.mxu0
    %v1246 = vadd.f32 %v1240, %v1243
    %v1247 = vrot.slane %v1246, 4
    %v1248 = vadd.f32 %v1246, %v1247
    %v1249 = vrot.slane %v1248, 2
    %v1250 = vadd.f32 %v1248, %v1249
    %v1251 = vrot.slane %v1250, 1
    %v1252 = vadd.f32 %v1250, %v1251
    %v1253 = vmul.f32 %v1252, 0.125
    %v1254 = vmul.f32 %v1240, %v1240
    %v1255 = vmul.f32 %v1243, %v1243
    %v1256 = vadd.f32 %v1254, %v1255
    %v1257 = vrot.slane %v1256, 4
    %v1258 = vadd.f32 %v1256, %v1257
    %v1259 = vrot.slane %v1258, 2
    %v1260 = vadd.f32 %v1258, %v1259
    %v1261 = vrot.slane %v1260, 1
    %v1262 = vadd.f32 %v1260, %v1261
    %v1263 = vmul.f32 %v1262, 0.125
    %v1264 = vmul.f32 %v1253, %v1253
    %v1265 = vsub.f32 %v1263, %v1264
    %v1266 = vmax.f32 %v1265, 0.0
    %v1267 = vadd.f32 %v1266, 1e-05
    %v1268 = vrsqrt.pop %v1267
    %v1269 = vmul.f32 %v1153, %v1268
    %v1270 = vmul.f32 %v1253, %v1269
    %v1271 = vsub.f32 %v1155, %v1270
    %v1273 = vlaneseq
    %v1274 = vshrl.u32 %v1273, 7
    %v1275 = vsub.s32 0, %v1274
    %v1276 = vrot.slane %v1269, %v1275
    %v1278 = vmul.f32 %v1240, %v1276
    %v1279 = vmul.f32 %v1243, %v1276
    %v1281 = vlaneseq
    %v1282 = vshrl.u32 %v1281, 7
    %v1283 = vsub.s32 0, %v1282
    %v1284 = vrot.slane %v1271, %v1283
    %v1286 = vadd.f32 %v1278, %v1284
    %v1287 = vadd.f32 %v1279, %v1284
    %v1288 = vmax.f32 %v1286, 0.0
    %v1289 = vmax.f32 %v1287, 0.0
    %v1290 = vmul.f32 %v1288, %v91
    %v1291 = vmul.f32 %v1289, %v92
    %s1292 = scalar_lea.hbm %s2, 8192
    // Predicated region
    $region66: #{forward.1} parent=1 // pred_check
      _
    $region67: #{forward.1} parent=1 // pred_check_branch
      %1294 = sbr.rel target = $region69
    $region68: #{forward.1} parent=1 // pred_region
      %1295 = sst [smem:[#allocation14]] [#allocation31]
      %1296 = sst [smem:[#allocation15]] [#allocation30]
    $region69: #{forward.1} parent=1 // pred_fallthru
      _
    %1298 = shalt.err (0)
    %s1300 = sshll.u32 [#allocation3], 4
    %s1301 = int_to_ptr.vmem [resolvable:$true] %s1300
    %1303 = dma.hbm_to_vmem [thread:$0]  %s1292, 1024, %s1301, [#allocation4]
    %s1304 = sshll.u32 %s115, 4
    %1305 = dma.done %s102, %s1304
    %v1306 = vld [vmem:[%s101] sm:$0xf]
    %v1307 = vld [vmem:[%s101 + $0x4] sm:$0xf]
    %v1308 = vld [vmem:[%s101 + $0x8] sm:$0xf]
    %v1309 = vld [vmem:[%s101 + $0xc] sm:$0xf]
    %v1310 = vld [vmem:[%s101 + $0x10] sm:$0xf]
    %v1311 = vld [vmem:[%s101 + $0x14] sm:$0xf]
    %v1312 = vld [vmem:[%s101 + $0x18] sm:$0xf]
    %v1313 = vld [vmem:[%s101 + $0x1c] sm:$0xf]
    %v1314 = vld [vmem:[%s101 + $0x20] sm:$0xf]
    %v1315 = vld [vmem:[%s101 + $0x24] sm:$0xf]
    %v1316 = vld [vmem:[%s101 + $0x28] sm:$0xf]
    %v1317 = vld [vmem:[%s101 + $0x2c] sm:$0xf]
    %v1318 = vld [vmem:[%s101 + $0x30] sm:$0xf]
    %v1319 = vld [vmem:[%s101 + $0x34] sm:$0xf]
    %v1320 = vld [vmem:[%s101 + $0x38] sm:$0xf]
    %v1321 = vld [vmem:[%s101 + $0x3c] sm:$0xf]
    %s1322 = scalar_lea.vmem [#allocation10], 7
    %v1323 = vld [vmem:[%s1322] sm:$0x1]
    %v1324 = vpack.c.bf16 %v1291, %v1290
    %v1326 = vlaneseq
    %v1327 = vshrl.u32 %v1326, 7
    %v1328 = vsub.s32 0, %v1327
    %v1329 = vrot.slane %v1323, %v1328
    %v1347 = vunpack.c.l.b16 %v1306
    %v1348 = vunpack.c.l.b16 %v1307
    %v1349 = vunpack.c.l.b16 %v1308
    %v1350 = vunpack.c.l.b16 %v1309
    %v1351 = vunpack.c.l.b16 %v1310
    %v1352 = vunpack.c.l.b16 %v1311
    %v1353 = vunpack.c.l.b16 %v1312
    %v1354 = vunpack.c.l.b16 %v1313
    %v1355 = vunpack.c.l.b16 %v1314
    %v1356 = vunpack.c.l.b16 %v1315
    %v1357 = vunpack.c.l.b16 %v1316
    %v1358 = vunpack.c.l.b16 %v1317
    %v1359 = vunpack.c.l.b16 %v1318
    %v1360 = vunpack.c.l.b16 %v1319
    %v1361 = vunpack.c.l.b16 %v1320
    %v1362 = vunpack.c.l.b16 %v1321
    %v1363 = vpack.c.b16 %v1348, %v1347
    %v1364 = vpack.c.b16 %v1350, %v1349
    %v1365 = vpack.c.b16 %v1352, %v1351
    %v1366 = vpack.c.b16 %v1354, %v1353
    %v1367 = vpack.c.b16 %v1356, %v1355
    %v1368 = vpack.c.b16 %v1358, %v1357
    %v1369 = vpack.c.b16 %v1360, %v1359
    %v1370 = vpack.c.b16 %v1362, %v1361
    %1379 = vmatprep.subr.bf16.mxu0 0
    %1380 = vmatpush1.bf16.msra.mxu0 %v1370
    %1381 = vmatprep.subr.bf16.mxu0 0
    %1382 = vmatpush1.bf16.msra.mxu0 %v1369
    %1383 = vmatprep.subr.bf16.mxu0 0
    %1384 = vmatpush1.bf16.msra.mxu0 %v1368
    %1385 = vmatprep.subr.bf16.mxu0 0
    %1386 = vmatpush1.bf16.msra.mxu0 %v1367
    %1387 = vmatprep.subr.bf16.mxu0 0
    %1388 = vmatpush1.bf16.msra.mxu0 %v1366
    %1389 = vmatprep.subr.bf16.mxu0 0
    %1390 = vmatpush1.bf16.msra.mxu0 %v1365
    %1391 = vmatprep.subr.bf16.mxu0 0
    %1392 = vmatpush1.bf16.msra.mxu0 %v1364
    %1393 = vmatprep.subr.bf16.mxu0 0
    %1394 = vmatpush1.bf16.msra.mxu0 %v1363
    %1395 = vmatprep.subr.bf16.mxu0 0
    %1396 = vmatpush2.bf16.msra.mxu0 0
    %1397 = vmatprep.subr.bf16.mxu0 0
    %1398 = vmatpush2.bf16.msra.mxu0 0
    %1399 = vmatprep.subr.bf16.mxu0 0
    %1400 = vmatpush2.bf16.msra.mxu0 0
    %1401 = vmatprep.subr.bf16.mxu0 0
    %1402 = vmatpush2.bf16.msra.mxu0 0
    %1403 = vmatprep.subr.bf16.mxu0 0
    %1404 = vmatpush2.bf16.msra.mxu0 0
    %1405 = vmatprep.subr.bf16.mxu0 0
    %1406 = vmatpush2.bf16.msra.mxu0 0
    %1407 = vmatprep.subr.bf16.mxu0 0
    %1408 = vmatpush2.bf16.msra.mxu0 0
    %1409 = vmatprep.subr.bf16.mxu0 0
    %1410 = vmatpush2.bf16.msra.mxu0 0
    %1411 = vmatprep.mubr.bf16.mxu0 0
    %1412 = vmatmul.mubr.bf16.gmra.mxu0 %v1324
    %v1413 = vpop.f32.mrf.mxu0
    %v1414 = vadd.f32 %v1329, %v1413
    %v1415 = vpop.f32.mrf.mxu0
    %v1416 = vpop.f32.mrf.mxu0
    %v1417 = vadd.f32 %v1329, %v1416
    %v1418 = vpop.f32.mrf.mxu0
    %1419 = vdwg.mxu0
    %1420 = vst [vmem:[%s6] sm:$0xff] %v1414
    %1421 = vst [vmem:[%s6 + $0x8] sm:$0xff] %v1417
    %s1422 = scalar_lea.hbm %s2, 9216
    // Predicated region
    $region70: #{forward.1} parent=1 // pred_check
      _
    $region71: #{forward.1} parent=1 // pred_check_branch
      %1424 = sbr.rel target = $region73
    $region72: #{forward.1} parent=1 // pred_region
      %1425 = sst [smem:[#allocation14]] [#allocation33]
      %1426 = sst [smem:[#allocation15]] [#allocation32]
    $region73: #{forward.1} parent=1 // pred_fallthru
      _
    %1428 = shalt.err (0)
    %s1430 = sshll.u32 %s101, 4
    %s1431 = int_to_ptr.vmem [resolvable:$true] %s1430
    %1433 = dma.hbm_to_vmem [thread:$0]  %s1422, 1024, %s1431, %s102
    %s1434 = sshll.u32 %s115, 4
    %1435 = dma.done [#allocation4], %s1434
    %v1436 = vld [vmem:[#allocation3] sm:$0xf]
    %v1437 = vld [vmem:[#allocation3 + $0x4] sm:$0xf]
    %v1438 = vld [vmem:[#allocation3 + $0x8] sm:$0xf]
    %v1439 = vld [vmem:[#allocation3 + $0xc] sm:$0xf]
    %v1440 = vld [vmem:[#allocation3 + $0x10] sm:$0xf]
    %v1441 = vld [vmem:[#allocation3 + $0x14] sm:$0xf]
    %v1442 = vld [vmem:[#allocation3 + $0x18] sm:$0xf]
    %v1443 = vld [vmem:[#allocation3 + $0x1c] sm:$0xf]
    %v1444 = vld [vmem:[#allocation3 + $0x20] sm:$0xf]
    %v1445 = vld [vmem:[#allocation3 + $0x24] sm:$0xf]
    %v1446 = vld [vmem:[#allocation3 + $0x28] sm:$0xf]
    %v1447 = vld [vmem:[#allocation3 + $0x2c] sm:$0xf]
    %v1448 = vld [vmem:[#allocation3 + $0x30] sm:$0xf]
    %v1449 = vld [vmem:[#allocation3 + $0x34] sm:$0xf]
    %v1450 = vld [vmem:[#allocation3 + $0x38] sm:$0xf]
    %v1451 = vld [vmem:[#allocation3 + $0x3c] sm:$0xf]
    %s1452 = scalar_lea.vmem [#allocation10], 8
    %v1453 = vld [vmem:[%s1452] sm:$0x1]
    %v1455 = vlaneseq
    %v1456 = vshrl.u32 %v1455, 7
    %v1457 = vsub.s32 0, %v1456
    %v1458 = vrot.slane %v1453, %v1457
    %v1476 = vunpack.c.l.b16 %v1436
    %v1477 = vunpack.c.l.b16 %v1437
    %v1478 = vunpack.c.l.b16 %v1438
    %v1479 = vunpack.c.l.b16 %v1439
    %v1480 = vunpack.c.l.b16 %v1440
    %v1481 = vunpack.c.l.b16 %v1441
    %v1482 = vunpack.c.l.b16 %v1442
    %v1483 = vunpack.c.l.b16 %v1443
    %v1484 = vunpack.c.l.b16 %v1444
    %v1485 = vunpack.c.l.b16 %v1445
    %v1486 = vunpack.c.l.b16 %v1446
    %v1487 = vunpack.c.l.b16 %v1447
    %v1488 = vunpack.c.l.b16 %v1448
    %v1489 = vunpack.c.l.b16 %v1449
    %v1490 = vunpack.c.l.b16 %v1450
    %v1491 = vunpack.c.l.b16 %v1451
    %v1492 = vpack.c.b16 %v1477, %v1476
    %v1493 = vpack.c.b16 %v1479, %v1478
    %v1494 = vpack.c.b16 %v1481, %v1480
    %v1495 = vpack.c.b16 %v1483, %v1482
    %v1496 = vpack.c.b16 %v1485, %v1484
    %v1497 = vpack.c.b16 %v1487, %v1486
    %v1498 = vpack.c.b16 %v1489, %v1488
    %v1499 = vpack.c.b16 %v1491, %v1490
    %1508 = vmatprep.subr.bf16.mxu0 0
    %1509 = vmatpush1.bf16.msra.mxu0 %v1499
    %1510 = vmatprep.subr.bf16.mxu0 0
    %1511 = vmatpush1.bf16.msra.mxu0 %v1498
    %1512 = vmatprep.subr.bf16.mxu0 0
    %1513 = vmatpush1.bf16.msra.mxu0 %v1497
    %1514 = vmatprep.subr.bf16.mxu0 0
    %1515 = vmatpush1.bf16.msra.mxu0 %v1496
    %1516 = vmatprep.subr.bf16.mxu0 0
    %1517 = vmatpush1.bf16.msra.mxu0 %v1495
    %1518 = vmatprep.subr.bf16.mxu0 0
    %1519 = vmatpush1.bf16.msra.mxu0 %v1494
    %1520 = vmatprep.subr.bf16.mxu0 0
    %1521 = vmatpush1.bf16.msra.mxu0 %v1493
    %1522 = vmatprep.subr.bf16.mxu0 0
    %1523 = vmatpush1.bf16.msra.mxu0 %v1492
    %1524 = vmatprep.subr.bf16.mxu0 0
    %1525 = vmatpush2.bf16.msra.mxu0 0
    %1526 = vmatprep.subr.bf16.mxu0 0
    %1527 = vmatpush2.bf16.msra.mxu0 0
    %1528 = vmatprep.subr.bf16.mxu0 0
    %1529 = vmatpush2.bf16.msra.mxu0 0
    %1530 = vmatprep.subr.bf16.mxu0 0
    %1531 = vmatpush2.bf16.msra.mxu0 0
    %1532 = vmatprep.subr.bf16.mxu0 0
    %1533 = vmatpush2.bf16.msra.mxu0 0
    %1534 = vmatprep.subr.bf16.mxu0 0
    %1535 = vmatpush2.bf16.msra.mxu0 0
    %1536 = vmatprep.subr.bf16.mxu0 0
    %1537 = vmatpush2.bf16.msra.mxu0 0
    %1538 = vmatprep.subr.bf16.mxu0 0
    %1539 = vmatpush2.bf16.msra.mxu0 0
    %1540 = vmatprep.mubr.bf16.mxu0 0
    %1541 = vmatmul.mubr.bf16.gmra.mxu0 %v1324
    %v1542 = vpop.f32.mrf.mxu0
    %v1543 = vadd.f32 %v1458, %v1542
    %v1544 = vpop.f32.mrf.mxu0
    %v1545 = vpop.f32.mrf.mxu0
    %v1546 = vadd.f32 %v1458, %v1545
    %v1547 = vpop.f32.mrf.mxu0
    %1548 = vdwg.mxu0
    %1549 = vst [vmem:[%s7] sm:$0xff] %v1543
    %1550 = vst [vmem:[%s7 + $0x8] sm:$0xff] %v1546
    %1551 = vst [vmem:[#allocation2] sm:$0xff] 0.0
    %1552 = vst [vmem:[#allocation2 + $0x8] sm:$0xff] 0.0
    %v1553 = vld [vmem:[#allocation7] sm:$0xff]
    %vm1554 = vcmask 261120
    %1555 = vst.msk [vmem:[#allocation2] sm:$0xff] %vm1554, %v1553
    %v1556 = vld [vmem:[#allocation2] sm:$0xff]
    %v1557 = vld [vmem:[#allocation2 + $0x8] sm:$0xff]
    %v1558 = vmul.f32 %v1543, 0.5
    %v1559 = vmul.f32 %v1546, 0.5
    %v1560 = vmul.f32 %v1558, 1.442695
    %v1561 = vpow.pop %v1560
    %v1562 = vmul.f32 %v1559, 1.442695
    %v1563 = vpow.pop %v1562
    %v1564 = vmul.f32 %v1556, %v1561
    %v1565 = vmul.f32 %v1557, %v1563
    %v1566 = vadd.f32 %v1414, %v1564
    %v1567 = vadd.f32 %v1417, %v1565
    %v1568 = vmul.f32 %v1566, %v91
    %v1569 = vmul.f32 %v1567, %v92
    %s1570 = scalar_lea.hbm %s2, 10240
    // Predicated region
    $region74: #{forward.1} parent=1 // pred_check
      _
    $region75: #{forward.1} parent=1 // pred_check_branch
      %1572 = sbr.rel target = $region77
    $region76: #{forward.1} parent=1 // pred_region
      %1573 = sst [smem:[#allocation14]] [#allocation35]
      %1574 = sst [smem:[#allocation15]] [#allocation34]
    $region77: #{forward.1} parent=1 // pred_fallthru
      _
    %1576 = shalt.err (0)
    %s1578 = sshll.u32 [#allocation3], 4
    %s1579 = int_to_ptr.vmem [resolvable:$true] %s1578
    %1581 = dma.hbm_to_vmem [thread:$0]  %s1570, 1024, %s1579, [#allocation4]
    %s1582 = sshll.u32 %s115, 4
    %1583 = dma.done %s102, %s1582
    %v1584 = vld [vmem:[%s101] sm:$0xf]
    %v1585 = vld [vmem:[%s101 + $0x4] sm:$0xf]
    %v1586 = vld [vmem:[%s101 + $0x8] sm:$0xf]
    %v1587 = vld [vmem:[%s101 + $0xc] sm:$0xf]
    %v1588 = vld [vmem:[%s101 + $0x10] sm:$0xf]
    %v1589 = vld [vmem:[%s101 + $0x14] sm:$0xf]
    %v1590 = vld [vmem:[%s101 + $0x18] sm:$0xf]
    %v1591 = vld [vmem:[%s101 + $0x1c] sm:$0xf]
    %v1592 = vld [vmem:[%s101 + $0x20] sm:$0xf]
    %v1593 = vld [vmem:[%s101 + $0x24] sm:$0xf]
    %v1594 = vld [vmem:[%s101 + $0x28] sm:$0xf]
    %v1595 = vld [vmem:[%s101 + $0x2c] sm:$0xf]
    %v1596 = vld [vmem:[%s101 + $0x30] sm:$0xf]
    %v1597 = vld [vmem:[%s101 + $0x34] sm:$0xf]
    %v1598 = vld [vmem:[%s101 + $0x38] sm:$0xf]
    %v1599 = vld [vmem:[%s101 + $0x3c] sm:$0xf]
    %s1600 = scalar_lea.vmem [#allocation9], 9
    %v1601 = vld [vmem:[%s1600] sm:$0x1]
    %s1602 = scalar_lea.vmem [#allocation10], 9
    %v1603 = vld [vmem:[%s1602] sm:$0x1]
    %v1604 = vpack.c.bf16 %v1569, %v1568
    %v1621 = vunpack.c.l.b16 %v1584
    %v1622 = vunpack.c.l.b16 %v1585
    %v1623 = vunpack.c.l.b16 %v1586
    %v1624 = vunpack.c.l.b16 %v1587
    %v1625 = vunpack.c.l.b16 %v1588
    %v1626 = vunpack.c.l.b16 %v1589
    %v1627 = vunpack.c.l.b16 %v1590
    %v1628 = vunpack.c.l.b16 %v1591
    %v1629 = vunpack.c.l.b16 %v1592
    %v1630 = vunpack.c.l.b16 %v1593
    %v1631 = vunpack.c.l.b16 %v1594
    %v1632 = vunpack.c.l.b16 %v1595
    %v1633 = vunpack.c.l.b16 %v1596
    %v1634 = vunpack.c.l.b16 %v1597
    %v1635 = vunpack.c.l.b16 %v1598
    %v1636 = vunpack.c.l.b16 %v1599
    %v1637 = vpack.c.b16 %v1622, %v1621
    %v1638 = vpack.c.b16 %v1624, %v1623
    %v1639 = vpack.c.b16 %v1626, %v1625
    %v1640 = vpack.c.b16 %v1628, %v1627
    %v1641 = vpack.c.b16 %v1630, %v1629
    %v1642 = vpack.c.b16 %v1632, %v1631
    %v1643 = vpack.c.b16 %v1634, %v1633
    %v1644 = vpack.c.b16 %v1636, %v1635
    %1653 = vmatprep.subr.bf16.mxu0 0
    %1654 = vmatpush1.bf16.msra.mxu0 %v1644
    %1655 = vmatprep.subr.bf16.mxu0 0
    %1656 = vmatpush1.bf16.msra.mxu0 %v1643
    %1657 = vmatprep.subr.bf16.mxu0 0
    %1658 = vmatpush1.bf16.msra.mxu0 %v1642
    %1659 = vmatprep.subr.bf16.mxu0 0
    %1660 = vmatpush1.bf16.msra.mxu0 %v1641
    %1661 = vmatprep.subr.bf16.mxu0 0
    %1662 = vmatpush1.bf16.msra.mxu0 %v1640
    %1663 = vmatprep.subr.bf16.mxu0 0
    %1664 = vmatpush1.bf16.msra.mxu0 %v1639
    %1665 = vmatprep.subr.bf16.mxu0 0
    %1666 = vmatpush1.bf16.msra.mxu0 %v1638
    %1667 = vmatprep.subr.bf16.mxu0 0
    %1668 = vmatpush1.bf16.msra.mxu0 %v1637
    %1669 = vmatprep.subr.bf16.mxu0 0
    %1670 = vmatpush2.bf16.msra.mxu0 0
    %1671 = vmatprep.subr.bf16.mxu0 0
    %1672 = vmatpush2.bf16.msra.mxu0 0
    %1673 = vmatprep.subr.bf16.mxu0 0
    %1674 = vmatpush2.bf16.msra.mxu0 0
    %1675 = vmatprep.subr.bf16.mxu0 0
    %1676 = vmatpush2.bf16.msra.mxu0 0
    %1677 = vmatprep.subr.bf16.mxu0 0
    %1678 = vmatpush2.bf16.msra.mxu0 0
    %1679 = vmatprep.subr.bf16.mxu0 0
    %1680 = vmatpush2.bf16.msra.mxu0 0
    %1681 = vmatprep.subr.bf16.mxu0 0
    %1682 = vmatpush2.bf16.msra.mxu0 0
    %1683 = vmatprep.subr.bf16.mxu0 0
    %1684 = vmatpush2.bf16.msra.mxu0 0
    %1685 = vmatprep.mubr.bf16.mxu0 0
    %1686 = vmatmul.mubr.bf16.gmra.mxu0 %v1604
    %v1687 = vpop.f32.mrf.mxu0
    %v1688 = vadd.f32 0.0, %v1687
    %v1689 = vpop.f32.mrf.mxu0
    %v1690 = vpop.f32.mrf.mxu0
    %v1691 = vadd.f32 0.0, %v1690
    %v1692 = vpop.f32.mrf.mxu0
    %1693 = vdwg.mxu0
    %v1694 = vadd.f32 %v1688, %v1691
    %v1695 = vrot.slane %v1694, 4
    %v1696 = vadd.f32 %v1694, %v1695
    %v1697 = vrot.slane %v1696, 2
    %v1698 = vadd.f32 %v1696, %v1697
    %v1699 = vrot.slane %v1698, 1
    %v1700 = vadd.f32 %v1698, %v1699
    %v1701 = vmul.f32 %v1700, 0.125
    %v1702 = vmul.f32 %v1688, %v1688
    %v1703 = vmul.f32 %v1691, %v1691
    %v1704 = vadd.f32 %v1702, %v1703
    %v1705 = vrot.slane %v1704, 4
    %v1706 = vadd.f32 %v1704, %v1705
    %v1707 = vrot.slane %v1706, 2
    %v1708 = vadd.f32 %v1706, %v1707
    %v1709 = vrot.slane %v1708, 1
    %v1710 = vadd.f32 %v1708, %v1709
    %v1711 = vmul.f32 %v1710, 0.125
    %v1712 = vmul.f32 %v1701, %v1701
    %v1713 = vsub.f32 %v1711, %v1712
    %v1714 = vmax.f32 %v1713, 0.0
    %v1715 = vadd.f32 %v1714, 1e-05
    %v1716 = vrsqrt.pop %v1715
    %v1717 = vmul.f32 %v1601, %v1716
    %v1718 = vmul.f32 %v1701, %v1717
    %v1719 = vsub.f32 %v1603, %v1718
    %v1721 = vlaneseq
    %v1722 = vshrl.u32 %v1721, 7
    %v1723 = vsub.s32 0, %v1722
    %v1724 = vrot.slane %v1717, %v1723
    %v1726 = vmul.f32 %v1688, %v1724
    %v1727 = vmul.f32 %v1691, %v1724
    %v1729 = vlaneseq
    %v1730 = vshrl.u32 %v1729, 7
    %v1731 = vsub.s32 0, %v1730
    %v1732 = vrot.slane %v1719, %v1731
    %v1734 = vadd.f32 %v1726, %v1732
    %v1735 = vadd.f32 %v1727, %v1732
    %v1736 = vmax.f32 %v1734, 0.0
    %v1737 = vmax.f32 %v1735, 0.0
    %v1738 = vmul.f32 %v1736, %v91
    %v1739 = vmul.f32 %v1737, %v92
    %s1740 = scalar_lea.hbm %s2, 11264
    // Predicated region
    $region78: #{forward.1} parent=1 // pred_check
      _
    $region79: #{forward.1} parent=1 // pred_check_branch
      %1742 = sbr.rel target = $region81
    $region80: #{forward.1} parent=1 // pred_region
      %1743 = sst [smem:[#allocation14]] [#allocation37]
      %1744 = sst [smem:[#allocation15]] [#allocation36]
    $region81: #{forward.1} parent=1 // pred_fallthru
      _
    %1746 = shalt.err (0)
    %s1748 = sshll.u32 %s101, 4
    %s1749 = int_to_ptr.vmem [resolvable:$true] %s1748
    %1751 = dma.hbm_to_vmem [thread:$0]  %s1740, 1024, %s1749, %s102
    %s1752 = sshll.u32 %s115, 4
    %1753 = dma.done [#allocation4], %s1752
    %v1754 = vld [vmem:[#allocation3] sm:$0xf]
    %v1755 = vld [vmem:[#allocation3 + $0x4] sm:$0xf]
    %v1756 = vld [vmem:[#allocation3 + $0x8] sm:$0xf]
    %v1757 = vld [vmem:[#allocation3 + $0xc] sm:$0xf]
    %v1758 = vld [vmem:[#allocation3 + $0x10] sm:$0xf]
    %v1759 = vld [vmem:[#allocation3 + $0x14] sm:$0xf]
    %v1760 = vld [vmem:[#allocation3 + $0x18] sm:$0xf]
    %v1761 = vld [vmem:[#allocation3 + $0x1c] sm:$0xf]
    %v1762 = vld [vmem:[#allocation3 + $0x20] sm:$0xf]
    %v1763 = vld [vmem:[#allocation3 + $0x24] sm:$0xf]
    %v1764 = vld [vmem:[#allocation3 + $0x28] sm:$0xf]
    %v1765 = vld [vmem:[#allocation3 + $0x2c] sm:$0xf]
    %v1766 = vld [vmem:[#allocation3 + $0x30] sm:$0xf]
    %v1767 = vld [vmem:[#allocation3 + $0x34] sm:$0xf]
    %v1768 = vld [vmem:[#allocation3 + $0x38] sm:$0xf]
    %v1769 = vld [vmem:[#allocation3 + $0x3c] sm:$0xf]
    %s1770 = scalar_lea.vmem [#allocation9], 10
    %v1771 = vld [vmem:[%s1770] sm:$0x1]
    %s1772 = scalar_lea.vmem [#allocation10], 10
    %v1773 = vld [vmem:[%s1772] sm:$0x1]
    %v1774 = vpack.c.bf16 %v1739, %v1738
    %v1791 = vunpack.c.l.b16 %v1754
    %v1792 = vunpack.c.l.b16 %v1755
    %v1793 = vunpack.c.l.b16 %v1756
    %v1794 = vunpack.c.l.b16 %v1757
    %v1795 = vunpack.c.l.b16 %v1758
    %v1796 = vunpack.c.l.b16 %v1759
    %v1797 = vunpack.c.l.b16 %v1760
    %v1798 = vunpack.c.l.b16 %v1761
    %v1799 = vunpack.c.l.b16 %v1762
    %v1800 = vunpack.c.l.b16 %v1763
    %v1801 = vunpack.c.l.b16 %v1764
    %v1802 = vunpack.c.l.b16 %v1765
    %v1803 = vunpack.c.l.b16 %v1766
    %v1804 = vunpack.c.l.b16 %v1767
    %v1805 = vunpack.c.l.b16 %v1768
    %v1806 = vunpack.c.l.b16 %v1769
    %v1807 = vpack.c.b16 %v1792, %v1791
    %v1808 = vpack.c.b16 %v1794, %v1793
    %v1809 = vpack.c.b16 %v1796, %v1795
    %v1810 = vpack.c.b16 %v1798, %v1797
    %v1811 = vpack.c.b16 %v1800, %v1799
    %v1812 = vpack.c.b16 %v1802, %v1801
    %v1813 = vpack.c.b16 %v1804, %v1803
    %v1814 = vpack.c.b16 %v1806, %v1805
    %1823 = vmatprep.subr.bf16.mxu0 0
    %1824 = vmatpush1.bf16.msra.mxu0 %v1814
    %1825 = vmatprep.subr.bf16.mxu0 0
    %1826 = vmatpush1.bf16.msra.mxu0 %v1813
    %1827 = vmatprep.subr.bf16.mxu0 0
    %1828 = vmatpush1.bf16.msra.mxu0 %v1812
    %1829 = vmatprep.subr.bf16.mxu0 0
    %1830 = vmatpush1.bf16.msra.mxu0 %v1811
    %1831 = vmatprep.subr.bf16.mxu0 0
    %1832 = vmatpush1.bf16.msra.mxu0 %v1810
    %1833 = vmatprep.subr.bf16.mxu0 0
    %1834 = vmatpush1.bf16.msra.mxu0 %v1809
    %1835 = vmatprep.subr.bf16.mxu0 0
    %1836 = vmatpush1.bf16.msra.mxu0 %v1808
    %1837 = vmatprep.subr.bf16.mxu0 0
    %1838 = vmatpush1.bf16.msra.mxu0 %v1807
    %1839 = vmatprep.subr.bf16.mxu0 0
    %1840 = vmatpush2.bf16.msra.mxu0 0
    %1841 = vmatprep.subr.bf16.mxu0 0
    %1842 = vmatpush2.bf16.msra.mxu0 0
    %1843 = vmatprep.subr.bf16.mxu0 0
    %1844 = vmatpush2.bf16.msra.mxu0 0
    %1845 = vmatprep.subr.bf16.mxu0 0
    %1846 = vmatpush2.bf16.msra.mxu0 0
    %1847 = vmatprep.subr.bf16.mxu0 0
    %1848 = vmatpush2.bf16.msra.mxu0 0
    %1849 = vmatprep.subr.bf16.mxu0 0
    %1850 = vmatpush2.bf16.msra.mxu0 0
    %1851 = vmatprep.subr.bf16.mxu0 0
    %1852 = vmatpush2.bf16.msra.mxu0 0
    %1853 = vmatprep.subr.bf16.mxu0 0
    %1854 = vmatpush2.bf16.msra.mxu0 0
    %1855 = vmatprep.mubr.bf16.mxu0 0
    %1856 = vmatmul.mubr.bf16.gmra.mxu0 %v1774
    %v1857 = vpop.f32.mrf.mxu0
    %v1858 = vadd.f32 0.0, %v1857
    %v1859 = vpop.f32.mrf.mxu0
    %v1860 = vpop.f32.mrf.mxu0
    %v1861 = vadd.f32 0.0, %v1860
    %v1862 = vpop.f32.mrf.mxu0
    %1863 = vdwg.mxu0
    %v1864 = vadd.f32 %v1858, %v1861
    %v1865 = vrot.slane %v1864, 4
    %v1866 = vadd.f32 %v1864, %v1865
    %v1867 = vrot.slane %v1866, 2
    %v1868 = vadd.f32 %v1866, %v1867
    %v1869 = vrot.slane %v1868, 1
    %v1870 = vadd.f32 %v1868, %v1869
    %v1871 = vmul.f32 %v1870, 0.125
    %v1872 = vmul.f32 %v1858, %v1858
    %v1873 = vmul.f32 %v1861, %v1861
    %v1874 = vadd.f32 %v1872, %v1873
    %v1875 = vrot.slane %v1874, 4
    %v1876 = vadd.f32 %v1874, %v1875
    %v1877 = vrot.slane %v1876, 2
    %v1878 = vadd.f32 %v1876, %v1877
    %v1879 = vrot.slane %v1878, 1
    %v1880 = vadd.f32 %v1878, %v1879
    %v1881 = vmul.f32 %v1880, 0.125
    %v1882 = vmul.f32 %v1871, %v1871
    %v1883 = vsub.f32 %v1881, %v1882
    %v1884 = vmax.f32 %v1883, 0.0
    %v1885 = vadd.f32 %v1884, 1e-05
    %v1886 = vrsqrt.pop %v1885
    %v1887 = vmul.f32 %v1771, %v1886
    %v1888 = vmul.f32 %v1871, %v1887
    %v1889 = vsub.f32 %v1773, %v1888
    %v1891 = vlaneseq
    %v1892 = vshrl.u32 %v1891, 7
    %v1893 = vsub.s32 0, %v1892
    %v1894 = vrot.slane %v1887, %v1893
    %v1896 = vmul.f32 %v1858, %v1894
    %v1897 = vmul.f32 %v1861, %v1894
    %v1899 = vlaneseq
    %v1900 = vshrl.u32 %v1899, 7
    %v1901 = vsub.s32 0, %v1900
    %v1902 = vrot.slane %v1889, %v1901
    %v1904 = vadd.f32 %v1896, %v1902
    %v1905 = vadd.f32 %v1897, %v1902
    %v1906 = vmax.f32 %v1904, 0.0
    %v1907 = vmax.f32 %v1905, 0.0
    %v1908 = vmul.f32 %v1906, %v91
    %v1909 = vmul.f32 %v1907, %v92
    %s1910 = scalar_lea.hbm %s2, 12288
    // Predicated region
    $region82: #{forward.1} parent=1 // pred_check
      _
    $region83: #{forward.1} parent=1 // pred_check_branch
      %1912 = sbr.rel target = $region85
    $region84: #{forward.1} parent=1 // pred_region
      %1913 = sst [smem:[#allocation14]] [#allocation39]
      %1914 = sst [smem:[#allocation15]] [#allocation38]
    $region85: #{forward.1} parent=1 // pred_fallthru
      _
    %1916 = shalt.err (0)
    %s1918 = sshll.u32 [#allocation3], 4
    %s1919 = int_to_ptr.vmem [resolvable:$true] %s1918
    %1921 = dma.hbm_to_vmem [thread:$0]  %s1910, 1024, %s1919, [#allocation4]
    %s1922 = sshll.u32 %s115, 4
    %1923 = dma.done %s102, %s1922
    %v1924 = vld [vmem:[%s101] sm:$0xf]
    %v1925 = vld [vmem:[%s101 + $0x4] sm:$0xf]
    %v1926 = vld [vmem:[%s101 + $0x8] sm:$0xf]
    %v1927 = vld [vmem:[%s101 + $0xc] sm:$0xf]
    %v1928 = vld [vmem:[%s101 + $0x10] sm:$0xf]
    %v1929 = vld [vmem:[%s101 + $0x14] sm:$0xf]
    %v1930 = vld [vmem:[%s101 + $0x18] sm:$0xf]
    %v1931 = vld [vmem:[%s101 + $0x1c] sm:$0xf]
    %v1932 = vld [vmem:[%s101 + $0x20] sm:$0xf]
    %v1933 = vld [vmem:[%s101 + $0x24] sm:$0xf]
    %v1934 = vld [vmem:[%s101 + $0x28] sm:$0xf]
    %v1935 = vld [vmem:[%s101 + $0x2c] sm:$0xf]
    %v1936 = vld [vmem:[%s101 + $0x30] sm:$0xf]
    %v1937 = vld [vmem:[%s101 + $0x34] sm:$0xf]
    %v1938 = vld [vmem:[%s101 + $0x38] sm:$0xf]
    %v1939 = vld [vmem:[%s101 + $0x3c] sm:$0xf]
    %s1940 = scalar_lea.vmem [#allocation9], 11
    %v1941 = vld [vmem:[%s1940] sm:$0x1]
    %s1942 = scalar_lea.vmem [#allocation10], 11
    %v1943 = vld [vmem:[%s1942] sm:$0x1]
    %v1944 = vpack.c.bf16 %v1909, %v1908
    %v1961 = vunpack.c.l.b16 %v1924
    %v1962 = vunpack.c.l.b16 %v1925
    %v1963 = vunpack.c.l.b16 %v1926
    %v1964 = vunpack.c.l.b16 %v1927
    %v1965 = vunpack.c.l.b16 %v1928
    %v1966 = vunpack.c.l.b16 %v1929
    %v1967 = vunpack.c.l.b16 %v1930
    %v1968 = vunpack.c.l.b16 %v1931
    %v1969 = vunpack.c.l.b16 %v1932
    %v1970 = vunpack.c.l.b16 %v1933
    %v1971 = vunpack.c.l.b16 %v1934
    %v1972 = vunpack.c.l.b16 %v1935
    %v1973 = vunpack.c.l.b16 %v1936
    %v1974 = vunpack.c.l.b16 %v1937
    %v1975 = vunpack.c.l.b16 %v1938
    %v1976 = vunpack.c.l.b16 %v1939
    %v1977 = vpack.c.b16 %v1962, %v1961
    %v1978 = vpack.c.b16 %v1964, %v1963
    %v1979 = vpack.c.b16 %v1966, %v1965
    %v1980 = vpack.c.b16 %v1968, %v1967
    %v1981 = vpack.c.b16 %v1970, %v1969
    %v1982 = vpack.c.b16 %v1972, %v1971
    %v1983 = vpack.c.b16 %v1974, %v1973
    %v1984 = vpack.c.b16 %v1976, %v1975
    %1993 = vmatprep.subr.bf16.mxu0 0
    %1994 = vmatpush1.bf16.msra.mxu0 %v1984
    %1995 = vmatprep.subr.bf16.mxu0 0
    %1996 = vmatpush1.bf16.msra.mxu0 %v1983
    %1997 = vmatprep.subr.bf16.mxu0 0
    %1998 = vmatpush1.bf16.msra.mxu0 %v1982
    %1999 = vmatprep.subr.bf16.mxu0 0
    %2000 = vmatpush1.bf16.msra.mxu0 %v1981
    %2001 = vmatprep.subr.bf16.mxu0 0
    %2002 = vmatpush1.bf16.msra.mxu0 %v1980
    %2003 = vmatprep.subr.bf16.mxu0 0
    %2004 = vmatpush1.bf16.msra.mxu0 %v1979
    %2005 = vmatprep.subr.bf16.mxu0 0
    %2006 = vmatpush1.bf16.msra.mxu0 %v1978
    %2007 = vmatprep.subr.bf16.mxu0 0
    %2008 = vmatpush1.bf16.msra.mxu0 %v1977
    %2009 = vmatprep.subr.bf16.mxu0 0
    %2010 = vmatpush2.bf16.msra.mxu0 0
    %2011 = vmatprep.subr.bf16.mxu0 0
    %2012 = vmatpush2.bf16.msra.mxu0 0
    %2013 = vmatprep.subr.bf16.mxu0 0
    %2014 = vmatpush2.bf16.msra.mxu0 0
    %2015 = vmatprep.subr.bf16.mxu0 0
    %2016 = vmatpush2.bf16.msra.mxu0 0
    %2017 = vmatprep.subr.bf16.mxu0 0
    %2018 = vmatpush2.bf16.msra.mxu0 0
    %2019 = vmatprep.subr.bf16.mxu0 0
    %2020 = vmatpush2.bf16.msra.mxu0 0
    %2021 = vmatprep.subr.bf16.mxu0 0
    %2022 = vmatpush2.bf16.msra.mxu0 0
    %2023 = vmatprep.subr.bf16.mxu0 0
    %2024 = vmatpush2.bf16.msra.mxu0 0
    %2025 = vmatprep.mubr.bf16.mxu0 0
    %2026 = vmatmul.mubr.bf16.gmra.mxu0 %v1944
    %v2027 = vpop.f32.mrf.mxu0
    %v2028 = vadd.f32 0.0, %v2027
    %v2029 = vpop.f32.mrf.mxu0
    %v2030 = vpop.f32.mrf.mxu0
    %v2031 = vadd.f32 0.0, %v2030
    %v2032 = vpop.f32.mrf.mxu0
    %2033 = vdwg.mxu0
    %v2034 = vadd.f32 %v2028, %v2031
    %v2035 = vrot.slane %v2034, 4
    %v2036 = vadd.f32 %v2034, %v2035
    %v2037 = vrot.slane %v2036, 2
    %v2038 = vadd.f32 %v2036, %v2037
    %v2039 = vrot.slane %v2038, 1
    %v2040 = vadd.f32 %v2038, %v2039
    %v2041 = vmul.f32 %v2040, 0.125
    %v2042 = vmul.f32 %v2028, %v2028
    %v2043 = vmul.f32 %v2031, %v2031
    %v2044 = vadd.f32 %v2042, %v2043
    %v2045 = vrot.slane %v2044, 4
    %v2046 = vadd.f32 %v2044, %v2045
    %v2047 = vrot.slane %v2046, 2
    %v2048 = vadd.f32 %v2046, %v2047
    %v2049 = vrot.slane %v2048, 1
    %v2050 = vadd.f32 %v2048, %v2049
    %v2051 = vmul.f32 %v2050, 0.125
    %v2052 = vmul.f32 %v2041, %v2041
    %v2053 = vsub.f32 %v2051, %v2052
    %v2054 = vmax.f32 %v2053, 0.0
    %v2055 = vadd.f32 %v2054, 1e-05
    %v2056 = vrsqrt.pop %v2055
    %v2057 = vmul.f32 %v1941, %v2056
    %v2058 = vmul.f32 %v2041, %v2057
    %v2059 = vsub.f32 %v1943, %v2058
    %v2061 = vlaneseq
    %v2062 = vshrl.u32 %v2061, 7
    %v2063 = vsub.s32 0, %v2062
    %v2064 = vrot.slane %v2057, %v2063
    %v2066 = vmul.f32 %v2028, %v2064
    %v2067 = vmul.f32 %v2031, %v2064
    %v2069 = vlaneseq
    %v2070 = vshrl.u32 %v2069, 7
    %v2071 = vsub.s32 0, %v2070
    %v2072 = vrot.slane %v2059, %v2071
    %v2074 = vadd.f32 %v2066, %v2072
    %v2075 = vadd.f32 %v2067, %v2072
    %v2076 = vmax.f32 %v2074, 0.0
    %v2077 = vmax.f32 %v2075, 0.0
    %v2078 = vmul.f32 %v2076, %v91
    %v2079 = vmul.f32 %v2077, %v92
    %s2080 = scalar_lea.hbm %s2, 13312
    // Predicated region
    $region86: #{forward.1} parent=1 // pred_check
      _
    $region87: #{forward.1} parent=1 // pred_check_branch
      %2082 = sbr.rel target = $region89
    $region88: #{forward.1} parent=1 // pred_region
      %2083 = sst [smem:[#allocation14]] [#allocation41]
      %2084 = sst [smem:[#allocation15]] [#allocation40]
    $region89: #{forward.1} parent=1 // pred_fallthru
      _
    %2086 = shalt.err (0)
    %s2088 = sshll.u32 %s101, 4
    %s2089 = int_to_ptr.vmem [resolvable:$true] %s2088
    %2091 = dma.hbm_to_vmem [thread:$0]  %s2080, 1024, %s2089, %s102
    %s2092 = sshll.u32 %s115, 4
    %2093 = dma.done [#allocation4], %s2092
    %v2094 = vld [vmem:[#allocation3] sm:$0xf]
    %v2095 = vld [vmem:[#allocation3 + $0x4] sm:$0xf]
    %v2096 = vld [vmem:[#allocation3 + $0x8] sm:$0xf]
    %v2097 = vld [vmem:[#allocation3 + $0xc] sm:$0xf]
    %v2098 = vld [vmem:[#allocation3 + $0x10] sm:$0xf]
    %v2099 = vld [vmem:[#allocation3 + $0x14] sm:$0xf]
    %v2100 = vld [vmem:[#allocation3 + $0x18] sm:$0xf]
    %v2101 = vld [vmem:[#allocation3 + $0x1c] sm:$0xf]
    %v2102 = vld [vmem:[#allocation3 + $0x20] sm:$0xf]
    %v2103 = vld [vmem:[#allocation3 + $0x24] sm:$0xf]
    %v2104 = vld [vmem:[#allocation3 + $0x28] sm:$0xf]
    %v2105 = vld [vmem:[#allocation3 + $0x2c] sm:$0xf]
    %v2106 = vld [vmem:[#allocation3 + $0x30] sm:$0xf]
    %v2107 = vld [vmem:[#allocation3 + $0x34] sm:$0xf]
    %v2108 = vld [vmem:[#allocation3 + $0x38] sm:$0xf]
    %v2109 = vld [vmem:[#allocation3 + $0x3c] sm:$0xf]
    %s2110 = scalar_lea.vmem [#allocation9], 12
    %v2111 = vld [vmem:[%s2110] sm:$0x1]
    %s2112 = scalar_lea.vmem [#allocation10], 12
    %v2113 = vld [vmem:[%s2112] sm:$0x1]
    %v2114 = vpack.c.bf16 %v2079, %v2078
    %v2131 = vunpack.c.l.b16 %v2094
    %v2132 = vunpack.c.l.b16 %v2095
    %v2133 = vunpack.c.l.b16 %v2096
    %v2134 = vunpack.c.l.b16 %v2097
    %v2135 = vunpack.c.l.b16 %v2098
    %v2136 = vunpack.c.l.b16 %v2099
    %v2137 = vunpack.c.l.b16 %v2100
    %v2138 = vunpack.c.l.b16 %v2101
    %v2139 = vunpack.c.l.b16 %v2102
    %v2140 = vunpack.c.l.b16 %v2103
    %v2141 = vunpack.c.l.b16 %v2104
    %v2142 = vunpack.c.l.b16 %v2105
    %v2143 = vunpack.c.l.b16 %v2106
    %v2144 = vunpack.c.l.b16 %v2107
    %v2145 = vunpack.c.l.b16 %v2108
    %v2146 = vunpack.c.l.b16 %v2109
    %v2147 = vpack.c.b16 %v2132, %v2131
    %v2148 = vpack.c.b16 %v2134, %v2133
    %v2149 = vpack.c.b16 %v2136, %v2135
    %v2150 = vpack.c.b16 %v2138, %v2137
    %v2151 = vpack.c.b16 %v2140, %v2139
    %v2152 = vpack.c.b16 %v2142, %v2141
    %v2153 = vpack.c.b16 %v2144, %v2143
    %v2154 = vpack.c.b16 %v2146, %v2145
    %2163 = vmatprep.subr.bf16.mxu0 0
    %2164 = vmatpush1.bf16.msra.mxu0 %v2154
    %2165 = vmatprep.subr.bf16.mxu0 0
    %2166 = vmatpush1.bf16.msra.mxu0 %v2153
    %2167 = vmatprep.subr.bf16.mxu0 0
    %2168 = vmatpush1.bf16.msra.mxu0 %v2152
    %2169 = vmatprep.subr.bf16.mxu0 0
    %2170 = vmatpush1.bf16.msra.mxu0 %v2151
    %2171 = vmatprep.subr.bf16.mxu0 0
    %2172 = vmatpush1.bf16.msra.mxu0 %v2150
    %2173 = vmatprep.subr.bf16.mxu0 0
    %2174 = vmatpush1.bf16.msra.mxu0 %v2149
    %2175 = vmatprep.subr.bf16.mxu0 0
    %2176 = vmatpush1.bf16.msra.mxu0 %v2148
    %2177 = vmatprep.subr.bf16.mxu0 0
    %2178 = vmatpush1.bf16.msra.mxu0 %v2147
    %2179 = vmatprep.subr.bf16.mxu0 0
    %2180 = vmatpush2.bf16.msra.mxu0 0
    %2181 = vmatprep.subr.bf16.mxu0 0
    %2182 = vmatpush2.bf16.msra.mxu0 0
    %2183 = vmatprep.subr.bf16.mxu0 0
    %2184 = vmatpush2.bf16.msra.mxu0 0
    %2185 = vmatprep.subr.bf16.mxu0 0
    %2186 = vmatpush2.bf16.msra.mxu0 0
    %2187 = vmatprep.subr.bf16.mxu0 0
    %2188 = vmatpush2.bf16.msra.mxu0 0
    %2189 = vmatprep.subr.bf16.mxu0 0
    %2190 = vmatpush2.bf16.msra.mxu0 0
    %2191 = vmatprep.subr.bf16.mxu0 0
    %2192 = vmatpush2.bf16.msra.mxu0 0
    %2193 = vmatprep.subr.bf16.mxu0 0
    %2194 = vmatpush2.bf16.msra.mxu0 0
    %2195 = vmatprep.mubr.bf16.mxu0 0
    %2196 = vmatmul.mubr.bf16.gmra.mxu0 %v2114
    %v2197 = vpop.f32.mrf.mxu0
    %v2198 = vadd.f32 0.0, %v2197
    %v2199 = vpop.f32.mrf.mxu0
    %v2200 = vpop.f32.mrf.mxu0
    %v2201 = vadd.f32 0.0, %v2200
    %v2202 = vpop.f32.mrf.mxu0
    %2203 = vdwg.mxu0
    %v2204 = vadd.f32 %v2198, %v2201
    %v2205 = vrot.slane %v2204, 4
    %v2206 = vadd.f32 %v2204, %v2205
    %v2207 = vrot.slane %v2206, 2
    %v2208 = vadd.f32 %v2206, %v2207
    %v2209 = vrot.slane %v2208, 1
    %v2210 = vadd.f32 %v2208, %v2209
    %v2211 = vmul.f32 %v2210, 0.125
    %v2212 = vmul.f32 %v2198, %v2198
    %v2213 = vmul.f32 %v2201, %v2201
    %v2214 = vadd.f32 %v2212, %v2213
    %v2215 = vrot.slane %v2214, 4
    %v2216 = vadd.f32 %v2214, %v2215
    %v2217 = vrot.slane %v2216, 2
    %v2218 = vadd.f32 %v2216, %v2217
    %v2219 = vrot.slane %v2218, 1
    %v2220 = vadd.f32 %v2218, %v2219
    %v2221 = vmul.f32 %v2220, 0.125
    %v2222 = vmul.f32 %v2211, %v2211
    %v2223 = vsub.f32 %v2221, %v2222
    %v2224 = vmax.f32 %v2223, 0.0
    %v2225 = vadd.f32 %v2224, 1e-05
    %v2226 = vrsqrt.pop %v2225
    %v2227 = vmul.f32 %v2111, %v2226
    %v2228 = vmul.f32 %v2211, %v2227
    %v2229 = vsub.f32 %v2113, %v2228
    %v2231 = vlaneseq
    %v2232 = vshrl.u32 %v2231, 7
    %v2233 = vsub.s32 0, %v2232
    %v2234 = vrot.slane %v2227, %v2233
    %v2236 = vmul.f32 %v2198, %v2234
    %v2237 = vmul.f32 %v2201, %v2234
    %v2239 = vlaneseq
    %v2240 = vshrl.u32 %v2239, 7
    %v2241 = vsub.s32 0, %v2240
    %v2242 = vrot.slane %v2229, %v2241
    %v2244 = vadd.f32 %v2236, %v2242
    %v2245 = vadd.f32 %v2237, %v2242
    %v2246 = vmax.f32 %v2244, 0.0
    %v2247 = vmax.f32 %v2245, 0.0
    %v2248 = vmul.f32 %v2246, %v91
    %v2249 = vmul.f32 %v2247, %v92
    %s2250 = scalar_lea.hbm %s2, 14336
    // Predicated region
    $region90: #{forward.1} parent=1 // pred_check
      _
    $region91: #{forward.1} parent=1 // pred_check_branch
      %2252 = sbr.rel target = $region93
    $region92: #{forward.1} parent=1 // pred_region
      %2253 = sst [smem:[#allocation14]] [#allocation43]
      %2254 = sst [smem:[#allocation15]] [#allocation42]
    $region93: #{forward.1} parent=1 // pred_fallthru
      _
    %2256 = shalt.err (0)
    %s2258 = sshll.u32 [#allocation3], 4
    %s2259 = int_to_ptr.vmem [resolvable:$true] %s2258
    %2261 = dma.hbm_to_vmem [thread:$0]  %s2250, 1024, %s2259, [#allocation4]
    %s2262 = sshll.u32 %s115, 4
    %2263 = dma.done %s102, %s2262
    %v2264 = vld [vmem:[%s101] sm:$0xf]
    %v2265 = vld [vmem:[%s101 + $0x4] sm:$0xf]
    %v2266 = vld [vmem:[%s101 + $0x8] sm:$0xf]
    %v2267 = vld [vmem:[%s101 + $0xc] sm:$0xf]
    %v2268 = vld [vmem:[%s101 + $0x10] sm:$0xf]
    %v2269 = vld [vmem:[%s101 + $0x14] sm:$0xf]
    %v2270 = vld [vmem:[%s101 + $0x18] sm:$0xf]
    %v2271 = vld [vmem:[%s101 + $0x1c] sm:$0xf]
    %v2272 = vld [vmem:[%s101 + $0x20] sm:$0xf]
    %v2273 = vld [vmem:[%s101 + $0x24] sm:$0xf]
    %v2274 = vld [vmem:[%s101 + $0x28] sm:$0xf]
    %v2275 = vld [vmem:[%s101 + $0x2c] sm:$0xf]
    %v2276 = vld [vmem:[%s101 + $0x30] sm:$0xf]
    %v2277 = vld [vmem:[%s101 + $0x34] sm:$0xf]
    %v2278 = vld [vmem:[%s101 + $0x38] sm:$0xf]
    %v2279 = vld [vmem:[%s101 + $0x3c] sm:$0xf]
    %s2280 = scalar_lea.vmem [#allocation9], 13
    %v2281 = vld [vmem:[%s2280] sm:$0x1]
    %s2282 = scalar_lea.vmem [#allocation10], 13
    %v2283 = vld [vmem:[%s2282] sm:$0x1]
    %v2284 = vpack.c.bf16 %v2249, %v2248
    %v2301 = vunpack.c.l.b16 %v2264
    %v2302 = vunpack.c.l.b16 %v2265
    %v2303 = vunpack.c.l.b16 %v2266
    %v2304 = vunpack.c.l.b16 %v2267
    %v2305 = vunpack.c.l.b16 %v2268
    %v2306 = vunpack.c.l.b16 %v2269
    %v2307 = vunpack.c.l.b16 %v2270
    %v2308 = vunpack.c.l.b16 %v2271
    %v2309 = vunpack.c.l.b16 %v2272
    %v2310 = vunpack.c.l.b16 %v2273
    %v2311 = vunpack.c.l.b16 %v2274
    %v2312 = vunpack.c.l.b16 %v2275
    %v2313 = vunpack.c.l.b16 %v2276
    %v2314 = vunpack.c.l.b16 %v2277
    %v2315 = vunpack.c.l.b16 %v2278
    %v2316 = vunpack.c.l.b16 %v2279
    %v2317 = vpack.c.b16 %v2302, %v2301
    %v2318 = vpack.c.b16 %v2304, %v2303
    %v2319 = vpack.c.b16 %v2306, %v2305
    %v2320 = vpack.c.b16 %v2308, %v2307
    %v2321 = vpack.c.b16 %v2310, %v2309
    %v2322 = vpack.c.b16 %v2312, %v2311
    %v2323 = vpack.c.b16 %v2314, %v2313
    %v2324 = vpack.c.b16 %v2316, %v2315
    %2333 = vmatprep.subr.bf16.mxu0 0
    %2334 = vmatpush1.bf16.msra.mxu0 %v2324
    %2335 = vmatprep.subr.bf16.mxu0 0
    %2336 = vmatpush1.bf16.msra.mxu0 %v2323
    %2337 = vmatprep.subr.bf16.mxu0 0
    %2338 = vmatpush1.bf16.msra.mxu0 %v2322
    %2339 = vmatprep.subr.bf16.mxu0 0
    %2340 = vmatpush1.bf16.msra.mxu0 %v2321
    %2341 = vmatprep.subr.bf16.mxu0 0
    %2342 = vmatpush1.bf16.msra.mxu0 %v2320
    %2343 = vmatprep.subr.bf16.mxu0 0
    %2344 = vmatpush1.bf16.msra.mxu0 %v2319
    %2345 = vmatprep.subr.bf16.mxu0 0
    %2346 = vmatpush1.bf16.msra.mxu0 %v2318
    %2347 = vmatprep.subr.bf16.mxu0 0
    %2348 = vmatpush1.bf16.msra.mxu0 %v2317
    %2349 = vmatprep.subr.bf16.mxu0 0
    %2350 = vmatpush2.bf16.msra.mxu0 0
    %2351 = vmatprep.subr.bf16.mxu0 0
    %2352 = vmatpush2.bf16.msra.mxu0 0
    %2353 = vmatprep.subr.bf16.mxu0 0
    %2354 = vmatpush2.bf16.msra.mxu0 0
    %2355 = vmatprep.subr.bf16.mxu0 0
    %2356 = vmatpush2.bf16.msra.mxu0 0
    %2357 = vmatprep.subr.bf16.mxu0 0
    %2358 = vmatpush2.bf16.msra.mxu0 0
    %2359 = vmatprep.subr.bf16.mxu0 0
    %2360 = vmatpush2.bf16.msra.mxu0 0
    %2361 = vmatprep.subr.bf16.mxu0 0
    %2362 = vmatpush2.bf16.msra.mxu0 0
    %2363 = vmatprep.subr.bf16.mxu0 0
    %2364 = vmatpush2.bf16.msra.mxu0 0
    %2365 = vmatprep.mubr.bf16.mxu0 0
    %2366 = vmatmul.mubr.bf16.gmra.mxu0 %v2284
    %v2367 = vpop.f32.mrf.mxu0
    %v2368 = vadd.f32 0.0, %v2367
    %v2369 = vpop.f32.mrf.mxu0
    %v2370 = vpop.f32.mrf.mxu0
    %v2371 = vadd.f32 0.0, %v2370
    %v2372 = vpop.f32.mrf.mxu0
    %2373 = vdwg.mxu0
    %v2374 = vadd.f32 %v2368, %v2371
    %v2375 = vrot.slane %v2374, 4
    %v2376 = vadd.f32 %v2374, %v2375
    %v2377 = vrot.slane %v2376, 2
    %v2378 = vadd.f32 %v2376, %v2377
    %v2379 = vrot.slane %v2378, 1
    %v2380 = vadd.f32 %v2378, %v2379
    %v2381 = vmul.f32 %v2380, 0.125
    %v2382 = vmul.f32 %v2368, %v2368
    %v2383 = vmul.f32 %v2371, %v2371
    %v2384 = vadd.f32 %v2382, %v2383
    %v2385 = vrot.slane %v2384, 4
    %v2386 = vadd.f32 %v2384, %v2385
    %v2387 = vrot.slane %v2386, 2
    %v2388 = vadd.f32 %v2386, %v2387
    %v2389 = vrot.slane %v2388, 1
    %v2390 = vadd.f32 %v2388, %v2389
    %v2391 = vmul.f32 %v2390, 0.125
    %v2392 = vmul.f32 %v2381, %v2381
    %v2393 = vsub.f32 %v2391, %v2392
    %v2394 = vmax.f32 %v2393, 0.0
    %v2395 = vadd.f32 %v2394, 1e-05
    %v2396 = vrsqrt.pop %v2395
    %v2397 = vmul.f32 %v2281, %v2396
    %v2398 = vmul.f32 %v2381, %v2397
    %v2399 = vsub.f32 %v2283, %v2398
    %v2401 = vlaneseq
    %v2402 = vshrl.u32 %v2401, 7
    %v2403 = vsub.s32 0, %v2402
    %v2404 = vrot.slane %v2397, %v2403
    %v2406 = vmul.f32 %v2368, %v2404
    %v2407 = vmul.f32 %v2371, %v2404
    %v2409 = vlaneseq
    %v2410 = vshrl.u32 %v2409, 7
    %v2411 = vsub.s32 0, %v2410
    %v2412 = vrot.slane %v2399, %v2411
    %v2414 = vadd.f32 %v2406, %v2412
    %v2415 = vadd.f32 %v2407, %v2412
    %v2416 = vmax.f32 %v2414, 0.0
    %v2417 = vmax.f32 %v2415, 0.0
    %v2418 = vmul.f32 %v2416, %v91
    %v2419 = vmul.f32 %v2417, %v92
    %s2420 = scalar_lea.hbm %s2, 15360
    // Predicated region
    $region94: #{forward.1} parent=1 // pred_check
      _
    $region95: #{forward.1} parent=1 // pred_check_branch
      %2422 = sbr.rel target = $region97
    $region96: #{forward.1} parent=1 // pred_region
      %2423 = sst [smem:[#allocation14]] [#allocation45]
      %2424 = sst [smem:[#allocation15]] [#allocation44]
    $region97: #{forward.1} parent=1 // pred_fallthru
      _
    %2426 = shalt.err (0)
    %s2428 = sshll.u32 %s101, 4
    %s2429 = int_to_ptr.vmem [resolvable:$true] %s2428
    %2431 = dma.hbm_to_vmem [thread:$0]  %s2420, 1024, %s2429, %s102
    %s2432 = sshll.u32 %s115, 4
    %2433 = dma.done [#allocation4], %s2432
    %v2434 = vld [vmem:[#allocation3] sm:$0xf]
    %v2435 = vld [vmem:[#allocation3 + $0x4] sm:$0xf]
    %v2436 = vld [vmem:[#allocation3 + $0x8] sm:$0xf]
    %v2437 = vld [vmem:[#allocation3 + $0xc] sm:$0xf]
    %v2438 = vld [vmem:[#allocation3 + $0x10] sm:$0xf]
    %v2439 = vld [vmem:[#allocation3 + $0x14] sm:$0xf]
    %v2440 = vld [vmem:[#allocation3 + $0x18] sm:$0xf]
    %v2441 = vld [vmem:[#allocation3 + $0x1c] sm:$0xf]
    %v2442 = vld [vmem:[#allocation3 + $0x20] sm:$0xf]
    %v2443 = vld [vmem:[#allocation3 + $0x24] sm:$0xf]
    %v2444 = vld [vmem:[#allocation3 + $0x28] sm:$0xf]
    %v2445 = vld [vmem:[#allocation3 + $0x2c] sm:$0xf]
    %v2446 = vld [vmem:[#allocation3 + $0x30] sm:$0xf]
    %v2447 = vld [vmem:[#allocation3 + $0x34] sm:$0xf]
    %v2448 = vld [vmem:[#allocation3 + $0x38] sm:$0xf]
    %v2449 = vld [vmem:[#allocation3 + $0x3c] sm:$0xf]
    %s2450 = scalar_lea.vmem [#allocation9], 14
    %v2451 = vld [vmem:[%s2450] sm:$0x1]
    %s2452 = scalar_lea.vmem [#allocation10], 14
    %v2453 = vld [vmem:[%s2452] sm:$0x1]
    %v2454 = vpack.c.bf16 %v2419, %v2418
    %v2471 = vunpack.c.l.b16 %v2434
    %v2472 = vunpack.c.l.b16 %v2435
    %v2473 = vunpack.c.l.b16 %v2436
    %v2474 = vunpack.c.l.b16 %v2437
    %v2475 = vunpack.c.l.b16 %v2438
    %v2476 = vunpack.c.l.b16 %v2439
    %v2477 = vunpack.c.l.b16 %v2440
    %v2478 = vunpack.c.l.b16 %v2441
    %v2479 = vunpack.c.l.b16 %v2442
    %v2480 = vunpack.c.l.b16 %v2443
    %v2481 = vunpack.c.l.b16 %v2444
    %v2482 = vunpack.c.l.b16 %v2445
    %v2483 = vunpack.c.l.b16 %v2446
    %v2484 = vunpack.c.l.b16 %v2447
    %v2485 = vunpack.c.l.b16 %v2448
    %v2486 = vunpack.c.l.b16 %v2449
    %v2487 = vpack.c.b16 %v2472, %v2471
    %v2488 = vpack.c.b16 %v2474, %v2473
    %v2489 = vpack.c.b16 %v2476, %v2475
    %v2490 = vpack.c.b16 %v2478, %v2477
    %v2491 = vpack.c.b16 %v2480, %v2479
    %v2492 = vpack.c.b16 %v2482, %v2481
    %v2493 = vpack.c.b16 %v2484, %v2483
    %v2494 = vpack.c.b16 %v2486, %v2485
    %2503 = vmatprep.subr.bf16.mxu0 0
    %2504 = vmatpush1.bf16.msra.mxu0 %v2494
    %2505 = vmatprep.subr.bf16.mxu0 0
    %2506 = vmatpush1.bf16.msra.mxu0 %v2493
    %2507 = vmatprep.subr.bf16.mxu0 0
    %2508 = vmatpush1.bf16.msra.mxu0 %v2492
    %2509 = vmatprep.subr.bf16.mxu0 0
    %2510 = vmatpush1.bf16.msra.mxu0 %v2491
    %2511 = vmatprep.subr.bf16.mxu0 0
    %2512 = vmatpush1.bf16.msra.mxu0 %v2490
    %2513 = vmatprep.subr.bf16.mxu0 0
    %2514 = vmatpush1.bf16.msra.mxu0 %v2489
    %2515 = vmatprep.subr.bf16.mxu0 0
    %2516 = vmatpush1.bf16.msra.mxu0 %v2488
    %2517 = vmatprep.subr.bf16.mxu0 0
    %2518 = vmatpush1.bf16.msra.mxu0 %v2487
    %2519 = vmatprep.subr.bf16.mxu0 0
    %2520 = vmatpush2.bf16.msra.mxu0 0
    %2521 = vmatprep.subr.bf16.mxu0 0
    %2522 = vmatpush2.bf16.msra.mxu0 0
    %2523 = vmatprep.subr.bf16.mxu0 0
    %2524 = vmatpush2.bf16.msra.mxu0 0
    %2525 = vmatprep.subr.bf16.mxu0 0
    %2526 = vmatpush2.bf16.msra.mxu0 0
    %2527 = vmatprep.subr.bf16.mxu0 0
    %2528 = vmatpush2.bf16.msra.mxu0 0
    %2529 = vmatprep.subr.bf16.mxu0 0
    %2530 = vmatpush2.bf16.msra.mxu0 0
    %2531 = vmatprep.subr.bf16.mxu0 0
    %2532 = vmatpush2.bf16.msra.mxu0 0
    %2533 = vmatprep.subr.bf16.mxu0 0
    %2534 = vmatpush2.bf16.msra.mxu0 0
    %2535 = vmatprep.mubr.bf16.mxu0 0
    %2536 = vmatmul.mubr.bf16.gmra.mxu0 %v2454
    %v2537 = vpop.f32.mrf.mxu0
    %v2538 = vadd.f32 0.0, %v2537
    %v2539 = vpop.f32.mrf.mxu0
    %v2540 = vpop.f32.mrf.mxu0
    %v2541 = vadd.f32 0.0, %v2540
    %v2542 = vpop.f32.mrf.mxu0
    %2543 = vdwg.mxu0
    %v2544 = vadd.f32 %v2538, %v2541
    %v2545 = vrot.slane %v2544, 4
    %v2546 = vadd.f32 %v2544, %v2545
    %v2547 = vrot.slane %v2546, 2
    %v2548 = vadd.f32 %v2546, %v2547
    %v2549 = vrot.slane %v2548, 1
    %v2550 = vadd.f32 %v2548, %v2549
    %v2551 = vmul.f32 %v2550, 0.125
    %v2552 = vmul.f32 %v2538, %v2538
    %v2553 = vmul.f32 %v2541, %v2541
    %v2554 = vadd.f32 %v2552, %v2553
    %v2555 = vrot.slane %v2554, 4
    %v2556 = vadd.f32 %v2554, %v2555
    %v2557 = vrot.slane %v2556, 2
    %v2558 = vadd.f32 %v2556, %v2557
    %v2559 = vrot.slane %v2558, 1
    %v2560 = vadd.f32 %v2558, %v2559
    %v2561 = vmul.f32 %v2560, 0.125
    %v2562 = vmul.f32 %v2551, %v2551
    %v2563 = vsub.f32 %v2561, %v2562
    %v2564 = vmax.f32 %v2563, 0.0
    %v2565 = vadd.f32 %v2564, 1e-05
    %v2566 = vrsqrt.pop %v2565
    %v2567 = vmul.f32 %v2451, %v2566
    %v2568 = vmul.f32 %v2551, %v2567
    %v2569 = vsub.f32 %v2453, %v2568
    %v2571 = vlaneseq
    %v2572 = vshrl.u32 %v2571, 7
    %v2573 = vsub.s32 0, %v2572
    %v2574 = vrot.slane %v2567, %v2573
    %v2576 = vmul.f32 %v2538, %v2574
    %v2577 = vmul.f32 %v2541, %v2574
    %v2579 = vlaneseq
    %v2580 = vshrl.u32 %v2579, 7
    %v2581 = vsub.s32 0, %v2580
    %v2582 = vrot.slane %v2569, %v2581
    %v2584 = vadd.f32 %v2576, %v2582
    %v2585 = vadd.f32 %v2577, %v2582
    %v2586 = vmax.f32 %v2584, 0.0
    %v2587 = vmax.f32 %v2585, 0.0
    %v2588 = vmul.f32 %v2586, %v91
    %v2589 = vmul.f32 %v2587, %v92
    %s2590 = sshll.u32 %s115, 4
    %2591 = dma.done %s102, %s2590
    %v2592 = vld [vmem:[%s101] sm:$0xf]
    %v2593 = vld [vmem:[%s101 + $0x4] sm:$0xf]
    %v2594 = vld [vmem:[%s101 + $0x8] sm:$0xf]
    %v2595 = vld [vmem:[%s101 + $0xc] sm:$0xf]
    %v2596 = vld [vmem:[%s101 + $0x10] sm:$0xf]
    %v2597 = vld [vmem:[%s101 + $0x14] sm:$0xf]
    %v2598 = vld [vmem:[%s101 + $0x18] sm:$0xf]
    %v2599 = vld [vmem:[%s101 + $0x1c] sm:$0xf]
    %v2600 = vld [vmem:[%s101 + $0x20] sm:$0xf]
    %v2601 = vld [vmem:[%s101 + $0x24] sm:$0xf]
    %v2602 = vld [vmem:[%s101 + $0x28] sm:$0xf]
    %v2603 = vld [vmem:[%s101 + $0x2c] sm:$0xf]
    %v2604 = vld [vmem:[%s101 + $0x30] sm:$0xf]
    %v2605 = vld [vmem:[%s101 + $0x34] sm:$0xf]
    %v2606 = vld [vmem:[%s101 + $0x38] sm:$0xf]
    %v2607 = vld [vmem:[%s101 + $0x3c] sm:$0xf]
    %s2608 = scalar_lea.vmem [#allocation9], 15
    %v2609 = vld [vmem:[%s2608] sm:$0x1]
    %s2610 = scalar_lea.vmem [#allocation10], 15
    %v2611 = vld [vmem:[%s2610] sm:$0x1]
    %v2612 = vpack.c.bf16 %v2589, %v2588
    %v2629 = vunpack.c.l.b16 %v2592
    %v2630 = vunpack.c.l.b16 %v2593
    %v2631 = vunpack.c.l.b16 %v2594
    %v2632 = vunpack.c.l.b16 %v2595
    %v2633 = vunpack.c.l.b16 %v2596
    %v2634 = vunpack.c.l.b16 %v2597
    %v2635 = vunpack.c.l.b16 %v2598
    %v2636 = vunpack.c.l.b16 %v2599
    %v2637 = vunpack.c.l.b16 %v2600
    %v2638 = vunpack.c.l.b16 %v2601
    %v2639 = vunpack.c.l.b16 %v2602
    %v2640 = vunpack.c.l.b16 %v2603
    %v2641 = vunpack.c.l.b16 %v2604
    %v2642 = vunpack.c.l.b16 %v2605
    %v2643 = vunpack.c.l.b16 %v2606
    %v2644 = vunpack.c.l.b16 %v2607
    %v2645 = vpack.c.b16 %v2630, %v2629
    %v2646 = vpack.c.b16 %v2632, %v2631
    %v2647 = vpack.c.b16 %v2634, %v2633
    %v2648 = vpack.c.b16 %v2636, %v2635
    %v2649 = vpack.c.b16 %v2638, %v2637
    %v2650 = vpack.c.b16 %v2640, %v2639
    %v2651 = vpack.c.b16 %v2642, %v2641
    %v2652 = vpack.c.b16 %v2644, %v2643
    %2661 = vmatprep.subr.bf16.mxu0 0
    %2662 = vmatpush1.bf16.msra.mxu0 %v2652
    %2663 = vmatprep.subr.bf16.mxu0 0
    %2664 = vmatpush1.bf16.msra.mxu0 %v2651
    %2665 = vmatprep.subr.bf16.mxu0 0
    %2666 = vmatpush1.bf16.msra.mxu0 %v2650
    %2667 = vmatprep.subr.bf16.mxu0 0
    %2668 = vmatpush1.bf16.msra.mxu0 %v2649
    %2669 = vmatprep.subr.bf16.mxu0 0
    %2670 = vmatpush1.bf16.msra.mxu0 %v2648
    %2671 = vmatprep.subr.bf16.mxu0 0
    %2672 = vmatpush1.bf16.msra.mxu0 %v2647
    %2673 = vmatprep.subr.bf16.mxu0 0
    %2674 = vmatpush1.bf16.msra.mxu0 %v2646
    %2675 = vmatprep.subr.bf16.mxu0 0
    %2676 = vmatpush1.bf16.msra.mxu0 %v2645
    %2677 = vmatprep.subr.bf16.mxu0 0
    %2678 = vmatpush2.bf16.msra.mxu0 0
    %2679 = vmatprep.subr.bf16.mxu0 0
    %2680 = vmatpush2.bf16.msra.mxu0 0
    %2681 = vmatprep.subr.bf16.mxu0 0
    %2682 = vmatpush2.bf16.msra.mxu0 0
    %2683 = vmatprep.subr.bf16.mxu0 0
    %2684 = vmatpush2.bf16.msra.mxu0 0
    %2685 = vmatprep.subr.bf16.mxu0 0
    %2686 = vmatpush2.bf16.msra.mxu0 0
    %2687 = vmatprep.subr.bf16.mxu0 0
    %2688 = vmatpush2.bf16.msra.mxu0 0
    %2689 = vmatprep.subr.bf16.mxu0 0
    %2690 = vmatpush2.bf16.msra.mxu0 0
    %2691 = vmatprep.subr.bf16.mxu0 0
    %2692 = vmatpush2.bf16.msra.mxu0 0
    %2693 = vmatprep.mubr.bf16.mxu0 0
    %2694 = vmatmul.mubr.bf16.gmra.mxu0 %v2612
    %v2695 = vpop.f32.mrf.mxu0
    %v2696 = vadd.f32 0.0, %v2695
    %v2697 = vpop.f32.mrf.mxu0
    %v2698 = vpop.f32.mrf.mxu0
    %v2699 = vadd.f32 0.0, %v2698
    %v2700 = vpop.f32.mrf.mxu0
    %2701 = vdwg.mxu0
    %v2702 = vadd.f32 %v2696, %v2699
    %v2703 = vrot.slane %v2702, 4
    %v2704 = vadd.f32 %v2702, %v2703
    %v2705 = vrot.slane %v2704, 2
    %v2706 = vadd.f32 %v2704, %v2705
    %v2707 = vrot.slane %v2706, 1
    %v2708 = vadd.f32 %v2706, %v2707
    %v2709 = vmul.f32 %v2708, 0.125
    %v2710 = vmul.f32 %v2696, %v2696
    %v2711 = vmul.f32 %v2699, %v2699
    %v2712 = vadd.f32 %v2710, %v2711
    %v2713 = vrot.slane %v2712, 4
    %v2714 = vadd.f32 %v2712, %v2713
    %v2715 = vrot.slane %v2714, 2
    %v2716 = vadd.f32 %v2714, %v2715
    %v2717 = vrot.slane %v2716, 1
    %v2718 = vadd.f32 %v2716, %v2717
    %v2719 = vmul.f32 %v2718, 0.125
    %v2720 = vmul.f32 %v2709, %v2709
    %v2721 = vsub.f32 %v2719, %v2720
    %v2722 = vmax.f32 %v2721, 0.0
    %v2723 = vadd.f32 %v2722, 1e-05
    %v2724 = vrsqrt.pop %v2723
    %v2725 = vmul.f32 %v2609, %v2724
    %v2726 = vmul.f32 %v2709, %v2725
    %v2727 = vsub.f32 %v2611, %v2726
    %v2729 = vlaneseq
    %v2730 = vshrl.u32 %v2729, 7
    %v2731 = vsub.s32 0, %v2730
    %v2732 = vrot.slane %v2725, %v2731
    %v2734 = vmul.f32 %v2696, %v2732
    %v2735 = vmul.f32 %v2699, %v2732
    %v2737 = vlaneseq
    %v2738 = vshrl.u32 %v2737, 7
    %v2739 = vsub.s32 0, %v2738
    %v2740 = vrot.slane %v2727, %v2739
    %v2742 = vadd.f32 %v2734, %v2740
    %v2743 = vadd.f32 %v2735, %v2740
    %v2744 = vmax.f32 %v2742, 0.0
    %v2745 = vmax.f32 %v2743, 0.0
    %v2746 = vxor.u32 %v2744, 2147483648
    %v2747 = vxor.u32 %v2745, 2147483648
    %v2748 = vmul.f32 %v2746, 1.442695
    %v2749 = vpow.pop %v2748
    %v2750 = vmul.f32 %v2747, 1.442695
    %v2751 = vpow.pop %v2750
    %v2752 = vadd.f32 %v2749, 1.0
    %v2753 = vadd.f32 %v2751, 1.0
    %v2754 = vrcp.pop %v2752
    %v2755 = vmul.f32 1.0, %v2754
    %v2756 = vrcp.pop %v2753
    %v2757 = vmul.f32 1.0, %v2756
    %2758 = vst [vmem:[%s5] sm:$0xff] %v2755
    %2759 = vst [vmem:[%s5 + $0x8] sm:$0xff] %v2757
    // Predicated region
    $region98: #{forward.1} parent=1 // pred_check
      _
    $region99: #{forward.1} parent=1 // pred_check_branch
      %2761 = sbr.rel (0) target = $region101
    $region100: #{forward.1} parent=1 // pred_region
      _
    $region101: #{forward.1} parent=1 // pred_fallthru
      _
    // Predicated region
    $region102: #{forward.1} parent=1 // pred_check
      _
    $region103: #{forward.1} parent=1 // pred_check_branch
      %2763 = sbr.rel (0) target = $region105
    $region104: #{forward.1} parent=1 // pred_region
      _
    $region105: #{forward.1} parent=1 // pred_fallthru
      _
    // Predicated region
    $region106: #{forward.1} parent=1 // pred_check
      _
    $region107: #{forward.1} parent=1 // pred_check_branch
      %2765 = sbr.rel (0) target = $region109
    $region108: #{forward.1} parent=1 // pred_region
      _
    $region109: #{forward.1} parent=1 // pred_fallthru
      _
    // Predicated region
    $region110: #{forward.1} parent=1 // pred_check
      _
    $region111: #{forward.1} parent=1 // pred_check_branch
      %2767 = sbr.rel (0) target = $region113
    $region112: #{forward.1} parent=1 // pred_region
      _
    $region113: #{forward.1} parent=1 // pred_fallthru
      _
    // Predicated region
    $region114: #{forward.1} parent=1 // pred_check
      _
    $region115: #{forward.1} parent=1 // pred_check_branch
      %2769 = sbr.rel (0) target = $region117
    $region116: #{forward.1} parent=1 // pred_region
      _
    $region117: #{forward.1} parent=1 // pred_fallthru
      _
    // Predicated region
    $region118: #{forward.1} parent=1 // pred_check
      _
    $region119: #{forward.1} parent=1 // pred_check_branch
      %2771 = sbr.rel (0) target = $region121
    $region120: #{forward.1} parent=1 // pred_region
      _
    $region121: #{forward.1} parent=1 // pred_fallthru
      _
    %2772 = vsyncpa [#allocation6], 1
    %2773 = vsyncpa [#allocation8], 1
    %2774 = vsyncpa [#allocation11], 1
  %2775 = vsyncmov [#allocation4]
  %s2776 = vpop.sfrf %2775
  %p2777 = scmp.eq.s32.totalorder %s2776, 0
  %p2778 = pneg %p2777
  %2780 = shalt.err (%p2778)
  %s2781 = scalar_lea.sflag [#allocation4], 1
  %2782 = vsyncmov %s2781
  %s2783 = vpop.sfrf %2782
  %p2784 = scmp.eq.s32.totalorder %s2783, 0
  %p2785 = pneg %p2784
  %2787 = shalt.err (%p2785)

</llo_original>
